<compile_context>
chip_gen: v7x
topology: tpu7x:2x2x1
jax: 0.10.0
libtpu: 0.0.40
codegen_flags: <defaults>
</compile_context>

<pallas_src>
import functools

import jax
import jax.numpy as jnp
from jax.experimental import pallas as pl
from jax.experimental.pallas import tpu as pltpu


def encoder_layer_kernel(x_ref, mask_ref,
                         wqkv_ref, bqkv_ref,
                         wo_ref, bo_ref, gamma_ref, beta_ref,
                         w1_ref, b1_ref, w2_ref, b2_ref,
                         out_ref,
                         ctx_ref,
                         *, n_heads, d_q, d_k, d_v, block_b, seq_len):
    f32 = jnp.float32
    bf16 = jnp.bfloat16
    HQ = n_heads * d_q
    HK = n_heads * d_k
    HV = n_heads * d_v

    x = x_ref[...]                                     # (rows, D) f32 — kept for residual
    x16 = x.astype(bf16)

    # Fused QKV projection: one tall (rows, D) @ (D, HQ+HK+HV) bf16 MXU matmul, f32 accum.
    qkv = jnp.dot(x16, wqkv_ref[...], preferred_element_type=f32) + bqkv_ref[...]

    # Fold 1/sqrt(d_k) into Q (rows*HQ elements) instead of scaling (S,S) scores per head.
    scale = f32(1.0 / float(d_k) ** 0.5)
    q = (qkv[:, :HQ] * scale).astype(bf16)
    k = qkv[:, HQ:HQ + HK].astype(bf16)
    v = qkv[:, HQ + HK:HQ + HK + HV].astype(bf16)

    neg_inf = f32(-1e9)
    # TODO(synk): for large n_heads*block_b replace this static unroll with a batched
    #             dot_general over heads (or fori_loop) and pad d_v to a 128-lane multiple.
    # TODO(synk): for S >= ~1024 switch to a key-tiled online-softmax (flash) inner loop.
    for b in range(block_b):                           # static & small -> unrolled
        r0 = b * seq_len
        masked = mask_ref[b] != 0                      # (S, S) bool straight from int8
        for h in range(n_heads):
            q_bh = q[r0:r0 + seq_len, h * d_q:(h + 1) * d_q]          # (S, d_q) bf16
            k_bh = k[r0:r0 + seq_len, h * d_k:(h + 1) * d_k]          # (S, d_k) bf16
            v_bh = v[r0:r0 + seq_len, h * d_v:(h + 1) * d_v]          # (S, d_v) bf16

            # Q @ K^T without materializing a transpose: contract last dims of both.
            scores = jax.lax.dot_general(
                q_bh, k_bh, (((1,), (1,)), ((), ())),
                preferred_element_type=f32)                            # (S, S) f32
            scores = jnp.where(masked, neg_inf, scores)                # masked_fill(-1e9)
            scores = scores - jnp.max(scores, axis=-1, keepdims=True)  # stable softmax
            e = jnp.exp(scores)
            p = e * pl.reciprocal(jnp.sum(e, axis=-1, keepdims=True), approx=True)

            ctx = jnp.dot(p.astype(bf16), v_bh, preferred_element_type=f32)  # (S, d_v)
            # Stage per-head context; the output projection below is then ONE matmul
            # with K = H*d_v (full MXU K fill) instead of H skinny K=d_v matmuls.
            ctx_ref[r0:r0 + seq_len, h * d_v:(h + 1) * d_v] = ctx

    proj = jnp.dot(ctx_ref[...].astype(bf16), wo_ref[...],
                   preferred_element_type=f32) + bo_ref[...]           # (rows, D)

    # residual + LayerNorm (f32 statistics, biased variance, eps=1e-5; torch semantics)
    y = proj + x
    mean = jnp.mean(y, axis=-1, keepdims=True)
    var = jnp.mean((y - mean) * (y - mean), axis=-1, keepdims=True)
    y_ln = (y - mean) * jax.lax.rsqrt(var + f32(1e-5)) * gamma_ref[...] + beta_ref[...]

    # Position-wise FFN: fc2(gelu(fc1(x))), exact (erf) GELU; no residual/LN (as in module).
    # TODO(synk): tile d_ff with a reduction grid axis / manual DMA for d_ff >= ~8192 on v7x.
    h1 = jnp.dot(y_ln.astype(bf16), w1_ref[...], preferred_element_type=f32) + b1_ref[...]
    h1 = f32(0.5) * h1 * (f32(1.0) + jax.lax.erf(h1 * f32(0.7071067811865476)))
    out = jnp.dot(h1.astype(bf16), w2_ref[...], preferred_element_type=f32) + b2_ref[...]

    out_ref[...] = out.astype(out_ref.dtype)


def encoder_layer(x, attn_mask, params, *, n_heads, d_q, d_k, d_v, block_b=None):
    """x: (B, S, d_model) f32;  attn_mask: (B, S, S) bool (True = masked)."""
    assert d_q == d_k, "scaled-dot-product attention requires d_q == d_k"
    B, S, D = x.shape
    d_ff = params["w1"].shape[1]
    HQ, HK, HV = n_heads * d_q, n_heads * d_k, n_heads * d_v
    HTOT = HQ + HK + HV

    # Rows per grid step: target ~512 rows (good MXU fill / HBM utilization), but always
    # keep >= 2 grid steps so v7x's two TensorCores both get work via the parallel axis.
    if block_b is None:
        target = max(1, 512 // max(S, 1))
        block_b = 1
        for cand in range(1, B + 1):
            if B % cand == 0 and cand <= target:
                block_b = cand
        while block_b > 1 and B // block_b < 2:
            block_b -= 1
            while B % block_b != 0:
                block_b -= 1
    assert B % block_b == 0
    grid = (B // block_b,)
    rows = block_b * S

    x2 = x.reshape(B * S, D)                          # XLA-level reshape, free
    mask_i8 = attn_mask.astype(jnp.int8)              # 4x fewer HBM bytes than f32

    bf16, f32 = jnp.bfloat16, jnp.float32
    # bf16 weights: native MXU dtype, half the HBM/VMEM footprint. Biases / LN params and
    # all accumulation stay f32.
    wqkv = jnp.concatenate([params["wq"], params["wk"], params["wv"]], axis=1).astype(bf16)
    bqkv = jnp.concatenate([params["bq"], params["bk"], params["bv"]], axis=1).astype(f32)
    wo = params["wo"].astype(bf16)
    w1 = params["w1"].astype(bf16)
    w2 = params["w2"].astype(bf16)

    # --- explicit VMEM budget from the actual block sizes, clamped generation-aware ---
    f4, b2 = 4, 2
    act = rows * D * f4
    vmem_limit = int(
        2 * (2 * act + block_b * S * S)                              # pipelined x/out/mask
        + 2 * ((D * HTOT + HV * D + 2 * D * d_ff) * b2
               + (HTOT + 3 * D + d_ff) * f4)                         # weights (worst case 2 bufs)
        + 3 * rows * HTOT * f4 + 2 * rows * d_ff * f4 + 6 * act      # in-kernel temporaries
        + rows * HV * f4                                             # ctx scratch
        + (4 << 20))                                                 # headroom
    try:
        vmem_cap = int(pltpu.get_tpu_info().vmem_capacity_bytes)
    except Exception:
        vmem_cap = 64 << 20                                          # v7x floor (conservative)
    vmem_limit = max(8 << 20, min(vmem_limit, vmem_cap - (8 << 20)))

    kernel = functools.partial(
        encoder_layer_kernel, n_heads=n_heads, d_q=d_q, d_k=d_k, d_v=d_v,
        block_b=block_b, seq_len=S)

    def run(single_buffer_weights):
        # Weights/biases have constant index_maps; single-buffering them halves their VMEM
        # footprint (critical on v7x's 64 MiB).
        kw = {"pipeline_mode": pl.Buffered(1)} if single_buffer_weights else {}

        def const_spec(shape):
            n = len(shape)
            return pl.BlockSpec(shape, lambda i: (0,) * n, **kw)

        out2 = pl.pallas_call(
            kernel,
            out_shape=jax.ShapeDtypeStruct((B * S, D), jnp.float32),
            grid=grid,
            in_specs=[
                pl.BlockSpec((rows, D), lambda i: (i, 0)),            # x rows
                pl.BlockSpec((block_b, S, S), lambda i: (i, 0, 0)),   # mask (int8)
                const_spec((D, HTOT)), const_spec((1, HTOT)),         # fused W_QKV, b_QKV
                const_spec((HV, D)), const_spec((1, D)),              # W_O, b_O
                const_spec((1, D)), const_spec((1, D)),               # LN gamma, beta
                const_spec((D, d_ff)), const_spec((1, d_ff)),         # fc1
                const_spec((d_ff, D)), const_spec((1, D)),            # fc2
            ],
            out_specs=pl.BlockSpec((rows, D), lambda i: (i, 0)),
            scratch_shapes=[pltpu.VMEM((rows, HV), jnp.float32)],     # per-step context
            compiler_params=pltpu.CompilerParams(
                dimension_semantics=("parallel",),
                vmem_limit_bytes=vmem_limit),
        )(x2, mask_i8, wqkv, bqkv, wo, params["bo"],
          params["gamma"], params["beta"], w1, params["b1"], w2, params["b2"])
        return jax.block_until_ready(out2)

    try:
        out2 = run(True)
    except Exception:
        # pl.Buffered(1) unsupported by this JAX build -> default double-buffered weights.
        out2 = run(False)

    return out2.reshape(B, S, D)


def reference_encoder_layer(x, attn_mask, params, *, n_heads, d_q, d_k, d_v):
    """Pure-JAX (f32) reference mirroring the PyTorch forward."""
    B, S, D = x.shape
    dot = functools.partial(jnp.matmul, precision="highest")
    q = dot(x, params["wq"]) + params["bq"]
    k = dot(x, params["wk"]) + params["bk"]
    v = dot(x, params["wv"]) + params["bv"]
    q = q.reshape(B, S, n_heads, d_q).transpose(0, 2, 1, 3)
    k = k.reshape(B, S, n_heads, d_k).transpose(0, 2, 1, 3)
    v = v.reshape(B, S, n_heads, d_v).transpose(0, 2, 1, 3)
    scores = jnp.einsum("bhqd,bhkd->bhqk", q, k, precision="highest") / jnp.sqrt(jnp.float32(d_k))
    scores = jnp.where(attn_mask[:, None, :, :], -1e9, scores)
    attn = jax.nn.softmax(scores, axis=-1)
    ctx = jnp.einsum("bhqk,bhkd->bhqd", attn, v, precision="highest")
    ctx = ctx.transpose(0, 2, 1, 3).reshape(B, S, n_heads * d_v)
    out = dot(ctx, params["wo"]) + params["bo"]
    y = out + x
    mean = jnp.mean(y, axis=-1, keepdims=True)
    var = jnp.mean((y - mean) ** 2, axis=-1, keepdims=True)
    y_ln = (y - mean) / jnp.sqrt(var + 1e-5) * params["gamma"][0] + params["beta"][0]
    h1 = dot(y_ln, params["w1"]) + params["b1"]
    h1 = jax.nn.gelu(h1, approximate=False)
    return dot(h1, params["w2"]) + params["b2"]


def init_params(key, d_model, d_q, d_k, d_v, n_heads, d_ff):
    ks = jax.random.split(key, 12)
    f32 = jnp.float32

    def lin(kw, kb, fan_in, fan_out):
        bound = 1.0 / jnp.sqrt(f32(fan_in))
        w = jax.random.uniform(kw, (fan_in, fan_out), f32, -bound, bound)
        # Keep weight values bf16-representable so the in-kernel bf16 cast is lossless
        # and the f32 reference sees the exact same parameters.
        w = w.astype(jnp.bfloat16).astype(f32)
        b = jax.random.uniform(kb, (1, fan_out), f32, -bound, bound)
        return w, b

    wq, bq = lin(ks[0], ks[1], d_model, n_heads * d_q)
    wk, bk = lin(ks[2], ks[3], d_model, n_heads * d_k)
    wv, bv = lin(ks[4], ks[5], d_model, n_heads * d_v)
    wo, bo = lin(ks[6], ks[7], n_heads * d_v, d_model)
    w1, b1 = lin(ks[8], ks[9], d_model, d_ff)
    w2, b2 = lin(ks[10], ks[11], d_ff, d_model)
    return dict(wq=wq, bq=bq, wk=wk, bk=bk, wv=wv, bv=bv, wo=wo, bo=bo,
                gamma=jnp.ones((1, d_model), f32), beta=jnp.zeros((1, d_model), f32),
                w1=w1, b1=b1, w2=w2, b2=b2)


if __name__ == "__main__":
    B, S = 2, 8
    d_model, d_ff = 32, 64
    n_heads, d_q, d_k, d_v = 4, 8, 8, 8

    key = jax.random.PRNGKey(0)
    kx, kp = jax.random.split(key)
    x = jax.random.normal(kx, (B, S, d_model), jnp.float32)
    # padding-style mask: keys >= 6 are masked for every query (no fully-masked rows)
    attn_mask = jnp.broadcast_to(jnp.arange(S)[None, None, :] >= 6, (B, S, S))
    params = init_params(kp, d_model, d_q, d_k, d_v, n_heads, d_ff)

    out = encoder_layer(x, attn_mask, params,
                        n_heads=n_heads, d_q=d_q, d_k=d_k, d_v=d_v)
    out = jax.block_until_ready(out)

    ref = reference_encoder_layer(x, attn_mask, params,
                                  n_heads=n_heads, d_q=d_q, d_k=d_k, d_v=d_v)
    assert out.shape == (B, S, d_model)
    assert jnp.allclose(out, ref, rtol=2e-2, atol=2e-2), "mismatch vs JAX reference"

    print("KERNEL_OK")
</pallas_src>

<mosaic_0001>
module attributes {stable_mosaic.version = 11 : i64} {
  func.func @encoder_layer_kernel(%arg0: i32, %arg1: memref<8x32xf32, #tpu.memory_space<vmem>>, %arg2: memref<1x8x8xi8, #tpu.memory_space<vmem>>, %arg3: memref<32x96xbf16, #tpu.memory_space<vmem>>, %arg4: memref<1x96xf32, #tpu.memory_space<vmem>>, %arg5: memref<32x32xbf16, #tpu.memory_space<vmem>>, %arg6: memref<1x32xf32, #tpu.memory_space<vmem>>, %arg7: memref<1x32xf32, #tpu.memory_space<vmem>>, %arg8: memref<1x32xf32, #tpu.memory_space<vmem>>, %arg9: memref<32x64xbf16, #tpu.memory_space<vmem>>, %arg10: memref<1x64xf32, #tpu.memory_space<vmem>>, %arg11: memref<64x32xbf16, #tpu.memory_space<vmem>>, %arg12: memref<1x32xf32, #tpu.memory_space<vmem>>, %arg13: memref<8x32xf32, #tpu.memory_space<vmem>>, %arg14: memref<8x32xf32, #tpu.memory_space<vmem>>) attributes {dimension_semantics = [#tpu.dimension_semantics<parallel>], iteration_bounds = array<i64: 2>, scalar_prefetch = 0 : i64, scratch_operands = 1 : i64, tpu.core_type = #tpu.core_type<tc>, window_params = [{transform_indices = @transform_0, window_bounds = array<i64: 8, 32>}, {transform_indices = @transform_1, window_bounds = array<i64: 1, 8, 8>}, {pipeline_mode = #tpu.pipeline_mode<synchronous>, transform_indices = @transform_2, window_bounds = array<i64: 32, 96>}, {pipeline_mode = #tpu.pipeline_mode<synchronous>, transform_indices = @transform_3, window_bounds = array<i64: 1, 96>}, {pipeline_mode = #tpu.pipeline_mode<synchronous>, transform_indices = @transform_4, window_bounds = array<i64: 32, 32>}, {pipeline_mode = #tpu.pipeline_mode<synchronous>, transform_indices = @transform_5, window_bounds = array<i64: 1, 32>}, {pipeline_mode = #tpu.pipeline_mode<synchronous>, transform_indices = @transform_6, window_bounds = array<i64: 1, 32>}, {pipeline_mode = #tpu.pipeline_mode<synchronous>, transform_indices = @transform_7, window_bounds = array<i64: 1, 32>}, {pipeline_mode = #tpu.pipeline_mode<synchronous>, transform_indices = @transform_8, window_bounds = array<i64: 32, 64>}, {pipeline_mode = #tpu.pipeline_mode<synchronous>, transform_indices = @transform_9, window_bounds = array<i64: 1, 64>}, {pipeline_mode = #tpu.pipeline_mode<synchronous>, transform_indices = @transform_10, window_bounds = array<i64: 64, 32>}, {pipeline_mode = #tpu.pipeline_mode<synchronous>, transform_indices = @transform_11, window_bounds = array<i64: 1, 32>}, {transform_indices = @transform_12, window_bounds = array<i64: 8, 32>}]} {
    %c0 = arith.constant 0 : index
    %c0_0 = arith.constant 0 : index
    %0 = vector.load %arg1[%c0, %c0_0] : memref<8x32xf32, #tpu.memory_space<vmem>>, vector<8x32xf32>
    %1 = arith.truncf %0 : vector<8x32xf32> to vector<8x32xbf16>
    %c0_1 = arith.constant 0 : index
    %c0_2 = arith.constant 0 : index
    %2 = vector.load %arg3[%c0_1, %c0_2] : memref<32x96xbf16, #tpu.memory_space<vmem>>, vector<32x96xbf16>
    %cst = arith.constant dense<0.000000e+00> : vector<8x96xf32>
    %3 = tpu.matmul %1, %2, %cst {dimension_numbers = #tpu.dot_dimension_numbers<[1], [0], [0], [1], [0, 0, 1, 1], [], []>} : vector<8x32xbf16>, vector<32x96xbf16>, vector<8x96xf32> -> vector<8x96xf32>
    %c0_3 = arith.constant 0 : index
    %c0_4 = arith.constant 0 : index
    %4 = vector.load %arg4[%c0_3, %c0_4] : memref<1x96xf32, #tpu.memory_space<vmem>>, vector<1x96xf32>
    %5 = vector.broadcast %4 : vector<1x96xf32> to vector<8x96xf32>
    %6 = arith.addf %3, %5 : vector<8x96xf32>
    %7 = vector.extract_strided_slice %6 {offsets = [0, 0], sizes = [8, 32], strides = [1, 1]} : vector<8x96xf32> to vector<8x32xf32>
    %cst_5 = arith.constant 0.353553385 : f32
    %8 = vector.broadcast %cst_5 : f32 to vector<8x32xf32>
    %9 = arith.mulf %7, %8 : vector<8x32xf32>
    %10 = arith.truncf %9 : vector<8x32xf32> to vector<8x32xbf16>
    %11 = vector.extract_strided_slice %6 {offsets = [0, 32], sizes = [8, 32], strides = [1, 1]} : vector<8x96xf32> to vector<8x32xf32>
    %12 = arith.truncf %11 : vector<8x32xf32> to vector<8x32xbf16>
    %13 = vector.extract_strided_slice %6 {offsets = [0, 64], sizes = [8, 32], strides = [1, 1]} : vector<8x96xf32> to vector<8x32xf32>
    %14 = arith.truncf %13 : vector<8x32xf32> to vector<8x32xbf16>
    %c0_6 = arith.constant 0 : index
    %c0_7 = arith.constant 0 : index
    %c0_8 = arith.constant 0 : index
    %15 = vector.load %arg2[%c0_6, %c0_7, %c0_8] : memref<1x8x8xi8, #tpu.memory_space<vmem>>, vector<1x8x8xi8>
    %16 = vector.shape_cast %15 : vector<1x8x8xi8> to vector<8x8xi8>
    %c0_i8 = arith.constant 0 : i8
    %17 = vector.broadcast %c0_i8 : i8 to vector<8x8xi8>
    %18 = arith.cmpi ne, %16, %17 : vector<8x8xi8>
    %19 = vector.extract_strided_slice %10 {offsets = [0, 0], sizes = [8, 8], strides = [1, 1]} : vector<8x32xbf16> to vector<8x8xbf16>
    %20 = vector.extract_strided_slice %12 {offsets = [0, 0], sizes = [8, 8], strides = [1, 1]} : vector<8x32xbf16> to vector<8x8xbf16>
    %21 = vector.extract_strided_slice %14 {offsets = [0, 0], sizes = [8, 8], strides = [1, 1]} : vector<8x32xbf16> to vector<8x8xbf16>
    %cst_9 = arith.constant dense<0.000000e+00> : vector<8x8xf32>
    %22 = tpu.matmul %19, %20, %cst_9 {dimension_numbers = #tpu.dot_dimension_numbers<[1], [1], [0], [0], [0, 0, 1, 0], [], []>} : vector<8x8xbf16>, vector<8x8xbf16>, vector<8x8xf32> -> vector<8x8xf32>
    %cst_10 = arith.constant -1.000000e+09 : f32
    %23 = vector.broadcast %cst_10 : f32 to vector<8x8xf32>
    %24 = arith.select %18, %23, %22 : vector<8x8xi1>, vector<8x8xf32>
    %cst_11 = arith.constant dense<0xFF800000> : vector<8xf32>
    %25 = vector.multi_reduction <maximumf>, %24, %cst_11 [1] : vector<8x8xf32> to vector<8xf32>
    %26 = vector.shape_cast %25 : vector<8xf32> to vector<8x1xf32>
    %27 = vector.broadcast %26 : vector<8x1xf32> to vector<8x8xf32>
    %28 = arith.subf %24, %27 : vector<8x8xf32>
    %29 = math.exp %28 : vector<8x8xf32>
    %cst_12 = arith.constant dense<0.000000e+00> : vector<8xf32>
    %30 = vector.multi_reduction <add>, %29, %cst_12 [1] : vector<8x8xf32> to vector<8xf32>
    %31 = vector.shape_cast %30 : vector<8xf32> to vector<8x1xf32>
    %32 = tpu.reciprocal %31 {approx = true} : vector<8x1xf32> -> vector<8x1xf32>
    %33 = vector.broadcast %32 : vector<8x1xf32> to vector<8x8xf32>
    %34 = arith.mulf %29, %33 : vector<8x8xf32>
    %35 = arith.truncf %34 : vector<8x8xf32> to vector<8x8xbf16>
    %cst_13 = arith.constant dense<0.000000e+00> : vector<8x8xf32>
    %36 = tpu.matmul %35, %21, %cst_13 {dimension_numbers = #tpu.dot_dimension_numbers<[1], [0], [0], [1], [0, 0, 1, 1], [], []>} : vector<8x8xbf16>, vector<8x8xbf16>, vector<8x8xf32> -> vector<8x8xf32>
    %c0_14 = arith.constant 0 : index
    %c0_15 = arith.constant 0 : index
    %37 = vector.load %arg14[%c0_14, %c0_15] : memref<8x32xf32, #tpu.memory_space<vmem>>, vector<8x8xf32>
    tpu.vector_store %arg14[%c0_14, %c0_15], %36 {strides = array<i32>} : memref<8x32xf32, #tpu.memory_space<vmem>>, vector<8x8xf32>,
    %38 = vector.extract_strided_slice %10 {offsets = [0, 8], sizes = [8, 8], strides = [1, 1]} : vector<8x32xbf16> to vector<8x8xbf16>
    %39 = vector.extract_strided_slice %12 {offsets = [0, 8], sizes = [8, 8], strides = [1, 1]} : vector<8x32xbf16> to vector<8x8xbf16>
    %40 = vector.extract_strided_slice %14 {offsets = [0, 8], sizes = [8, 8], strides = [1, 1]} : vector<8x32xbf16> to vector<8x8xbf16>
    %cst_16 = arith.constant dense<0.000000e+00> : vector<8x8xf32>
    %41 = tpu.matmul %38, %39, %cst_16 {dimension_numbers = #tpu.dot_dimension_numbers<[1], [1], [0], [0], [0, 0, 1, 0], [], []>} : vector<8x8xbf16>, vector<8x8xbf16>, vector<8x8xf32> -> vector<8x8xf32>
    %cst_17 = arith.constant -1.000000e+09 : f32
    %42 = vector.broadcast %cst_17 : f32 to vector<8x8xf32>
    %43 = arith.select %18, %42, %41 : vector<8x8xi1>, vector<8x8xf32>
    %cst_18 = arith.constant dense<0xFF800000> : vector<8xf32>
    %44 = vector.multi_reduction <maximumf>, %43, %cst_18 [1] : vector<8x8xf32> to vector<8xf32>
    %45 = vector.shape_cast %44 : vector<8xf32> to vector<8x1xf32>
    %46 = vector.broadcast %45 : vector<8x1xf32> to vector<8x8xf32>
    %47 = arith.subf %43, %46 : vector<8x8xf32>
    %48 = math.exp %47 : vector<8x8xf32>
    %cst_19 = arith.constant dense<0.000000e+00> : vector<8xf32>
    %49 = vector.multi_reduction <add>, %48, %cst_19 [1] : vector<8x8xf32> to vector<8xf32>
    %50 = vector.shape_cast %49 : vector<8xf32> to vector<8x1xf32>
    %51 = tpu.reciprocal %50 {approx = true} : vector<8x1xf32> -> vector<8x1xf32>
    %52 = vector.broadcast %51 : vector<8x1xf32> to vector<8x8xf32>
    %53 = arith.mulf %48, %52 : vector<8x8xf32>
    %54 = arith.truncf %53 : vector<8x8xf32> to vector<8x8xbf16>
    %cst_20 = arith.constant dense<0.000000e+00> : vector<8x8xf32>
    %55 = tpu.matmul %54, %40, %cst_20 {dimension_numbers = #tpu.dot_dimension_numbers<[1], [0], [0], [1], [0, 0, 1, 1], [], []>} : vector<8x8xbf16>, vector<8x8xbf16>, vector<8x8xf32> -> vector<8x8xf32>
    %c0_21 = arith.constant 0 : index
    %c8 = arith.constant 8 : index
    %56 = vector.load %arg14[%c0_21, %c8] : memref<8x32xf32, #tpu.memory_space<vmem>>, vector<8x8xf32>
    tpu.vector_store %arg14[%c0_21, %c8], %55 {strides = array<i32>} : memref<8x32xf32, #tpu.memory_space<vmem>>, vector<8x8xf32>,
    %57 = vector.extract_strided_slice %10 {offsets = [0, 16], sizes = [8, 8], strides = [1, 1]} : vector<8x32xbf16> to vector<8x8xbf16>
    %58 = vector.extract_strided_slice %12 {offsets = [0, 16], sizes = [8, 8], strides = [1, 1]} : vector<8x32xbf16> to vector<8x8xbf16>
    %59 = vector.extract_strided_slice %14 {offsets = [0, 16], sizes = [8, 8], strides = [1, 1]} : vector<8x32xbf16> to vector<8x8xbf16>
    %cst_22 = arith.constant dense<0.000000e+00> : vector<8x8xf32>
    %60 = tpu.matmul %57, %58, %cst_22 {dimension_numbers = #tpu.dot_dimension_numbers<[1], [1], [0], [0], [0, 0, 1, 0], [], []>} : vector<8x8xbf16>, vector<8x8xbf16>, vector<8x8xf32> -> vector<8x8xf32>
    %cst_23 = arith.constant -1.000000e+09 : f32
    %61 = vector.broadcast %cst_23 : f32 to vector<8x8xf32>
    %62 = arith.select %18, %61, %60 : vector<8x8xi1>, vector<8x8xf32>
    %cst_24 = arith.constant dense<0xFF800000> : vector<8xf32>
    %63 = vector.multi_reduction <maximumf>, %62, %cst_24 [1] : vector<8x8xf32> to vector<8xf32>
    %64 = vector.shape_cast %63 : vector<8xf32> to vector<8x1xf32>
    %65 = vector.broadcast %64 : vector<8x1xf32> to vector<8x8xf32>
    %66 = arith.subf %62, %65 : vector<8x8xf32>
    %67 = math.exp %66 : vector<8x8xf32>
    %cst_25 = arith.constant dense<0.000000e+00> : vector<8xf32>
    %68 = vector.multi_reduction <add>, %67, %cst_25 [1] : vector<8x8xf32> to vector<8xf32>
    %69 = vector.shape_cast %68 : vector<8xf32> to vector<8x1xf32>
    %70 = tpu.reciprocal %69 {approx = true} : vector<8x1xf32> -> vector<8x1xf32>
    %71 = vector.broadcast %70 : vector<8x1xf32> to vector<8x8xf32>
    %72 = arith.mulf %67, %71 : vector<8x8xf32>
    %73 = arith.truncf %72 : vector<8x8xf32> to vector<8x8xbf16>
    %cst_26 = arith.constant dense<0.000000e+00> : vector<8x8xf32>
    %74 = tpu.matmul %73, %59, %cst_26 {dimension_numbers = #tpu.dot_dimension_numbers<[1], [0], [0], [1], [0, 0, 1, 1], [], []>} : vector<8x8xbf16>, vector<8x8xbf16>, vector<8x8xf32> -> vector<8x8xf32>
    %c0_27 = arith.constant 0 : index
    %c16 = arith.constant 16 : index
    %75 = vector.load %arg14[%c0_27, %c16] : memref<8x32xf32, #tpu.memory_space<vmem>>, vector<8x8xf32>
    tpu.vector_store %arg14[%c0_27, %c16], %74 {strides = array<i32>} : memref<8x32xf32, #tpu.memory_space<vmem>>, vector<8x8xf32>,
    %76 = vector.extract_strided_slice %10 {offsets = [0, 24], sizes = [8, 8], strides = [1, 1]} : vector<8x32xbf16> to vector<8x8xbf16>
    %77 = vector.extract_strided_slice %12 {offsets = [0, 24], sizes = [8, 8], strides = [1, 1]} : vector<8x32xbf16> to vector<8x8xbf16>
    %78 = vector.extract_strided_slice %14 {offsets = [0, 24], sizes = [8, 8], strides = [1, 1]} : vector<8x32xbf16> to vector<8x8xbf16>
    %cst_28 = arith.constant dense<0.000000e+00> : vector<8x8xf32>
    %79 = tpu.matmul %76, %77, %cst_28 {dimension_numbers = #tpu.dot_dimension_numbers<[1], [1], [0], [0], [0, 0, 1, 0], [], []>} : vector<8x8xbf16>, vector<8x8xbf16>, vector<8x8xf32> -> vector<8x8xf32>
    %cst_29 = arith.constant -1.000000e+09 : f32
    %80 = vector.broadcast %cst_29 : f32 to vector<8x8xf32>
    %81 = arith.select %18, %80, %79 : vector<8x8xi1>, vector<8x8xf32>
    %cst_30 = arith.constant dense<0xFF800000> : vector<8xf32>
    %82 = vector.multi_reduction <maximumf>, %81, %cst_30 [1] : vector<8x8xf32> to vector<8xf32>
    %83 = vector.shape_cast %82 : vector<8xf32> to vector<8x1xf32>
    %84 = vector.broadcast %83 : vector<8x1xf32> to vector<8x8xf32>
    %85 = arith.subf %81, %84 : vector<8x8xf32>
    %86 = math.exp %85 : vector<8x8xf32>
    %cst_31 = arith.constant dense<0.000000e+00> : vector<8xf32>
    %87 = vector.multi_reduction <add>, %86, %cst_31 [1] : vector<8x8xf32> to vector<8xf32>
    %88 = vector.shape_cast %87 : vector<8xf32> to vector<8x1xf32>
    %89 = tpu.reciprocal %88 {approx = true} : vector<8x1xf32> -> vector<8x1xf32>
    %90 = vector.broadcast %89 : vector<8x1xf32> to vector<8x8xf32>
    %91 = arith.mulf %86, %90 : vector<8x8xf32>
    %92 = arith.truncf %91 : vector<8x8xf32> to vector<8x8xbf16>
    %cst_32 = arith.constant dense<0.000000e+00> : vector<8x8xf32>
    %93 = tpu.matmul %92, %78, %cst_32 {dimension_numbers = #tpu.dot_dimension_numbers<[1], [0], [0], [1], [0, 0, 1, 1], [], []>} : vector<8x8xbf16>, vector<8x8xbf16>, vector<8x8xf32> -> vector<8x8xf32>
    %c0_33 = arith.constant 0 : index
    %c24 = arith.constant 24 : index
    %94 = vector.load %arg14[%c0_33, %c24] : memref<8x32xf32, #tpu.memory_space<vmem>>, vector<8x8xf32>
    tpu.vector_store %arg14[%c0_33, %c24], %93 {strides = array<i32>} : memref<8x32xf32, #tpu.memory_space<vmem>>, vector<8x8xf32>,
    %c0_34 = arith.constant 0 : index
    %c0_35 = arith.constant 0 : index
    %95 = vector.load %arg14[%c0_34, %c0_35] : memref<8x32xf32, #tpu.memory_space<vmem>>, vector<8x32xf32>
    %96 = arith.truncf %95 : vector<8x32xf32> to vector<8x32xbf16>
    %c0_36 = arith.constant 0 : index
    %c0_37 = arith.constant 0 : index
    %97 = vector.load %arg5[%c0_36, %c0_37] : memref<32x32xbf16, #tpu.memory_space<vmem>>, vector<32x32xbf16>
    %cst_38 = arith.constant dense<0.000000e+00> : vector<8x32xf32>
    %98 = tpu.matmul %96, %97, %cst_38 {dimension_numbers = #tpu.dot_dimension_numbers<[1], [0], [0], [1], [0, 0, 1, 1], [], []>} : vector<8x32xbf16>, vector<32x32xbf16>, vector<8x32xf32> -> vector<8x32xf32>
    %c0_39 = arith.constant 0 : index
    %c0_40 = arith.constant 0 : index
    %99 = vector.load %arg6[%c0_39, %c0_40] : memref<1x32xf32, #tpu.memory_space<vmem>>, vector<1x32xf32>
    %100 = vector.broadcast %99 : vector<1x32xf32> to vector<8x32xf32>
    %101 = arith.addf %98, %100 : vector<8x32xf32>
    %102 = arith.addf %101, %0 : vector<8x32xf32>
    %cst_41 = arith.constant dense<0.000000e+00> : vector<8xf32>
    %103 = vector.multi_reduction <add>, %102, %cst_41 [1] : vector<8x32xf32> to vector<8xf32>
    %104 = vector.shape_cast %103 : vector<8xf32> to vector<8x1xf32>
    %cst_42 = arith.constant 3.200000e+01 : f32
    %105 = vector.broadcast %cst_42 : f32 to vector<8x1xf32>
    %106 = arith.divf %104, %105 : vector<8x1xf32>
    %107 = vector.broadcast %106 : vector<8x1xf32> to vector<8x32xf32>
    %108 = arith.subf %102, %107 : vector<8x32xf32>
    %109 = vector.broadcast %106 : vector<8x1xf32> to vector<8x32xf32>
    %110 = arith.subf %102, %109 : vector<8x32xf32>
    %111 = arith.mulf %108, %110 : vector<8x32xf32>
    %cst_43 = arith.constant dense<0.000000e+00> : vector<8xf32>
    %112 = vector.multi_reduction <add>, %111, %cst_43 [1] : vector<8x32xf32> to vector<8xf32>
    %113 = vector.shape_cast %112 : vector<8xf32> to vector<8x1xf32>
    %cst_44 = arith.constant 3.200000e+01 : f32
    %114 = vector.broadcast %cst_44 : f32 to vector<8x1xf32>
    %115 = arith.divf %113, %114 : vector<8x1xf32>
    %116 = vector.broadcast %106 : vector<8x1xf32> to vector<8x32xf32>
    %117 = arith.subf %102, %116 : vector<8x32xf32>
    %cst_45 = arith.constant 9.99999974E-6 : f32
    %118 = vector.broadcast %cst_45 : f32 to vector<8x1xf32>
    %119 = arith.addf %115, %118 : vector<8x1xf32>
    %120 = math.rsqrt %119 : vector<8x1xf32>
    %121 = vector.broadcast %120 : vector<8x1xf32> to vector<8x32xf32>
    %122 = arith.mulf %117, %121 : vector<8x32xf32>
    %c0_46 = arith.constant 0 : index
    %c0_47 = arith.constant 0 : index
    %123 = vector.load %arg7[%c0_46, %c0_47] : memref<1x32xf32, #tpu.memory_space<vmem>>, vector<1x32xf32>
    %124 = vector.broadcast %123 : vector<1x32xf32> to vector<8x32xf32>
    %125 = arith.mulf %122, %124 : vector<8x32xf32>
    %c0_48 = arith.constant 0 : index
    %c0_49 = arith.constant 0 : index
    %126 = vector.load %arg8[%c0_48, %c0_49] : memref<1x32xf32, #tpu.memory_space<vmem>>, vector<1x32xf32>
    %127 = vector.broadcast %126 : vector<1x32xf32> to vector<8x32xf32>
    %128 = arith.addf %125, %127 : vector<8x32xf32>
    %129 = arith.truncf %128 : vector<8x32xf32> to vector<8x32xbf16>
    %c0_50 = arith.constant 0 : index
    %c0_51 = arith.constant 0 : index
    %130 = vector.load %arg9[%c0_50, %c0_51] : memref<32x64xbf16, #tpu.memory_space<vmem>>, vector<32x64xbf16>
    %cst_52 = arith.constant dense<0.000000e+00> : vector<8x64xf32>
    %131 = tpu.matmul %129, %130, %cst_52 {dimension_numbers = #tpu.dot_dimension_numbers<[1], [0], [0], [1], [0, 0, 1, 1], [], []>} : vector<8x32xbf16>, vector<32x64xbf16>, vector<8x64xf32> -> vector<8x64xf32>
    %c0_53 = arith.constant 0 : index
    %c0_54 = arith.constant 0 : index
    %132 = vector.load %arg10[%c0_53, %c0_54] : memref<1x64xf32, #tpu.memory_space<vmem>>, vector<1x64xf32>
    %133 = vector.broadcast %132 : vector<1x64xf32> to vector<8x64xf32>
    %134 = arith.addf %131, %133 : vector<8x64xf32>
    %cst_55 = arith.constant 5.000000e-01 : f32
    %135 = vector.broadcast %cst_55 : f32 to vector<8x64xf32>
    %136 = arith.mulf %135, %134 : vector<8x64xf32>
    %cst_56 = arith.constant 0.707106769 : f32
    %137 = vector.broadcast %cst_56 : f32 to vector<8x64xf32>
    %138 = arith.mulf %134, %137 : vector<8x64xf32>
    %139 = math.erf %138 : vector<8x64xf32>
    %cst_57 = arith.constant 1.000000e+00 : f32
    %140 = vector.broadcast %cst_57 : f32 to vector<8x64xf32>
    %141 = arith.addf %140, %139 : vector<8x64xf32>
    %142 = arith.mulf %136, %141 : vector<8x64xf32>
    %143 = arith.truncf %142 : vector<8x64xf32> to vector<8x64xbf16>
    %c0_58 = arith.constant 0 : index
    %c0_59 = arith.constant 0 : index
    %144 = vector.load %arg11[%c0_58, %c0_59] : memref<64x32xbf16, #tpu.memory_space<vmem>>, vector<64x32xbf16>
    %cst_60 = arith.constant dense<0.000000e+00> : vector<8x32xf32>
    %145 = tpu.matmul %143, %144, %cst_60 {dimension_numbers = #tpu.dot_dimension_numbers<[1], [0], [0], [1], [0, 0, 1, 1], [], []>} : vector<8x64xbf16>, vector<64x32xbf16>, vector<8x32xf32> -> vector<8x32xf32>
    %c0_61 = arith.constant 0 : index
    %c0_62 = arith.constant 0 : index
    %146 = vector.load %arg12[%c0_61, %c0_62] : memref<1x32xf32, #tpu.memory_space<vmem>>, vector<1x32xf32>
    %147 = vector.broadcast %146 : vector<1x32xf32> to vector<8x32xf32>
    %148 = arith.addf %145, %147 : vector<8x32xf32>
    %c0_63 = arith.constant 0 : index
    %c0_64 = arith.constant 0 : index
    %149 = vector.load %arg13[%c0_63, %c0_64] : memref<8x32xf32, #tpu.memory_space<vmem>>, vector<8x32xf32>
    tpu.vector_store %arg13[%c0_63, %c0_64], %148 {strides = array<i32>} : memref<8x32xf32, #tpu.memory_space<vmem>>, vector<8x32xf32>,
    return
  }
  func.func @transform_0(%arg0: i32) -> (i32, i32) {
    %c0_i32 = arith.constant 0 : i32
    %c0_i32_0 = arith.constant 0 : i32
    return %arg0, %c0_i32 : i32, i32
  }
  func.func @transform_1(%arg0: i32) -> (i32, i32, i32) {
    %c0_i32 = arith.constant 0 : i32
    %c0_i32_0 = arith.constant 0 : i32
    %c0_i32_1 = arith.constant 0 : i32
    return %arg0, %c0_i32, %c0_i32_0 : i32, i32, i32
  }
  func.func @transform_2(%arg0: i32) -> (i32, i32) {
    %c0_i32 = arith.constant 0 : i32
    %c0_i32_0 = arith.constant 0 : i32
    %c0_i32_1 = arith.constant 0 : i32
    return %c0_i32, %c0_i32_0 : i32, i32
  }
  func.func @transform_3(%arg0: i32) -> (i32, i32) {
    %c0_i32 = arith.constant 0 : i32
    %c0_i32_0 = arith.constant 0 : i32
    %c0_i32_1 = arith.constant 0 : i32
    return %c0_i32, %c0_i32_0 : i32, i32
  }
  func.func @transform_4(%arg0: i32) -> (i32, i32) {
    %c0_i32 = arith.constant 0 : i32
    %c0_i32_0 = arith.constant 0 : i32
    %c0_i32_1 = arith.constant 0 : i32
    return %c0_i32, %c0_i32_0 : i32, i32
  }
  func.func @transform_5(%arg0: i32) -> (i32, i32) {
    %c0_i32 = arith.constant 0 : i32
    %c0_i32_0 = arith.constant 0 : i32
    %c0_i32_1 = arith.constant 0 : i32
    return %c0_i32, %c0_i32_0 : i32, i32
  }
  func.func @transform_6(%arg0: i32) -> (i32, i32) {
    %c0_i32 = arith.constant 0 : i32
    %c0_i32_0 = arith.constant 0 : i32
    %c0_i32_1 = arith.constant 0 : i32
    return %c0_i32, %c0_i32_0 : i32, i32
  }
  func.func @transform_7(%arg0: i32) -> (i32, i32) {
    %c0_i32 = arith.constant 0 : i32
    %c0_i32_0 = arith.constant 0 : i32
    %c0_i32_1 = arith.constant 0 : i32
    return %c0_i32, %c0_i32_0 : i32, i32
  }
  func.func @transform_8(%arg0: i32) -> (i32, i32) {
    %c0_i32 = arith.constant 0 : i32
    %c0_i32_0 = arith.constant 0 : i32
    %c0_i32_1 = arith.constant 0 : i32
    return %c0_i32, %c0_i32_0 : i32, i32
  }
  func.func @transform_9(%arg0: i32) -> (i32, i32) {
    %c0_i32 = arith.constant 0 : i32
    %c0_i32_0 = arith.constant 0 : i32
    %c0_i32_1 = arith.constant 0 : i32
    return %c0_i32, %c0_i32_0 : i32, i32
  }
  func.func @transform_10(%arg0: i32) -> (i32, i32) {
    %c0_i32 = arith.constant 0 : i32
    %c0_i32_0 = arith.constant 0 : i32
    %c0_i32_1 = arith.constant 0 : i32
    return %c0_i32, %c0_i32_0 : i32, i32
  }
  func.func @transform_11(%arg0: i32) -> (i32, i32) {
    %c0_i32 = arith.constant 0 : i32
    %c0_i32_0 = arith.constant 0 : i32
    %c0_i32_1 = arith.constant 0 : i32
    return %c0_i32, %c0_i32_0 : i32, i32
  }
  func.func @transform_12(%arg0: i32) -> (i32, i32) {
    %c0_i32 = arith.constant 0 : i32
    %c0_i32_0 = arith.constant 0 : i32
    return %arg0, %c0_i32 : i32, i32
  }
}

module attributes {stable_mosaic.version = 11 : i64} {
  func.func @encoder_layer_kernel(%arg0: i32, %arg1: memref<8x32xf32, #tpu.memory_space<vmem>>, %arg2: memref<1x8x8xi8, #tpu.memory_space<vmem>>, %arg3: memref<32x96xbf16, #tpu.memory_space<vmem>>, %arg4: memref<1x96xf32, #tpu.memory_space<vmem>>, %arg5: memref<32x32xbf16, #tpu.memory_space<vmem>>, %arg6: memref<1x32xf32, #tpu.memory_space<vmem>>, %arg7: memref<1x32xf32, #tpu.memory_space<vmem>>, %arg8: memref<1x32xf32, #tpu.memory_space<vmem>>, %arg9: memref<32x64xbf16, #tpu.memory_space<vmem>>, %arg10: memref<1x64xf32, #tpu.memory_space<vmem>>, %arg11: memref<64x32xbf16, #tpu.memory_space<vmem>>, %arg12: memref<1x32xf32, #tpu.memory_space<vmem>>, %arg13: memref<8x32xf32, #tpu.memory_space<vmem>>, %arg14: memref<8x32xf32, #tpu.memory_space<vmem>>) attributes {dimension_semantics = [#tpu.dimension_semantics<parallel>], iteration_bounds = array<i64: 2>, scalar_prefetch = 0 : i64, scratch_operands = 1 : i64, tpu.core_type = #tpu.core_type<tc>, window_params = [{transform_indices = @transform_0, window_bounds = array<i64: 8, 32>}, {transform_indices = @transform_1, window_bounds = array<i64: 1, 8, 8>}, {pipeline_mode = #tpu.pipeline_mode<synchronous>, transform_indices = @transform_2, window_bounds = array<i64: 32, 96>}, {pipeline_mode = #tpu.pipeline_mode<synchronous>, transform_indices = @transform_3, window_bounds = array<i64: 1, 96>}, {pipeline_mode = #tpu.pipeline_mode<synchronous>, transform_indices = @transform_4, window_bounds = array<i64: 32, 32>}, {pipeline_mode = #tpu.pipeline_mode<synchronous>, transform_indices = @transform_5, window_bounds = array<i64: 1, 32>}, {pipeline_mode = #tpu.pipeline_mode<synchronous>, transform_indices = @transform_6, window_bounds = array<i64: 1, 32>}, {pipeline_mode = #tpu.pipeline_mode<synchronous>, transform_indices = @transform_7, window_bounds = array<i64: 1, 32>}, {pipeline_mode = #tpu.pipeline_mode<synchronous>, transform_indices = @transform_8, window_bounds = array<i64: 32, 64>}, {pipeline_mode = #tpu.pipeline_mode<synchronous>, transform_indices = @transform_9, window_bounds = array<i64: 1, 64>}, {pipeline_mode = #tpu.pipeline_mode<synchronous>, transform_indices = @transform_10, window_bounds = array<i64: 64, 32>}, {pipeline_mode = #tpu.pipeline_mode<synchronous>, transform_indices = @transform_11, window_bounds = array<i64: 1, 32>}, {transform_indices = @transform_12, window_bounds = array<i64: 8, 32>}]} {
    %c0 = arith.constant 0 : index
    %c0_0 = arith.constant 0 : index
    %0 = vector.load %arg1[%c0, %c0_0] : memref<8x32xf32, #tpu.memory_space<vmem>>, vector<8x32xf32>
    %1 = arith.truncf %0 : vector<8x32xf32> to vector<8x32xbf16>
    %c0_1 = arith.constant 0 : index
    %c0_2 = arith.constant 0 : index
    %2 = vector.load %arg3[%c0_1, %c0_2] : memref<32x96xbf16, #tpu.memory_space<vmem>>, vector<32x96xbf16>
    %cst = arith.constant dense<0.000000e+00> : vector<8x96xf32>
    %3 = tpu.matmul %1, %2, %cst {dimension_numbers = #tpu.dot_dimension_numbers<[1], [0], [0], [1], [0, 0, 1, 1], [], []>} : vector<8x32xbf16>, vector<32x96xbf16>, vector<8x96xf32> -> vector<8x96xf32>
    %c0_3 = arith.constant 0 : index
    %c0_4 = arith.constant 0 : index
    %4 = vector.load %arg4[%c0_3, %c0_4] : memref<1x96xf32, #tpu.memory_space<vmem>>, vector<1x96xf32>
    %5 = vector.broadcast %4 : vector<1x96xf32> to vector<8x96xf32>
    %6 = arith.addf %3, %5 : vector<8x96xf32>
    %7 = vector.extract_strided_slice %6 {offsets = [0, 0], sizes = [8, 32], strides = [1, 1]} : vector<8x96xf32> to vector<8x32xf32>
    %cst_5 = arith.constant 0.353553385 : f32
    %8 = vector.broadcast %cst_5 : f32 to vector<8x32xf32>
    %9 = arith.mulf %7, %8 : vector<8x32xf32>
    %10 = arith.truncf %9 : vector<8x32xf32> to vector<8x32xbf16>
    %11 = vector.extract_strided_slice %6 {offsets = [0, 32], sizes = [8, 32], strides = [1, 1]} : vector<8x96xf32> to vector<8x32xf32>
    %12 = arith.truncf %11 : vector<8x32xf32> to vector<8x32xbf16>
    %13 = vector.extract_strided_slice %6 {offsets = [0, 64], sizes = [8, 32], strides = [1, 1]} : vector<8x96xf32> to vector<8x32xf32>
    %14 = arith.truncf %13 : vector<8x32xf32> to vector<8x32xbf16>
    %c0_6 = arith.constant 0 : index
    %c0_7 = arith.constant 0 : index
    %c0_8 = arith.constant 0 : index
    %15 = vector.load %arg2[%c0_6, %c0_7, %c0_8] : memref<1x8x8xi8, #tpu.memory_space<vmem>>, vector<1x8x8xi8>
    %16 = vector.shape_cast %15 : vector<1x8x8xi8> to vector<8x8xi8>
    %c0_i8 = arith.constant 0 : i8
    %17 = vector.broadcast %c0_i8 : i8 to vector<8x8xi8>
    %18 = arith.cmpi ne, %16, %17 : vector<8x8xi8>
    %19 = vector.extract_strided_slice %10 {offsets = [0, 0], sizes = [8, 8], strides = [1, 1]} : vector<8x32xbf16> to vector<8x8xbf16>
    %20 = vector.extract_strided_slice %12 {offsets = [0, 0], sizes = [8, 8], strides = [1, 1]} : vector<8x32xbf16> to vector<8x8xbf16>
    %21 = vector.extract_strided_slice %14 {offsets = [0, 0], sizes = [8, 8], strides = [1, 1]} : vector<8x32xbf16> to vector<8x8xbf16>
    %cst_9 = arith.constant dense<0.000000e+00> : vector<8x8xf32>
    %22 = tpu.matmul %19, %20, %cst_9 {dimension_numbers = #tpu.dot_dimension_numbers<[1], [1], [0], [0], [0, 0, 1, 0], [], []>} : vector<8x8xbf16>, vector<8x8xbf16>, vector<8x8xf32> -> vector<8x8xf32>
    %cst_10 = arith.constant -1.000000e+09 : f32
    %23 = vector.broadcast %cst_10 : f32 to vector<8x8xf32>
    %24 = arith.select %18, %23, %22 : vector<8x8xi1>, vector<8x8xf32>
    %cst_11 = arith.constant dense<0xFF800000> : vector<8xf32>
    %25 = vector.multi_reduction <maximumf>, %24, %cst_11 [1] : vector<8x8xf32> to vector<8xf32>
    %26 = vector.shape_cast %25 : vector<8xf32> to vector<8x1xf32>
    %27 = vector.broadcast %26 : vector<8x1xf32> to vector<8x8xf32>
    %28 = arith.subf %24, %27 : vector<8x8xf32>
    %29 = math.exp %28 : vector<8x8xf32>
    %cst_12 = arith.constant dense<0.000000e+00> : vector<8xf32>
    %30 = vector.multi_reduction <add>, %29, %cst_12 [1] : vector<8x8xf32> to vector<8xf32>
    %31 = vector.shape_cast %30 : vector<8xf32> to vector<8x1xf32>
    %32 = tpu.reciprocal %31 {approx = true} : vector<8x1xf32> -> vector<8x1xf32>
    %33 = vector.broadcast %32 : vector<8x1xf32> to vector<8x8xf32>
    %34 = arith.mulf %29, %33 : vector<8x8xf32>
    %35 = arith.truncf %34 : vector<8x8xf32> to vector<8x8xbf16>
    %cst_13 = arith.constant dense<0.000000e+00> : vector<8x8xf32>
    %36 = tpu.matmul %35, %21, %cst_13 {dimension_numbers = #tpu.dot_dimension_numbers<[1], [0], [0], [1], [0, 0, 1, 1], [], []>} : vector<8x8xbf16>, vector<8x8xbf16>, vector<8x8xf32> -> vector<8x8xf32>
    %c0_14 = arith.constant 0 : index
    %c0_15 = arith.constant 0 : index
    %37 = vector.load %arg14[%c0_14, %c0_15] : memref<8x32xf32, #tpu.memory_space<vmem>>, vector<8x8xf32>
    tpu.vector_store %arg14[%c0_14, %c0_15], %36 {strides = array<i32>} : memref<8x32xf32, #tpu.memory_space<vmem>>, vector<8x8xf32>,
    %38 = vector.extract_strided_slice %10 {offsets = [0, 8], sizes = [8, 8], strides = [1, 1]} : vector<8x32xbf16> to vector<8x8xbf16>
    %39 = vector.extract_strided_slice %12 {offsets = [0, 8], sizes = [8, 8], strides = [1, 1]} : vector<8x32xbf16> to vector<8x8xbf16>
    %40 = vector.extract_strided_slice %14 {offsets = [0, 8], sizes = [8, 8], strides = [1, 1]} : vector<8x32xbf16> to vector<8x8xbf16>
    %cst_16 = arith.constant dense<0.000000e+00> : vector<8x8xf32>
    %41 = tpu.matmul %38, %39, %cst_16 {dimension_numbers = #tpu.dot_dimension_numbers<[1], [1], [0], [0], [0, 0, 1, 0], [], []>} : vector<8x8xbf16>, vector<8x8xbf16>, vector<8x8xf32> -> vector<8x8xf32>
    %cst_17 = arith.constant -1.000000e+09 : f32
    %42 = vector.broadcast %cst_17 : f32 to vector<8x8xf32>
    %43 = arith.select %18, %42, %41 : vector<8x8xi1>, vector<8x8xf32>
    %cst_18 = arith.constant dense<0xFF800000> : vector<8xf32>
    %44 = vector.multi_reduction <maximumf>, %43, %cst_18 [1] : vector<8x8xf32> to vector<8xf32>
    %45 = vector.shape_cast %44 : vector<8xf32> to vector<8x1xf32>
    %46 = vector.broadcast %45 : vector<8x1xf32> to vector<8x8xf32>
    %47 = arith.subf %43, %46 : vector<8x8xf32>
    %48 = math.exp %47 : vector<8x8xf32>
    %cst_19 = arith.constant dense<0.000000e+00> : vector<8xf32>
    %49 = vector.multi_reduction <add>, %48, %cst_19 [1] : vector<8x8xf32> to vector<8xf32>
    %50 = vector.shape_cast %49 : vector<8xf32> to vector<8x1xf32>
    %51 = tpu.reciprocal %50 {approx = true} : vector<8x1xf32> -> vector<8x1xf32>
    %52 = vector.broadcast %51 : vector<8x1xf32> to vector<8x8xf32>
    %53 = arith.mulf %48, %52 : vector<8x8xf32>
    %54 = arith.truncf %53 : vector<8x8xf32> to vector<8x8xbf16>
    %cst_20 = arith.constant dense<0.000000e+00> : vector<8x8xf32>
    %55 = tpu.matmul %54, %40, %cst_20 {dimension_numbers = #tpu.dot_dimension_numbers<[1], [0], [0], [1], [0, 0, 1, 1], [], []>} : vector<8x8xbf16>, vector<8x8xbf16>, vector<8x8xf32> -> vector<8x8xf32>
    %c0_21 = arith.constant 0 : index
    %c8 = arith.constant 8 : index
    %56 = vector.load %arg14[%c0_21, %c8] : memref<8x32xf32, #tpu.memory_space<vmem>>, vector<8x8xf32>
    tpu.vector_store %arg14[%c0_21, %c8], %55 {strides = array<i32>} : memref<8x32xf32, #tpu.memory_space<vmem>>, vector<8x8xf32>,
    %57 = vector.extract_strided_slice %10 {offsets = [0, 16], sizes = [8, 8], strides = [1, 1]} : vector<8x32xbf16> to vector<8x8xbf16>
    %58 = vector.extract_strided_slice %12 {offsets = [0, 16], sizes = [8, 8], strides = [1, 1]} : vector<8x32xbf16> to vector<8x8xbf16>
    %59 = vector.extract_strided_slice %14 {offsets = [0, 16], sizes = [8, 8], strides = [1, 1]} : vector<8x32xbf16> to vector<8x8xbf16>
    %cst_22 = arith.constant dense<0.000000e+00> : vector<8x8xf32>
    %60 = tpu.matmul %57, %58, %cst_22 {dimension_numbers = #tpu.dot_dimension_numbers<[1], [1], [0], [0], [0, 0, 1, 0], [], []>} : vector<8x8xbf16>, vector<8x8xbf16>, vector<8x8xf32> -> vector<8x8xf32>
    %cst_23 = arith.constant -1.000000e+09 : f32
    %61 = vector.broadcast %cst_23 : f32 to vector<8x8xf32>
    %62 = arith.select %18, %61, %60 : vector<8x8xi1>, vector<8x8xf32>
    %cst_24 = arith.constant dense<0xFF800000> : vector<8xf32>
    %63 = vector.multi_reduction <maximumf>, %62, %cst_24 [1] : vector<8x8xf32> to vector<8xf32>
    %64 = vector.shape_cast %63 : vector<8xf32> to vector<8x1xf32>
    %65 = vector.broadcast %64 : vector<8x1xf32> to vector<8x8xf32>
    %66 = arith.subf %62, %65 : vector<8x8xf32>
    %67 = math.exp %66 : vector<8x8xf32>
    %cst_25 = arith.constant dense<0.000000e+00> : vector<8xf32>
    %68 = vector.multi_reduction <add>, %67, %cst_25 [1] : vector<8x8xf32> to vector<8xf32>
    %69 = vector.shape_cast %68 : vector<8xf32> to vector<8x1xf32>
    %70 = tpu.reciprocal %69 {approx = true} : vector<8x1xf32> -> vector<8x1xf32>
    %71 = vector.broadcast %70 : vector<8x1xf32> to vector<8x8xf32>
    %72 = arith.mulf %67, %71 : vector<8x8xf32>
    %73 = arith.truncf %72 : vector<8x8xf32> to vector<8x8xbf16>
    %cst_26 = arith.constant dense<0.000000e+00> : vector<8x8xf32>
    %74 = tpu.matmul %73, %59, %cst_26 {dimension_numbers = #tpu.dot_dimension_numbers<[1], [0], [0], [1], [0, 0, 1, 1], [], []>} : vector<8x8xbf16>, vector<8x8xbf16>, vector<8x8xf32> -> vector<8x8xf32>
    %c0_27 = arith.constant 0 : index
    %c16 = arith.constant 16 : index
    %75 = vector.load %arg14[%c0_27, %c16] : memref<8x32xf32, #tpu.memory_space<vmem>>, vector<8x8xf32>
    tpu.vector_store %arg14[%c0_27, %c16], %74 {strides = array<i32>} : memref<8x32xf32, #tpu.memory_space<vmem>>, vector<8x8xf32>,
    %76 = vector.extract_strided_slice %10 {offsets = [0, 24], sizes = [8, 8], strides = [1, 1]} : vector<8x32xbf16> to vector<8x8xbf16>
    %77 = vector.extract_strided_slice %12 {offsets = [0, 24], sizes = [8, 8], strides = [1, 1]} : vector<8x32xbf16> to vector<8x8xbf16>
    %78 = vector.extract_strided_slice %14 {offsets = [0, 24], sizes = [8, 8], strides = [1, 1]} : vector<8x32xbf16> to vector<8x8xbf16>
    %cst_28 = arith.constant dense<0.000000e+00> : vector<8x8xf32>
    %79 = tpu.matmul %76, %77, %cst_28 {dimension_numbers = #tpu.dot_dimension_numbers<[1], [1], [0], [0], [0, 0, 1, 0], [], []>} : vector<8x8xbf16>, vector<8x8xbf16>, vector<8x8xf32> -> vector<8x8xf32>
    %cst_29 = arith.constant -1.000000e+09 : f32
    %80 = vector.broadcast %cst_29 : f32 to vector<8x8xf32>
    %81 = arith.select %18, %80, %79 : vector<8x8xi1>, vector<8x8xf32>
    %cst_30 = arith.constant dense<0xFF800000> : vector<8xf32>
    %82 = vector.multi_reduction <maximumf>, %81, %cst_30 [1] : vector<8x8xf32> to vector<8xf32>
    %83 = vector.shape_cast %82 : vector<8xf32> to vector<8x1xf32>
    %84 = vector.broadcast %83 : vector<8x1xf32> to vector<8x8xf32>
    %85 = arith.subf %81, %84 : vector<8x8xf32>
    %86 = math.exp %85 : vector<8x8xf32>
    %cst_31 = arith.constant dense<0.000000e+00> : vector<8xf32>
    %87 = vector.multi_reduction <add>, %86, %cst_31 [1] : vector<8x8xf32> to vector<8xf32>
    %88 = vector.shape_cast %87 : vector<8xf32> to vector<8x1xf32>
    %89 = tpu.reciprocal %88 {approx = true} : vector<8x1xf32> -> vector<8x1xf32>
    %90 = vector.broadcast %89 : vector<8x1xf32> to vector<8x8xf32>
    %91 = arith.mulf %86, %90 : vector<8x8xf32>
    %92 = arith.truncf %91 : vector<8x8xf32> to vector<8x8xbf16>
    %cst_32 = arith.constant dense<0.000000e+00> : vector<8x8xf32>
    %93 = tpu.matmul %92, %78, %cst_32 {dimension_numbers = #tpu.dot_dimension_numbers<[1], [0], [0], [1], [0, 0, 1, 1], [], []>} : vector<8x8xbf16>, vector<8x8xbf16>, vector<8x8xf32> -> vector<8x8xf32>
    %c0_33 = arith.constant 0 : index
    %c24 = arith.constant 24 : index
    %94 = vector.load %arg14[%c0_33, %c24] : memref<8x32xf32, #tpu.memory_space<vmem>>, vector<8x8xf32>
    tpu.vector_store %arg14[%c0_33, %c24], %93 {strides = array<i32>} : memref<8x32xf32, #tpu.memory_space<vmem>>, vector<8x8xf32>,
    %c0_34 = arith.constant 0 : index
    %c0_35 = arith.constant 0 : index
    %95 = vector.load %arg14[%c0_34, %c0_35] : memref<8x32xf32, #tpu.memory_space<vmem>>, vector<8x32xf32>
    %96 = arith.truncf %95 : vector<8x32xf32> to vector<8x32xbf16>
    %c0_36 = arith.constant 0 : index
    %c0_37 = arith.constant 0 : index
    %97 = vector.load %arg5[%c0_36, %c0_37] : memref<32x32xbf16, #tpu.memory_space<vmem>>, vector<32x32xbf16>
    %cst_38 = arith.constant dense<0.000000e+00> : vector<8x32xf32>
    %98 = tpu.matmul %96, %97, %cst_38 {dimension_numbers = #tpu.dot_dimension_numbers<[1], [0], [0], [1], [0, 0, 1, 1], [], []>} : vector<8x32xbf16>, vector<32x32xbf16>, vector<8x32xf32> -> vector<8x32xf32>
    %c0_39 = arith.constant 0 : index
    %c0_40 = arith.constant 0 : index
    %99 = vector.load %arg6[%c0_39, %c0_40] : memref<1x32xf32, #tpu.memory_space<vmem>>, vector<1x32xf32>
    %100 = vector.broadcast %99 : vector<1x32xf32> to vector<8x32xf32>
    %101 = arith.addf %98, %100 : vector<8x32xf32>
    %102 = arith.addf %101, %0 : vector<8x32xf32>
    %cst_41 = arith.constant dense<0.000000e+00> : vector<8xf32>
    %103 = vector.multi_reduction <add>, %102, %cst_41 [1] : vector<8x32xf32> to vector<8xf32>
    %104 = vector.shape_cast %103 : vector<8xf32> to vector<8x1xf32>
    %cst_42 = arith.constant 3.200000e+01 : f32
    %105 = vector.broadcast %cst_42 : f32 to vector<8x1xf32>
    %106 = arith.divf %104, %105 : vector<8x1xf32>
    %107 = vector.broadcast %106 : vector<8x1xf32> to vector<8x32xf32>
    %108 = arith.subf %102, %107 : vector<8x32xf32>
    %109 = vector.broadcast %106 : vector<8x1xf32> to vector<8x32xf32>
    %110 = arith.subf %102, %109 : vector<8x32xf32>
    %111 = arith.mulf %108, %110 : vector<8x32xf32>
    %cst_43 = arith.constant dense<0.000000e+00> : vector<8xf32>
    %112 = vector.multi_reduction <add>, %111, %cst_43 [1] : vector<8x32xf32> to vector<8xf32>
    %113 = vector.shape_cast %112 : vector<8xf32> to vector<8x1xf32>
    %cst_44 = arith.constant 3.200000e+01 : f32
    %114 = vector.broadcast %cst_44 : f32 to vector<8x1xf32>
    %115 = arith.divf %113, %114 : vector<8x1xf32>
    %116 = vector.broadcast %106 : vector<8x1xf32> to vector<8x32xf32>
    %117 = arith.subf %102, %116 : vector<8x32xf32>
    %cst_45 = arith.constant 9.99999974E-6 : f32
    %118 = vector.broadcast %cst_45 : f32 to vector<8x1xf32>
    %119 = arith.addf %115, %118 : vector<8x1xf32>
    %120 = math.rsqrt %119 : vector<8x1xf32>
    %121 = vector.broadcast %120 : vector<8x1xf32> to vector<8x32xf32>
    %122 = arith.mulf %117, %121 : vector<8x32xf32>
    %c0_46 = arith.constant 0 : index
    %c0_47 = arith.constant 0 : index
    %123 = vector.load %arg7[%c0_46, %c0_47] : memref<1x32xf32, #tpu.memory_space<vmem>>, vector<1x32xf32>
    %124 = vector.broadcast %123 : vector<1x32xf32> to vector<8x32xf32>
    %125 = arith.mulf %122, %124 : vector<8x32xf32>
    %c0_48 = arith.constant 0 : index
    %c0_49 = arith.constant 0 : index
    %126 = vector.load %arg8[%c0_48, %c0_49] : memref<1x32xf32, #tpu.memory_space<vmem>>, vector<1x32xf32>
    %127 = vector.broadcast %126 : vector<1x32xf32> to vector<8x32xf32>
    %128 = arith.addf %125, %127 : vector<8x32xf32>
    %129 = arith.truncf %128 : vector<8x32xf32> to vector<8x32xbf16>
    %c0_50 = arith.constant 0 : index
    %c0_51 = arith.constant 0 : index
    %130 = vector.load %arg9[%c0_50, %c0_51] : memref<32x64xbf16, #tpu.memory_space<vmem>>, vector<32x64xbf16>
    %cst_52 = arith.constant dense<0.000000e+00> : vector<8x64xf32>
    %131 = tpu.matmul %129, %130, %cst_52 {dimension_numbers = #tpu.dot_dimension_numbers<[1], [0], [0], [1], [0, 0, 1, 1], [], []>} : vector<8x32xbf16>, vector<32x64xbf16>, vector<8x64xf32> -> vector<8x64xf32>
    %c0_53 = arith.constant 0 : index
    %c0_54 = arith.constant 0 : index
    %132 = vector.load %arg10[%c0_53, %c0_54] : memref<1x64xf32, #tpu.memory_space<vmem>>, vector<1x64xf32>
    %133 = vector.broadcast %132 : vector<1x64xf32> to vector<8x64xf32>
    %134 = arith.addf %131, %133 : vector<8x64xf32>
    %cst_55 = arith.constant 5.000000e-01 : f32
    %135 = vector.broadcast %cst_55 : f32 to vector<8x64xf32>
    %136 = arith.mulf %135, %134 : vector<8x64xf32>
    %cst_56 = arith.constant 0.707106769 : f32
    %137 = vector.broadcast %cst_56 : f32 to vector<8x64xf32>
    %138 = arith.mulf %134, %137 : vector<8x64xf32>
    %139 = math.erf %138 : vector<8x64xf32>
    %cst_57 = arith.constant 1.000000e+00 : f32
    %140 = vector.broadcast %cst_57 : f32 to vector<8x64xf32>
    %141 = arith.addf %140, %139 : vector<8x64xf32>
    %142 = arith.mulf %136, %141 : vector<8x64xf32>
    %143 = arith.truncf %142 : vector<8x64xf32> to vector<8x64xbf16>
    %c0_58 = arith.constant 0 : index
    %c0_59 = arith.constant 0 : index
    %144 = vector.load %arg11[%c0_58, %c0_59] : memref<64x32xbf16, #tpu.memory_space<vmem>>, vector<64x32xbf16>
    %cst_60 = arith.constant dense<0.000000e+00> : vector<8x32xf32>
    %145 = tpu.matmul %143, %144, %cst_60 {dimension_numbers = #tpu.dot_dimension_numbers<[1], [0], [0], [1], [0, 0, 1, 1], [], []>} : vector<8x64xbf16>, vector<64x32xbf16>, vector<8x32xf32> -> vector<8x32xf32>
    %c0_61 = arith.constant 0 : index
    %c0_62 = arith.constant 0 : index
    %146 = vector.load %arg12[%c0_61, %c0_62] : memref<1x32xf32, #tpu.memory_space<vmem>>, vector<1x32xf32>
    %147 = vector.broadcast %146 : vector<1x32xf32> to vector<8x32xf32>
    %148 = arith.addf %145, %147 : vector<8x32xf32>
    %c0_63 = arith.constant 0 : index
    %c0_64 = arith.constant 0 : index
    %149 = vector.load %arg13[%c0_63, %c0_64] : memref<8x32xf32, #tpu.memory_space<vmem>>, vector<8x32xf32>
    tpu.vector_store %arg13[%c0_63, %c0_64], %148 {strides = array<i32>} : memref<8x32xf32, #tpu.memory_space<vmem>>, vector<8x32xf32>,
    return
  }
  func.func @transform_0(%arg0: i32) -> (i32, i32) {
    %c0_i32 = arith.constant 0 : i32
    %c0_i32_0 = arith.constant 0 : i32
    return %arg0, %c0_i32 : i32, i32
  }
  func.func @transform_1(%arg0: i32) -> (i32, i32, i32) {
    %c0_i32 = arith.constant 0 : i32
    %c0_i32_0 = arith.constant 0 : i32
    %c0_i32_1 = arith.constant 0 : i32
    return %arg0, %c0_i32, %c0_i32_0 : i32, i32, i32
  }
  func.func @transform_2(%arg0: i32) -> (i32, i32) {
    %c0_i32 = arith.constant 0 : i32
    %c0_i32_0 = arith.constant 0 : i32
    %c0_i32_1 = arith.constant 0 : i32
    return %c0_i32, %c0_i32_0 : i32, i32
  }
  func.func @transform_3(%arg0: i32) -> (i32, i32) {
    %c0_i32 = arith.constant 0 : i32
    %c0_i32_0 = arith.constant 0 : i32
    %c0_i32_1 = arith.constant 0 : i32
    return %c0_i32, %c0_i32_0 : i32, i32
  }
  func.func @transform_4(%arg0: i32) -> (i32, i32) {
    %c0_i32 = arith.constant 0 : i32
    %c0_i32_0 = arith.constant 0 : i32
    %c0_i32_1 = arith.constant 0 : i32
    return %c0_i32, %c0_i32_0 : i32, i32
  }
  func.func @transform_5(%arg0: i32) -> (i32, i32) {
    %c0_i32 = arith.constant 0 : i32
    %c0_i32_0 = arith.constant 0 : i32
    %c0_i32_1 = arith.constant 0 : i32
    return %c0_i32, %c0_i32_0 : i32, i32
  }
  func.func @transform_6(%arg0: i32) -> (i32, i32) {
    %c0_i32 = arith.constant 0 : i32
    %c0_i32_0 = arith.constant 0 : i32
    %c0_i32_1 = arith.constant 0 : i32
    return %c0_i32, %c0_i32_0 : i32, i32
  }
  func.func @transform_7(%arg0: i32) -> (i32, i32) {
    %c0_i32 = arith.constant 0 : i32
    %c0_i32_0 = arith.constant 0 : i32
    %c0_i32_1 = arith.constant 0 : i32
    return %c0_i32, %c0_i32_0 : i32, i32
  }
  func.func @transform_8(%arg0: i32) -> (i32, i32) {
    %c0_i32 = arith.constant 0 : i32
    %c0_i32_0 = arith.constant 0 : i32
    %c0_i32_1 = arith.constant 0 : i32
    return %c0_i32, %c0_i32_0 : i32, i32
  }
  func.func @transform_9(%arg0: i32) -> (i32, i32) {
    %c0_i32 = arith.constant 0 : i32
    %c0_i32_0 = arith.constant 0 : i32
    %c0_i32_1 = arith.constant 0 : i32
    return %c0_i32, %c0_i32_0 : i32, i32
  }
  func.func @transform_10(%arg0: i32) -> (i32, i32) {
    %c0_i32 = arith.constant 0 : i32
    %c0_i32_0 = arith.constant 0 : i32
    %c0_i32_1 = arith.constant 0 : i32
    return %c0_i32, %c0_i32_0 : i32, i32
  }
  func.func @transform_11(%arg0: i32) -> (i32, i32) {
    %c0_i32 = arith.constant 0 : i32
    %c0_i32_0 = arith.constant 0 : i32
    %c0_i32_1 = arith.constant 0 : i32
    return %c0_i32, %c0_i32_0 : i32, i32
  }
  func.func @transform_12(%arg0: i32) -> (i32, i32) {
    %c0_i32 = arith.constant 0 : i32
    %c0_i32_0 = arith.constant 0 : i32
    return %arg0, %c0_i32 : i32, i32
  }
}

</mosaic_0001>

<llo_original>
// kernel: tpu_custom_call.1
$region0: #{tpu_custom_call.1}
  #allocation0 [shape = 'u32[]', space=smem, size = 0x4, offset = 0x4, fixed_abs, tag = 'smem constant byte address 0x4 - core index']
  #allocation1 [shape = 'u32[144,128]{1,0:T(1,128)}', space=vmem, size = 0x12000, scoped, tag = 'internal scratch']
  #allocation2 [shape = 'f32[8,32]{1,0:T(8,128)}', space=vmem, size = 0x1000, scoped, tag = 'scratch operand']
  %s0 = inlined_call_operand.vmem [shape: f32[16,32], index: 0, kind: input, shape index: {}]
  %s1 = inlined_call_operand.hbm [shape: s8[2,8,8], index: 1, kind: input, shape index: {}]
  %s2 = inlined_call_operand.vmem [shape: bf16[32,96], index: 2, kind: input, shape index: {}]
  %s3 = inlined_call_operand.vmem [shape: f32[1,96], index: 3, kind: input, shape index: {}]
  %s4 = inlined_call_operand.vmem [shape: bf16[32,32], index: 4, kind: input, shape index: {}]
  %s5 = inlined_call_operand.vmem [shape: f32[1,32], index: 5, kind: input, shape index: {}]
  %s6 = inlined_call_operand.vmem [shape: f32[1,32], index: 6, kind: input, shape index: {}]
  %s7 = inlined_call_operand.vmem [shape: f32[1,32], index: 7, kind: input, shape index: {}]
  %s8 = inlined_call_operand.hbm [shape: bf16[32,64], index: 8, kind: input, shape index: {}]
  %s9 = inlined_call_operand.vmem [shape: f32[1,64], index: 9, kind: input, shape index: {}]
  %s10 = inlined_call_operand.vmem [shape: bf16[64,32], index: 10, kind: input, shape index: {}]
  %s11 = inlined_call_operand.vmem [shape: f32[1,32], index: 11, kind: input, shape index: {}]
  %s12 = inlined_call_operand.hbm [shape: f32[16,32], index: 12, kind: output, shape index: {}]
  %s13 = sld [smem:[#allocation0]]
  $region89: #{tpu_custom_call.1} parent=0
    _
  %s15 = ssub.s32 1, %s13
  %s16 = scalar_select 0, %s15, %s13
  $region1: #{tpu_custom_call.1} parent=0
    #allocation3 [shape = 'u8[2048]{0}', space=vmem, size = 0x800, scoped, tag = 'input window, operand 1']
    #allocation4 [shape = 's32[2]{0}', space=sflag, size = 0x8, scoped, tag = 'scoped memory for tpu_custom_call.1']
    #allocation5 [shape = 's32[2]{0}', space=sflag, size = 0x8, scoped, tag = 'scoped memory for tpu_custom_call.1']
    #allocation6 [shape = 'u8[8192]{0}', space=vmem, size = 0x2000, scoped, tag = 'input window, operand 8, single buffered']
    #allocation7 [shape = 's32[1]{0}', space=sflag, size = 0x4, scoped, tag = 'scoped memory for tpu_custom_call.1']
    #allocation8 [shape = 'u8[8192]{0}', space=vmem, size = 0x2000, scoped, tag = 'output window, operand 0']
    %17 = vsyncpa [#allocation4], 0
    %s18 = scalar_lea.sflag [#allocation4], 1
    %19 = vsyncpa %s18, 0
    %20 = vsyncpa [#allocation7], 0
    %21 = vsyncpa [#allocation5], 0
    %s22 = scalar_lea.sflag [#allocation5], 1
    %23 = vsyncpa %s22, 0
    loop: start=0, step=1, limit=4
    $region2: #{tpu_custom_call.1} parent=1 // loop_pre_header
      _
    $region3: #{tpu_custom_call.1} parent=1 // loop_header
      %s25 = sphi 0, %s29
      %p26 = scmp.ge.s32.totalorder %s25, 4
      %s35 = sphi 0, %s37
      %s38 = sphi 0, %s35
      %s39 = sphi 0, %s38
      %s55 = sphi 0, %s39
      %s61 = sphi 0, %s63
      %s64 = sphi 0, %s61
      %s65 = sphi 0, %s64
      %s81 = sphi 0, %s65
      %s85 = sphi 0, %s85
      %s87 = sphi 0, %s85
      %s88 = sphi 0, %s87
      %s102 = sphi 0, %s88
      %s106 = sphi 0, %s106
      %s108 = sphi 0, %s106
      %s109 = sphi 0, %s108
      %s123 = sphi 0, %s109
      %s127 = sphi 0, %s127
      %s129 = sphi 0, %s127
      %s130 = sphi 0, %s129
      %s144 = sphi 0, %s130
      %s148 = sphi 0, %s148
      %s150 = sphi 0, %s148
      %s151 = sphi 0, %s150
      %s165 = sphi 0, %s151
      %s169 = sphi 0, %s169
      %s171 = sphi 0, %s169
      %s172 = sphi 0, %s171
      %s186 = sphi 0, %s172
      %s190 = sphi 0, %s190
      %s192 = sphi 0, %s190
      %s193 = sphi 0, %s192
      %s207 = sphi 0, %s193
      %s211 = sphi 0, %s211
      %s213 = sphi 0, %s211
      %s214 = sphi 0, %s213
      %s228 = sphi 0, %s214
      %s232 = sphi 0, %s232
      %s234 = sphi 0, %s232
      %s235 = sphi 0, %s234
      %s249 = sphi 0, %s235
      %s253 = sphi 0, %s253
      %s255 = sphi 0, %s253
      %s256 = sphi 0, %s255
      %s270 = sphi 0, %s256
      %s274 = sphi 0, %s274
      %s276 = sphi 0, %s274
      %s277 = sphi 0, %s276
      %s291 = sphi 0, %s277
      %s297 = sphi 0, %s299
      %s300 = sphi 0, %s297
      %s301 = sphi 0, %s300
      %s317 = sphi 0, %s301
    $region4: #{tpu_custom_call.1} parent=1 // loop_header_branch
      %28 = sbr.rel (%p26) target = $region8
    $region5: #{tpu_custom_call.1} parent=1 // loop_body
      %s30 = ssub.s32 %s25, 1
      %s31 = ssub.s32 %s25, 2
      %s32 = sadd.s32 %s25, 1
      %s33 = ssub.s32 %s25, %s32
      %p34 = scmp.eq.s32.totalorder %s33, 0
      %s36 = sadd.s32 %s35, 1
      %s37 = scalar_select %p34, %s35, %s36
      %p40 = pneg %p34
      %p41 = scmp.eq.s32.totalorder %s25, 1
      %p42 = por %p40, %p41
      %p43 = scmp.ne.s32.totalorder %s35, %s38
      %p44 = scmp.eq.s32.totalorder %s25, 0
      %p45 = por %p43, %p44
      %p46 = scmp.ne.s32.totalorder %s35, %s38
      %p47 = scmp.eq.s32.totalorder %s30, 1
      %p48 = por %p46, %p47
      %p49 = scmp.ne.s32.totalorder %s38, %s39
      %p50 = scmp.eq.s32.totalorder %s30, 0
      %p51 = por %p49, %p50
      %p52 = scmp.ne.s32.totalorder %s38, %s39
      %p53 = scmp.eq.s32.totalorder %s31, 1
      %p54 = por %p52, %p53
      %p56 = scmp.ne.s32.totalorder %s39, %s55
      %p57 = scmp.eq.s32.totalorder %s31, 0
      %p58 = por %p56, %p57
      %s59 = ssub.s32 %s25, %s32
      %p60 = scmp.eq.s32.totalorder %s59, 0
      %s62 = sadd.s32 %s61, 1
      %s63 = scalar_select %p60, %s61, %s62
      %p66 = pneg %p60
      %p67 = scmp.eq.s32.totalorder %s25, 1
      %p68 = por %p66, %p67
      %p69 = scmp.ne.s32.totalorder %s61, %s64
      %p70 = scmp.eq.s32.totalorder %s25, 0
      %p71 = por %p69, %p70
      %p72 = scmp.ne.s32.totalorder %s61, %s64
      %p73 = scmp.eq.s32.totalorder %s30, 1
      %p74 = por %p72, %p73
      %p75 = scmp.ne.s32.totalorder %s64, %s65
      %p76 = scmp.eq.s32.totalorder %s30, 0
      %p77 = por %p75, %p76
      %p78 = scmp.ne.s32.totalorder %s64, %s65
      %p79 = scmp.eq.s32.totalorder %s31, 1
      %p80 = por %p78, %p79
      %p82 = scmp.ne.s32.totalorder %s65, %s81
      %p83 = scmp.eq.s32.totalorder %s31, 0
      %p84 = por %p82, %p83
      %s86 = sadd.s32 %s85, 1
      %p89 = scmp.eq.s32.totalorder %s25, 1
      %p90 = scmp.ne.s32.totalorder %s85, %s87
      %p91 = scmp.eq.s32.totalorder %s25, 0
      %p92 = por %p90, %p91
      %p93 = scmp.ne.s32.totalorder %s85, %s87
      %p94 = scmp.eq.s32.totalorder %s30, 1
      %p95 = por %p93, %p94
      %p96 = scmp.ne.s32.totalorder %s87, %s88
      %p97 = scmp.eq.s32.totalorder %s30, 0
      %p98 = por %p96, %p97
      %p99 = scmp.ne.s32.totalorder %s87, %s88
      %p100 = scmp.eq.s32.totalorder %s31, 1
      %p101 = por %p99, %p100
      %p103 = scmp.ne.s32.totalorder %s88, %s102
      %p104 = scmp.eq.s32.totalorder %s31, 0
      %p105 = por %p103, %p104
      %s107 = sadd.s32 %s106, 1
      %p110 = scmp.eq.s32.totalorder %s25, 1
      %p111 = scmp.ne.s32.totalorder %s106, %s108
      %p112 = scmp.eq.s32.totalorder %s25, 0
      %p113 = por %p111, %p112
      %p114 = scmp.ne.s32.totalorder %s106, %s108
      %p115 = scmp.eq.s32.totalorder %s30, 1
      %p116 = por %p114, %p115
      %p117 = scmp.ne.s32.totalorder %s108, %s109
      %p118 = scmp.eq.s32.totalorder %s30, 0
      %p119 = por %p117, %p118
      %p120 = scmp.ne.s32.totalorder %s108, %s109
      %p121 = scmp.eq.s32.totalorder %s31, 1
      %p122 = por %p120, %p121
      %p124 = scmp.ne.s32.totalorder %s109, %s123
      %p125 = scmp.eq.s32.totalorder %s31, 0
      %p126 = por %p124, %p125
      %s128 = sadd.s32 %s127, 1
      %p131 = scmp.eq.s32.totalorder %s25, 1
      %p132 = scmp.ne.s32.totalorder %s127, %s129
      %p133 = scmp.eq.s32.totalorder %s25, 0
      %p134 = por %p132, %p133
      %p135 = scmp.ne.s32.totalorder %s127, %s129
      %p136 = scmp.eq.s32.totalorder %s30, 1
      %p137 = por %p135, %p136
      %p138 = scmp.ne.s32.totalorder %s129, %s130
      %p139 = scmp.eq.s32.totalorder %s30, 0
      %p140 = por %p138, %p139
      %p141 = scmp.ne.s32.totalorder %s129, %s130
      %p142 = scmp.eq.s32.totalorder %s31, 1
      %p143 = por %p141, %p142
      %p145 = scmp.ne.s32.totalorder %s130, %s144
      %p146 = scmp.eq.s32.totalorder %s31, 0
      %p147 = por %p145, %p146
      %s149 = sadd.s32 %s148, 1
      %p152 = scmp.eq.s32.totalorder %s25, 1
      %p153 = scmp.ne.s32.totalorder %s148, %s150
      %p154 = scmp.eq.s32.totalorder %s25, 0
      %p155 = por %p153, %p154
      %p156 = scmp.ne.s32.totalorder %s148, %s150
      %p157 = scmp.eq.s32.totalorder %s30, 1
      %p158 = por %p156, %p157
      %p159 = scmp.ne.s32.totalorder %s150, %s151
      %p160 = scmp.eq.s32.totalorder %s30, 0
      %p161 = por %p159, %p160
      %p162 = scmp.ne.s32.totalorder %s150, %s151
      %p163 = scmp.eq.s32.totalorder %s31, 1
      %p164 = por %p162, %p163
      %p166 = scmp.ne.s32.totalorder %s151, %s165
      %p167 = scmp.eq.s32.totalorder %s31, 0
      %p168 = por %p166, %p167
      %s170 = sadd.s32 %s169, 1
      %p173 = scmp.eq.s32.totalorder %s25, 1
      %p174 = scmp.ne.s32.totalorder %s169, %s171
      %p175 = scmp.eq.s32.totalorder %s25, 0
      %p176 = por %p174, %p175
      %p177 = scmp.ne.s32.totalorder %s169, %s171
      %p178 = scmp.eq.s32.totalorder %s30, 1
      %p179 = por %p177, %p178
      %p180 = scmp.ne.s32.totalorder %s171, %s172
      %p181 = scmp.eq.s32.totalorder %s30, 0
      %p182 = por %p180, %p181
      %p183 = scmp.ne.s32.totalorder %s171, %s172
      %p184 = scmp.eq.s32.totalorder %s31, 1
      %p185 = por %p183, %p184
      %p187 = scmp.ne.s32.totalorder %s172, %s186
      %p188 = scmp.eq.s32.totalorder %s31, 0
      %p189 = por %p187, %p188
      %s191 = sadd.s32 %s190, 1
      %p194 = scmp.eq.s32.totalorder %s25, 1
      %p195 = scmp.ne.s32.totalorder %s190, %s192
      %p196 = scmp.eq.s32.totalorder %s25, 0
      %p197 = por %p195, %p196
      %p198 = scmp.ne.s32.totalorder %s190, %s192
      %p199 = scmp.eq.s32.totalorder %s30, 1
      %p200 = por %p198, %p199
      %p201 = scmp.ne.s32.totalorder %s192, %s193
      %p202 = scmp.eq.s32.totalorder %s30, 0
      %p203 = por %p201, %p202
      %p204 = scmp.ne.s32.totalorder %s192, %s193
      %p205 = scmp.eq.s32.totalorder %s31, 1
      %p206 = por %p204, %p205
      %p208 = scmp.ne.s32.totalorder %s193, %s207
      %p209 = scmp.eq.s32.totalorder %s31, 0
      %p210 = por %p208, %p209
      %s212 = sadd.s32 %s211, 1
      %p215 = scmp.eq.s32.totalorder %s25, 1
      %p216 = scmp.ne.s32.totalorder %s211, %s213
      %p217 = scmp.eq.s32.totalorder %s25, 0
      %p218 = por %p216, %p217
      %p219 = scmp.ne.s32.totalorder %s211, %s213
      %p220 = scmp.eq.s32.totalorder %s30, 1
      %p221 = por %p219, %p220
      %p222 = scmp.ne.s32.totalorder %s213, %s214
      %p223 = scmp.eq.s32.totalorder %s30, 0
      %p224 = por %p222, %p223
      %p225 = scmp.ne.s32.totalorder %s213, %s214
      %p226 = scmp.eq.s32.totalorder %s31, 1
      %p227 = por %p225, %p226
      %p229 = scmp.ne.s32.totalorder %s214, %s228
      %p230 = scmp.eq.s32.totalorder %s31, 0
      %p231 = por %p229, %p230
      %s233 = sadd.s32 %s232, 1
      %p236 = scmp.eq.s32.totalorder %s25, 1
      %p237 = scmp.ne.s32.totalorder %s232, %s234
      %p238 = scmp.eq.s32.totalorder %s25, 0
      %p239 = por %p237, %p238
      %p240 = scmp.ne.s32.totalorder %s232, %s234
      %p241 = scmp.eq.s32.totalorder %s30, 1
      %p242 = por %p240, %p241
      %p243 = scmp.ne.s32.totalorder %s234, %s235
      %p244 = scmp.eq.s32.totalorder %s30, 0
      %p245 = por %p243, %p244
      %p246 = scmp.ne.s32.totalorder %s234, %s235
      %p247 = scmp.eq.s32.totalorder %s31, 1
      %p248 = por %p246, %p247
      %p250 = scmp.ne.s32.totalorder %s235, %s249
      %p251 = scmp.eq.s32.totalorder %s31, 0
      %p252 = por %p250, %p251
      %s254 = sadd.s32 %s253, 1
      %p257 = scmp.eq.s32.totalorder %s25, 1
      %p258 = scmp.ne.s32.totalorder %s253, %s255
      %p259 = scmp.eq.s32.totalorder %s25, 0
      %p260 = por %p258, %p259
      %p261 = scmp.ne.s32.totalorder %s253, %s255
      %p262 = scmp.eq.s32.totalorder %s30, 1
      %p263 = por %p261, %p262
      %p264 = scmp.ne.s32.totalorder %s255, %s256
      %p265 = scmp.eq.s32.totalorder %s30, 0
      %p266 = por %p264, %p265
      %p267 = scmp.ne.s32.totalorder %s255, %s256
      %p268 = scmp.eq.s32.totalorder %s31, 1
      %p269 = por %p267, %p268
      %p271 = scmp.ne.s32.totalorder %s256, %s270
      %p272 = scmp.eq.s32.totalorder %s31, 0
      %p273 = por %p271, %p272
      %s275 = sadd.s32 %s274, 1
      %p278 = scmp.eq.s32.totalorder %s25, 1
      %p279 = scmp.ne.s32.totalorder %s274, %s276
      %p280 = scmp.eq.s32.totalorder %s25, 0
      %p281 = por %p279, %p280
      %p282 = scmp.ne.s32.totalorder %s274, %s276
      %p283 = scmp.eq.s32.totalorder %s30, 1
      %p284 = por %p282, %p283
      %p285 = scmp.ne.s32.totalorder %s276, %s277
      %p286 = scmp.eq.s32.totalorder %s30, 0
      %p287 = por %p285, %p286
      %p288 = scmp.ne.s32.totalorder %s276, %s277
      %p289 = scmp.eq.s32.totalorder %s31, 1
      %p290 = por %p288, %p289
      %p292 = scmp.ne.s32.totalorder %s277, %s291
      %p293 = scmp.eq.s32.totalorder %s31, 0
      %p294 = por %p292, %p293
      %s295 = ssub.s32 %s25, %s32
      %p296 = scmp.eq.s32.totalorder %s295, 0
      %s298 = sadd.s32 %s297, 1
      %s299 = scalar_select %p296, %s297, %s298
      %p302 = pneg %p296
      %p303 = scmp.eq.s32.totalorder %s25, 1
      %p304 = por %p302, %p303
      %p305 = scmp.ne.s32.totalorder %s297, %s300
      %p306 = scmp.eq.s32.totalorder %s25, 0
      %p307 = por %p305, %p306
      %p308 = scmp.ne.s32.totalorder %s297, %s300
      %p309 = scmp.eq.s32.totalorder %s30, 1
      %p310 = por %p308, %p309
      %p311 = scmp.ne.s32.totalorder %s300, %s301
      %p312 = scmp.eq.s32.totalorder %s30, 0
      %p313 = por %p311, %p312
      %p314 = scmp.ne.s32.totalorder %s300, %s301
      %p315 = scmp.eq.s32.totalorder %s31, 1
      %p316 = por %p314, %p315
      %p318 = scmp.ne.s32.totalorder %s301, %s317
      %p319 = scmp.eq.s32.totalorder %s31, 0
      %p320 = por %p318, %p319
      %p321 = scmp.le.s32.totalorder 1, %s25
      %p322 = scmp.lt.s32.totalorder %s25, 3
      %p323 = pnand %p321, %p322
      %p324 = pneg %p323
      // Predicated region
      $region9: #{tpu_custom_call.1} parent=5 // pred_check
        _
      $region10: #{tpu_custom_call.1} parent=5 // pred_check_branch
        %326 = sbr.rel (%p323) target = $region12
      $region11: #{tpu_custom_call.1} parent=5 // pred_region
        %s327 = ssub.s32 %s25, 1
        // Predicated region
        $region13: #{tpu_custom_call.1} parent=11 // pred_check
          %p328 = pneg %p98
        $region14: #{tpu_custom_call.1} parent=11 // pred_check_branch
          %330 = sbr.rel (%p328) target = $region16
        $region15: #{tpu_custom_call.1} parent=11 // pred_region
          _
        $region16: #{tpu_custom_call.1} parent=11 // pred_fallthru
          _
        // Predicated region
        $region17: #{tpu_custom_call.1} parent=11 // pred_check
          %p331 = pneg %p119
        $region18: #{tpu_custom_call.1} parent=11 // pred_check_branch
          %333 = sbr.rel (%p331) target = $region20
        $region19: #{tpu_custom_call.1} parent=11 // pred_region
          _
        $region20: #{tpu_custom_call.1} parent=11 // pred_fallthru
          _
        // Predicated region
        $region21: #{tpu_custom_call.1} parent=11 // pred_check
          %p334 = pneg %p140
        $region22: #{tpu_custom_call.1} parent=11 // pred_check_branch
          %336 = sbr.rel (%p334) target = $region24
        $region23: #{tpu_custom_call.1} parent=11 // pred_region
          _
        $region24: #{tpu_custom_call.1} parent=11 // pred_fallthru
          _
        // Predicated region
        $region25: #{tpu_custom_call.1} parent=11 // pred_check
          %p337 = pneg %p161
        $region26: #{tpu_custom_call.1} parent=11 // pred_check_branch
          %339 = sbr.rel (%p337) target = $region28
        $region27: #{tpu_custom_call.1} parent=11 // pred_region
          _
        $region28: #{tpu_custom_call.1} parent=11 // pred_fallthru
          _
        // Predicated region
        $region29: #{tpu_custom_call.1} parent=11 // pred_check
          %p340 = pneg %p182
        $region30: #{tpu_custom_call.1} parent=11 // pred_check_branch
          %342 = sbr.rel (%p340) target = $region32
        $region31: #{tpu_custom_call.1} parent=11 // pred_region
          _
        $region32: #{tpu_custom_call.1} parent=11 // pred_fallthru
          _
        // Predicated region
        $region33: #{tpu_custom_call.1} parent=11 // pred_check
          %p343 = pneg %p203
        $region34: #{tpu_custom_call.1} parent=11 // pred_check_branch
          %345 = sbr.rel (%p343) target = $region36
        $region35: #{tpu_custom_call.1} parent=11 // pred_region
          _
        $region36: #{tpu_custom_call.1} parent=11 // pred_fallthru
          _
        // Predicated region
        $region37: #{tpu_custom_call.1} parent=11 // pred_check
          %p346 = pneg %p224
        $region38: #{tpu_custom_call.1} parent=11 // pred_check_branch
          %348 = sbr.rel (%p346) target = $region40
        $region39: #{tpu_custom_call.1} parent=11 // pred_region
          %s350 = ssub.s32 256, 256
          %351 = vsyncadd [#allocation7], %s350
          %s352 = sshll.u32 [#allocation6], 4
          %s353 = int_to_ptr.vmem [resolvable:$true] %s352
          %358 = dma.hbm_to_vmem [thread:$0]  %s8, 256, %s353, [#allocation7], 64, 64, 4
        $region40: #{tpu_custom_call.1} parent=11 // pred_fallthru
          _
        // Predicated region
        $region41: #{tpu_custom_call.1} parent=11 // pred_check
          %p359 = pneg %p245
        $region42: #{tpu_custom_call.1} parent=11 // pred_check_branch
          %361 = sbr.rel (%p359) target = $region44
        $region43: #{tpu_custom_call.1} parent=11 // pred_region
          _
        $region44: #{tpu_custom_call.1} parent=11 // pred_fallthru
          _
        // Predicated region
        $region45: #{tpu_custom_call.1} parent=11 // pred_check
          %p362 = pneg %p266
        $region46: #{tpu_custom_call.1} parent=11 // pred_check_branch
          %364 = sbr.rel (%p362) target = $region48
        $region47: #{tpu_custom_call.1} parent=11 // pred_region
          _
        $region48: #{tpu_custom_call.1} parent=11 // pred_fallthru
          _
        // Predicated region
        $region49: #{tpu_custom_call.1} parent=11 // pred_check
          %p365 = pneg %p287
        $region50: #{tpu_custom_call.1} parent=11 // pred_check_branch
          %367 = sbr.rel (%p365) target = $region52
        $region51: #{tpu_custom_call.1} parent=11 // pred_region
          _
        $region52: #{tpu_custom_call.1} parent=11 // pred_fallthru
          _
      $region12: #{tpu_custom_call.1} parent=5 // pred_fallthru
        _
      %p368 = scmp.lt.s32.totalorder %s25, 2
      // Predicated region
      $region53: #{tpu_custom_call.1} parent=5 // pred_check
        %p369 = pneg %p368
      $region54: #{tpu_custom_call.1} parent=5 // pred_check_branch
        %371 = sbr.rel (%p369) target = $region56
      $region55: #{tpu_custom_call.1} parent=5 // pred_region
        // Predicated region
        $region57: #{tpu_custom_call.1} parent=55 // pred_check
          %p372 = pneg %p45
        $region58: #{tpu_custom_call.1} parent=55 // pred_check_branch
          %374 = sbr.rel (%p372) target = $region60
        $region59: #{tpu_custom_call.1} parent=55 // pred_region
          %p375 = scmp.lt.s32.totalorder %s25, 1
          %s376 = scalar_select %p375, %s25, 1
          %s377 = smul.addr %s376, 8
          %s378 = scalar_lea.vmem %s0, %s377
        $region60: #{tpu_custom_call.1} parent=55 // pred_fallthru
          _
        // Predicated region
        $region61: #{tpu_custom_call.1} parent=55 // pred_check
          %p379 = pneg %p71
        $region62: #{tpu_custom_call.1} parent=55 // pred_check_branch
          %381 = sbr.rel (%p379) target = $region64
        $region63: #{tpu_custom_call.1} parent=55 // pred_region
          %s382 = sand.u32 %s61, 1
          %s383 = scalar_lea.sflag [#allocation4], %s382
          %s384 = sand.u32 %s61, 1
          %s385 = smul.addr %s384, 2
          %s386 = scalar_lea.vmem [#allocation3], %s385
          %s388 = ssub.s32 32, 32
          %389 = vsyncadd %s383, %s388
          %s390 = smul.addr %s25, 32
          %s391 = scalar_lea.hbm %s1, %s390
          %s393 = sshll.u32 %s386, 4
          %s394 = int_to_ptr.vmem [resolvable:$true] %s393
          %396 = dma.hbm_to_vmem [thread:$0]  %s391, 32, %s394, %s383
        $region64: #{tpu_custom_call.1} parent=55 // pred_fallthru
          _
      $region56: #{tpu_custom_call.1} parent=5 // pred_fallthru
        _
      %p397 = scmp.le.s32.totalorder 1, %s25
      %p398 = scmp.lt.s32.totalorder %s25, 3
      %p399 = pnand %p397, %p398
      %p400 = pneg %p399
      // Predicated region
      $region65: #{tpu_custom_call.1} parent=5 // pred_check
        _
      $region66: #{tpu_custom_call.1} parent=5 // pred_check_branch
        %402 = sbr.rel (%p399) target = $region68
      $region67: #{tpu_custom_call.1} parent=5 // pred_region
        %s403 = ssub.s32 %s25, 1
        %s404 = sand.u32 %s64, 1
        %s405 = scalar_lea.sflag [#allocation4], %s404
        %s406 = sand.u32 %s64, 1
        %s407 = smul.addr %s406, 2
        %s408 = scalar_lea.vmem [#allocation3], %s407
        // Predicated region
        $region69: #{tpu_custom_call.1} parent=67 // pred_check
          %p409 = pneg %p77
        $region70: #{tpu_custom_call.1} parent=67 // pred_check_branch
          %411 = sbr.rel (%p409) target = $region72
        $region71: #{tpu_custom_call.1} parent=67 // pred_region
          %412 = dma.done %s405, 32
        $region72: #{tpu_custom_call.1} parent=67 // pred_fallthru
          _
        // Predicated region
        $region73: #{tpu_custom_call.1} parent=67 // pred_check
          %p413 = pneg %p224
        $region74: #{tpu_custom_call.1} parent=67 // pred_check_branch
          %415 = sbr.rel (%p413) target = $region76
        $region75: #{tpu_custom_call.1} parent=67 // pred_region
          %416 = dma.done [#allocation7], 256
        $region76: #{tpu_custom_call.1} parent=67 // pred_fallthru
          _
        %p417 = scmp.lt.s32.totalorder %s30, 1
        %s418 = scalar_select %p417, %s30, 1
        %s419 = smul.addr %s418, 8
        %s420 = scalar_lea.vmem %s0, %s419
        %p421 = pneg %p51
        %p422 = pneg %p48
        %s423 = sand.u32 %s64, 1
        %s424 = scalar_lea.sflag [#allocation4], %s423
        %s425 = sand.u32 %s64, 1
        %s426 = smul.addr %s425, 2
        %s427 = scalar_lea.vmem [#allocation3], %s426
        %p428 = pneg %p77
        %p429 = pneg %p74
        %p430 = pneg %p98
        %p431 = pneg %p95
        %p432 = pneg %p119
        %p433 = pneg %p116
        %p434 = pneg %p140
        %p435 = pneg %p137
        %p436 = pneg %p161
        %p437 = pneg %p158
        %p438 = pneg %p182
        %p439 = pneg %p179
        %p440 = pneg %p203
        %p441 = pneg %p200
        %p442 = pneg %p224
        %p443 = pneg %p221
        %p444 = pneg %p245
        %p445 = pneg %p242
        %p446 = pneg %p266
        %p447 = pneg %p263
        %p448 = pneg %p287
        %p449 = pneg %p284
        %p450 = pneg %p313
        %p451 = pneg %p310
        %s452 = sand.u32 %s300, 1
        %s453 = scalar_lea.sflag [#allocation5], %s452
        %s454 = sand.u32 %s300, 1
        %s455 = smul.addr %s454, 8
        %s456 = scalar_lea.vmem [#allocation8], %s455
        %p457 = scmp.lt.s32.totalorder %s30, 1
        %s458 = scalar_select %p457, %s30, 1
        %s459 = smul.addr %s458, 8
        %s460 = scalar_lea.vmem %s0, %s459
        %v464 = vld [vmem:[%s460] sm:$0xff]
        %v465 = vpack.c.bf16 %v464, %v464
        %v466 = vld [vmem:[%s2] sm:$0xf]
        %v467 = vld [vmem:[%s2 + $0x4] sm:$0xf]
        %v468 = vld [vmem:[%s2 + $0x8] sm:$0xf]
        %v469 = vld [vmem:[%s2 + $0xc] sm:$0xf]
        %v470 = vld [vmem:[%s3] sm:$0x1]
        %v472 = vlaneseq
        %v473 = vshrl.u32 %v472, 7
        %v474 = vsub.s32 0, %v473
        %v475 = vrot.slane %v470, %v474
        %v481 = vunpack.c.l.b16 %v466
        %v482 = vunpack.c.l.b16 %v467
        %v483 = vunpack.c.l.b16 %v468
        %v484 = vunpack.c.l.b16 %v469
        %v485 = vpack.c.b16 %v482, %v481
        %v486 = vpack.c.b16 %v484, %v483
        %vm489 = vcmask 261120
        %v491 = vsel %vm489, %v465, 0
        %493 = vmatprep.subr.bf16.mxu0 0
        %494 = vmatpush1.bf16.msra.mxu0 %v485
        %495 = vmatprep.subr.bf16.mxu0 0
        %496 = vmatpush1.bf16.msra.mxu0 %v486
        %497 = vmatprep.subr.bf16.mxu0 0
        %498 = vmatpush1.bf16.msra.mxu0 0
        %499 = vmatprep.subr.bf16.mxu0 0
        %500 = vmatpush1.bf16.msra.mxu0 0
        %501 = vmatprep.subr.bf16.mxu0 0
        %502 = vmatpush1.bf16.msra.mxu0 0
        %503 = vmatprep.subr.bf16.mxu0 0
        %504 = vmatpush1.bf16.msra.mxu0 0
        %505 = vmatprep.subr.bf16.mxu0 0
        %506 = vmatpush1.bf16.msra.mxu0 0
        %507 = vmatprep.subr.bf16.mxu0 0
        %508 = vmatpush1.bf16.msra.mxu0 0
        %509 = vmatprep.subr.bf16.mxu0 0
        %510 = vmatpush1.bf16.msra.mxu0 0
        %511 = vmatprep.subr.bf16.mxu0 0
        %512 = vmatpush1.bf16.msra.mxu0 0
        %513 = vmatprep.subr.bf16.mxu0 0
        %514 = vmatpush1.bf16.msra.mxu0 0
        %515 = vmatprep.subr.bf16.mxu0 0
        %516 = vmatpush1.bf16.msra.mxu0 0
        %517 = vmatprep.subr.bf16.mxu0 0
        %518 = vmatpush1.bf16.msra.mxu0 0
        %519 = vmatprep.subr.bf16.mxu0 0
        %520 = vmatpush1.bf16.msra.mxu0 0
        %521 = vmatprep.subr.bf16.mxu0 0
        %522 = vmatpush1.bf16.msra.mxu0 0
        %523 = vmatprep.subr.bf16.mxu0 0
        %524 = vmatpush1.bf16.msra.mxu0 0
        %525 = vmatprep.mubr.bf16.mxu0 0
        %526 = vmatmul.mubr.bf16.gmra.mrb[0].mxu0 %v491
        %v527 = vpop.f32.mrb[0].mxu0
        %v528 = vadd.f32 %v475, %v527
        %v529 = vpop.f32.mrb[0].mxu0
        %v530 = vpop.f32.mrb[0].mxu0
        %v531 = vpop.f32.mrb[0].mxu0
        %532 = vdwg.mxu0
        %v533 = vmul.f32 %v528, 0.35355338
        %v534 = vpack.c.bf16 %v533, %v533
        %v535 = vpack.c.bf16 %v528, %v528
        %v536 = vld [vmem:[%s408] sm:$0x3]
        %vm537 = vnez %v536
        %539 = vrot.lane.b32.xlu0 %v535, 96
        %v540 = vpop.permute.xlu0 %539
        %vm541 = vcmask 64512
        %v543 = vsel %vm541, %v534, 0
        %v546 = vsel %vm541, %v540, 0
        %548 = vmatprep.subr.bf16.mxu0 0
        %549 = vmatpush1.bf16.xpose.msra.mxu0 %v546
        %550 = vmatprep.subr.bf16.mxu0 0
        %551 = vmatpush1.bf16.xpose.msra.mxu0 0
        %552 = vmatprep.subr.bf16.mxu0 0
        %553 = vmatpush1.bf16.xpose.msra.mxu0 0
        %554 = vmatprep.subr.bf16.mxu0 0
        %555 = vmatpush1.bf16.xpose.msra.mxu0 0
        %556 = vmatprep.subr.bf16.mxu0 0
        %557 = vmatpush1.bf16.xpose.msra.mxu0 0
        %558 = vmatprep.subr.bf16.mxu0 0
        %559 = vmatpush1.bf16.xpose.msra.mxu0 0
        %560 = vmatprep.subr.bf16.mxu0 0
        %561 = vmatpush1.bf16.xpose.msra.mxu0 0
        %562 = vmatprep.subr.bf16.mxu0 0
        %563 = vmatpush1.bf16.xpose.msra.mxu0 0
        %564 = vmatprep.subr.bf16.mxu0 0
        %565 = vmatpush1.bf16.xpose.msra.mxu0 0
        %566 = vmatprep.subr.bf16.mxu0 0
        %567 = vmatpush1.bf16.xpose.msra.mxu0 0
        %568 = vmatprep.subr.bf16.mxu0 0
        %569 = vmatpush1.bf16.xpose.msra.mxu0 0
        %570 = vmatprep.subr.bf16.mxu0 0
        %571 = vmatpush1.bf16.xpose.msra.mxu0 0
        %572 = vmatprep.subr.bf16.mxu0 0
        %573 = vmatpush1.bf16.xpose.msra.mxu0 0
        %574 = vmatprep.subr.bf16.mxu0 0
        %575 = vmatpush1.bf16.xpose.msra.mxu0 0
        %576 = vmatprep.subr.bf16.mxu0 0
        %577 = vmatpush1.bf16.xpose.msra.mxu0 0
        %578 = vmatprep.subr.bf16.mxu0 0
        %579 = vmatpush1.bf16.xpose.msra.mxu0 0
        %580 = vmatprep.mubr.bf16.mxu0 0
        %581 = vmatmul.mubr.bf16.gmra.mrb[0].mxu0 %v543
        %v582 = vpop.f32.mrb[0].mxu0
        %v583 = vadd.f32 0.0, %v582
        %v584 = vpop.f32.mrb[0].mxu0
        %v585 = vpop.f32.mrb[0].mxu0
        %v586 = vpop.f32.mrb[0].mxu0
        %587 = vdwg.mxu0
        %v588 = vsel %vm537, 16843009, 0
        %v589 = vunpack.c.0.s8 %v588
        %vm590 = vcmp.ne.s32.totalorder %v589, 0
        %v591 = vsel %vm590, -1e+09, %v583
        %v592 = vsel %vm541, %v591, -inf
        %593 = vmax.xlane.f32.xlu0 %v592
        %v594 = vpop.xlane.xlu0 %593
        %v595 = vsub.f32 %v591, %v594
        %v596 = vmul.f32 %v595, 1.442695
        %v597 = vpow.pop %v596
        %v598 = vsel %vm541, %v597, 0.0
        %599 = vadd.xlane.f32.xlu0 %v598
        %v600 = vpop.xlane.xlu0 %599
        %v601 = vrcp.pop %v600
        %v602 = vmul.f32 %v597, %v601
        %v603 = vpack.c.bf16 %v602, %v602
        %604 = vrot.lane.b32.xlu0 %v535, 64
        %v605 = vpop.permute.xlu0 %604
        %v607 = vsel %vm541, %v603, 0
        %vm609 = vcmask 1043456
        %v611 = vsel %vm609, %v605, 0
        %613 = vmatprep.subr.bf16.mxu0 0
        %614 = vmatpush1.bf16.msra.mxu0 %v611
        %615 = vmatprep.subr.bf16.mxu0 0
        %616 = vmatpush1.bf16.msra.mxu0 0
        %617 = vmatprep.subr.bf16.mxu0 0
        %618 = vmatpush1.bf16.msra.mxu0 0
        %619 = vmatprep.subr.bf16.mxu0 0
        %620 = vmatpush1.bf16.msra.mxu0 0
        %621 = vmatprep.subr.bf16.mxu0 0
        %622 = vmatpush1.bf16.msra.mxu0 0
        %623 = vmatprep.subr.bf16.mxu0 0
        %624 = vmatpush1.bf16.msra.mxu0 0
        %625 = vmatprep.subr.bf16.mxu0 0
        %626 = vmatpush1.bf16.msra.mxu0 0
        %627 = vmatprep.subr.bf16.mxu0 0
        %628 = vmatpush1.bf16.msra.mxu0 0
        %629 = vmatprep.subr.bf16.mxu0 0
        %630 = vmatpush1.bf16.msra.mxu0 0
        %631 = vmatprep.subr.bf16.mxu0 0
        %632 = vmatpush1.bf16.msra.mxu0 0
        %633 = vmatprep.subr.bf16.mxu0 0
        %634 = vmatpush1.bf16.msra.mxu0 0
        %635 = vmatprep.subr.bf16.mxu0 0
        %636 = vmatpush1.bf16.msra.mxu0 0
        %637 = vmatprep.subr.bf16.mxu0 0
        %638 = vmatpush1.bf16.msra.mxu0 0
        %639 = vmatprep.subr.bf16.mxu0 0
        %640 = vmatpush1.bf16.msra.mxu0 0
        %641 = vmatprep.subr.bf16.mxu0 0
        %642 = vmatpush1.bf16.msra.mxu0 0
        %643 = vmatprep.subr.bf16.mxu0 0
        %644 = vmatpush1.bf16.msra.mxu0 0
        %645 = vmatprep.mubr.bf16.mxu0 0
        %646 = vmatmul.mubr.bf16.gmra.mrb[0].mxu0 %v607
        %v647 = vpop.f32.mrb[0].mxu0
        %v648 = vadd.f32 0.0, %v647
        %v649 = vpop.f32.mrb[0].mxu0
        %v650 = vpop.f32.mrb[0].mxu0
        %v651 = vpop.f32.mrb[0].mxu0
        %652 = vdwg.mxu0
        %653 = vst.msk [vmem:[#allocation2] sm:$0xff] %vm541, %v648
        %655 = vrot.lane.b32.xlu0 %v534, 120
        %v656 = vpop.permute.xlu0 %655
        %657 = vrot.lane.b32.xlu0 %v535, 88
        %v658 = vpop.permute.xlu0 %657
        %v660 = vsel %vm541, %v656, 0
        %v663 = vsel %vm541, %v658, 0
        %665 = vmatprep.subr.bf16.mxu0 0
        %666 = vmatpush1.bf16.xpose.msra.mxu0 %v663
        %667 = vmatprep.subr.bf16.mxu0 0
        %668 = vmatpush1.bf16.xpose.msra.mxu0 0
        %669 = vmatprep.subr.bf16.mxu0 0
        %670 = vmatpush1.bf16.xpose.msra.mxu0 0
        %671 = vmatprep.subr.bf16.mxu0 0
        %672 = vmatpush1.bf16.xpose.msra.mxu0 0
        %673 = vmatprep.subr.bf16.mxu0 0
        %674 = vmatpush1.bf16.xpose.msra.mxu0 0
        %675 = vmatprep.subr.bf16.mxu0 0
        %676 = vmatpush1.bf16.xpose.msra.mxu0 0
        %677 = vmatprep.subr.bf16.mxu0 0
        %678 = vmatpush1.bf16.xpose.msra.mxu0 0
        %679 = vmatprep.subr.bf16.mxu0 0
        %680 = vmatpush1.bf16.xpose.msra.mxu0 0
        %681 = vmatprep.subr.bf16.mxu0 0
        %682 = vmatpush1.bf16.xpose.msra.mxu0 0
        %683 = vmatprep.subr.bf16.mxu0 0
        %684 = vmatpush1.bf16.xpose.msra.mxu0 0
        %685 = vmatprep.subr.bf16.mxu0 0
        %686 = vmatpush1.bf16.xpose.msra.mxu0 0
        %687 = vmatprep.subr.bf16.mxu0 0
        %688 = vmatpush1.bf16.xpose.msra.mxu0 0
        %689 = vmatprep.subr.bf16.mxu0 0
        %690 = vmatpush1.bf16.xpose.msra.mxu0 0
        %691 = vmatprep.subr.bf16.mxu0 0
        %692 = vmatpush1.bf16.xpose.msra.mxu0 0
        %693 = vmatprep.subr.bf16.mxu0 0
        %694 = vmatpush1.bf16.xpose.msra.mxu0 0
        %695 = vmatprep.subr.bf16.mxu0 0
        %696 = vmatpush1.bf16.xpose.msra.mxu0 0
        %697 = vmatprep.mubr.bf16.mxu0 0
        %698 = vmatmul.mubr.bf16.gmra.mrb[0].mxu0 %v660
        %v699 = vpop.f32.mrb[0].mxu0
        %v700 = vadd.f32 0.0, %v699
        %v701 = vpop.f32.mrb[0].mxu0
        %v702 = vpop.f32.mrb[0].mxu0
        %v703 = vpop.f32.mrb[0].mxu0
        %704 = vdwg.mxu0
        %v705 = vsel %vm590, -1e+09, %v700
        %v706 = vsel %vm541, %v705, -inf
        %707 = vmax.xlane.f32.xlu0 %v706
        %v708 = vpop.xlane.xlu0 %707
        %v709 = vsub.f32 %v705, %v708
        %v710 = vmul.f32 %v709, 1.442695
        %v711 = vpow.pop %v710
        %v712 = vsel %vm541, %v711, 0.0
        %713 = vadd.xlane.f32.xlu0 %v712
        %v714 = vpop.xlane.xlu0 %713
        %v715 = vrcp.pop %v714
        %v716 = vmul.f32 %v711, %v715
        %v717 = vpack.c.bf16 %v716, %v716
        %718 = vrot.lane.b32.xlu0 %v535, 56
        %v719 = vpop.permute.xlu0 %718
        %v721 = vsel %vm541, %v717, 0
        %v724 = vsel %vm609, %v719, 0
        %726 = vmatprep.subr.bf16.mxu0 0
        %727 = vmatpush1.bf16.msra.mxu0 %v724
        %728 = vmatprep.subr.bf16.mxu0 0
        %729 = vmatpush1.bf16.msra.mxu0 0
        %730 = vmatprep.subr.bf16.mxu0 0
        %731 = vmatpush1.bf16.msra.mxu0 0
        %732 = vmatprep.subr.bf16.mxu0 0
        %733 = vmatpush1.bf16.msra.mxu0 0
        %734 = vmatprep.subr.bf16.mxu0 0
        %735 = vmatpush1.bf16.msra.mxu0 0
        %736 = vmatprep.subr.bf16.mxu0 0
        %737 = vmatpush1.bf16.msra.mxu0 0
        %738 = vmatprep.subr.bf16.mxu0 0
        %739 = vmatpush1.bf16.msra.mxu0 0
        %740 = vmatprep.subr.bf16.mxu0 0
        %741 = vmatpush1.bf16.msra.mxu0 0
        %742 = vmatprep.subr.bf16.mxu0 0
        %743 = vmatpush1.bf16.msra.mxu0 0
        %744 = vmatprep.subr.bf16.mxu0 0
        %745 = vmatpush1.bf16.msra.mxu0 0
        %746 = vmatprep.subr.bf16.mxu0 0
        %747 = vmatpush1.bf16.msra.mxu0 0
        %748 = vmatprep.subr.bf16.mxu0 0
        %749 = vmatpush1.bf16.msra.mxu0 0
        %750 = vmatprep.subr.bf16.mxu0 0
        %751 = vmatpush1.bf16.msra.mxu0 0
        %752 = vmatprep.subr.bf16.mxu0 0
        %753 = vmatpush1.bf16.msra.mxu0 0
        %754 = vmatprep.subr.bf16.mxu0 0
        %755 = vmatpush1.bf16.msra.mxu0 0
        %756 = vmatprep.subr.bf16.mxu0 0
        %757 = vmatpush1.bf16.msra.mxu0 0
        %758 = vmatprep.mubr.bf16.mxu0 0
        %759 = vmatmul.mubr.bf16.gmra.mrb[0].mxu0 %v721
        %v760 = vpop.f32.mrb[0].mxu0
        %v761 = vadd.f32 0.0, %v760
        %v762 = vpop.f32.mrb[0].mxu0
        %v763 = vpop.f32.mrb[0].mxu0
        %v764 = vpop.f32.mrb[0].mxu0
        %765 = vdwg.mxu0
        %767 = vrot.lane.b32.xlu0 %v761, 8
        %v768 = vpop.permute.xlu0 %767
        %vm770 = vcmask 130112
        %771 = vst.msk [vmem:[#allocation2] sm:$0xff] %vm770, %v768
        %772 = vrot.lane.b32.xlu0 %v534, 112
        %v773 = vpop.permute.xlu0 %772
        %774 = vrot.lane.b32.xlu0 %v535, 80
        %v775 = vpop.permute.xlu0 %774
        %v777 = vsel %vm541, %v773, 0
        %v780 = vsel %vm541, %v775, 0
        %782 = vmatprep.subr.bf16.mxu0 0
        %783 = vmatpush1.bf16.xpose.msra.mxu0 %v780
        %784 = vmatprep.subr.bf16.mxu0 0
        %785 = vmatpush1.bf16.xpose.msra.mxu0 0
        %786 = vmatprep.subr.bf16.mxu0 0
        %787 = vmatpush1.bf16.xpose.msra.mxu0 0
        %788 = vmatprep.subr.bf16.mxu0 0
        %789 = vmatpush1.bf16.xpose.msra.mxu0 0
        %790 = vmatprep.subr.bf16.mxu0 0
        %791 = vmatpush1.bf16.xpose.msra.mxu0 0
        %792 = vmatprep.subr.bf16.mxu0 0
        %793 = vmatpush1.bf16.xpose.msra.mxu0 0
        %794 = vmatprep.subr.bf16.mxu0 0
        %795 = vmatpush1.bf16.xpose.msra.mxu0 0
        %796 = vmatprep.subr.bf16.mxu0 0
        %797 = vmatpush1.bf16.xpose.msra.mxu0 0
        %798 = vmatprep.subr.bf16.mxu0 0
        %799 = vmatpush1.bf16.xpose.msra.mxu0 0
        %800 = vmatprep.subr.bf16.mxu0 0
        %801 = vmatpush1.bf16.xpose.msra.mxu0 0
        %802 = vmatprep.subr.bf16.mxu0 0
        %803 = vmatpush1.bf16.xpose.msra.mxu0 0
        %804 = vmatprep.subr.bf16.mxu0 0
        %805 = vmatpush1.bf16.xpose.msra.mxu0 0
        %806 = vmatprep.subr.bf16.mxu0 0
        %807 = vmatpush1.bf16.xpose.msra.mxu0 0
        %808 = vmatprep.subr.bf16.mxu0 0
        %809 = vmatpush1.bf16.xpose.msra.mxu0 0
        %810 = vmatprep.subr.bf16.mxu0 0
        %811 = vmatpush1.bf16.xpose.msra.mxu0 0
        %812 = vmatprep.subr.bf16.mxu0 0
        %813 = vmatpush1.bf16.xpose.msra.mxu0 0
        %814 = vmatprep.mubr.bf16.mxu0 0
        %815 = vmatmul.mubr.bf16.gmra.mrb[0].mxu0 %v777
        %v816 = vpop.f32.mrb[0].mxu0
        %v817 = vadd.f32 0.0, %v816
        %v818 = vpop.f32.mrb[0].mxu0
        %v819 = vpop.f32.mrb[0].mxu0
        %v820 = vpop.f32.mrb[0].mxu0
        %821 = vdwg.mxu0
        %v822 = vsel %vm590, -1e+09, %v817
        %v823 = vsel %vm541, %v822, -inf
        %824 = vmax.xlane.f32.xlu0 %v823
        %v825 = vpop.xlane.xlu0 %824
        %v826 = vsub.f32 %v822, %v825
        %v827 = vmul.f32 %v826, 1.442695
        %v828 = vpow.pop %v827
        %v829 = vsel %vm541, %v828, 0.0
        %830 = vadd.xlane.f32.xlu0 %v829
        %v831 = vpop.xlane.xlu0 %830
        %v832 = vrcp.pop %v831
        %v833 = vmul.f32 %v828, %v832
        %v834 = vpack.c.bf16 %v833, %v833
        %835 = vrot.lane.b32.xlu0 %v535, 48
        %v836 = vpop.permute.xlu0 %835
        %v838 = vsel %vm541, %v834, 0
        %v841 = vsel %vm609, %v836, 0
        %843 = vmatprep.subr.bf16.mxu0 0
        %844 = vmatpush1.bf16.msra.mxu0 %v841
        %845 = vmatprep.subr.bf16.mxu0 0
        %846 = vmatpush1.bf16.msra.mxu0 0
        %847 = vmatprep.subr.bf16.mxu0 0
        %848 = vmatpush1.bf16.msra.mxu0 0
        %849 = vmatprep.subr.bf16.mxu0 0
        %850 = vmatpush1.bf16.msra.mxu0 0
        %851 = vmatprep.subr.bf16.mxu0 0
        %852 = vmatpush1.bf16.msra.mxu0 0
        %853 = vmatprep.subr.bf16.mxu0 0
        %854 = vmatpush1.bf16.msra.mxu0 0
        %855 = vmatprep.subr.bf16.mxu0 0
        %856 = vmatpush1.bf16.msra.mxu0 0
        %857 = vmatprep.subr.bf16.mxu0 0
        %858 = vmatpush1.bf16.msra.mxu0 0
        %859 = vmatprep.subr.bf16.mxu0 0
        %860 = vmatpush1.bf16.msra.mxu0 0
        %861 = vmatprep.subr.bf16.mxu0 0
        %862 = vmatpush1.bf16.msra.mxu0 0
        %863 = vmatprep.subr.bf16.mxu0 0
        %864 = vmatpush1.bf16.msra.mxu0 0
        %865 = vmatprep.subr.bf16.mxu0 0
        %866 = vmatpush1.bf16.msra.mxu0 0
        %867 = vmatprep.subr.bf16.mxu0 0
        %868 = vmatpush1.bf16.msra.mxu0 0
        %869 = vmatprep.subr.bf16.mxu0 0
        %870 = vmatpush1.bf16.msra.mxu0 0
        %871 = vmatprep.subr.bf16.mxu0 0
        %872 = vmatpush1.bf16.msra.mxu0 0
        %873 = vmatprep.subr.bf16.mxu0 0
        %874 = vmatpush1.bf16.msra.mxu0 0
        %875 = vmatprep.mubr.bf16.mxu0 0
        %876 = vmatmul.mubr.bf16.gmra.mrb[0].mxu0 %v838
        %v877 = vpop.f32.mrb[0].mxu0
        %v878 = vadd.f32 0.0, %v877
        %v879 = vpop.f32.mrb[0].mxu0
        %v880 = vpop.f32.mrb[0].mxu0
        %v881 = vpop.f32.mrb[0].mxu0
        %882 = vdwg.mxu0
        %884 = vrot.lane.b32.xlu0 %v878, 16
        %v885 = vpop.permute.xlu0 %884
        %vm887 = vcmask 195712
        %888 = vst.msk [vmem:[#allocation2] sm:$0xff] %vm887, %v885
        %889 = vrot.lane.b32.xlu0 %v534, 104
        %v890 = vpop.permute.xlu0 %889
        %891 = vrot.lane.b32.xlu0 %v535, 72
        %v892 = vpop.permute.xlu0 %891
        %v894 = vsel %vm541, %v890, 0
        %v897 = vsel %vm541, %v892, 0
        %899 = vmatprep.subr.bf16.mxu0 0
        %900 = vmatpush1.bf16.xpose.msra.mxu0 %v897
        %901 = vmatprep.subr.bf16.mxu0 0
        %902 = vmatpush1.bf16.xpose.msra.mxu0 0
        %903 = vmatprep.subr.bf16.mxu0 0
        %904 = vmatpush1.bf16.xpose.msra.mxu0 0
        %905 = vmatprep.subr.bf16.mxu0 0
        %906 = vmatpush1.bf16.xpose.msra.mxu0 0
        %907 = vmatprep.subr.bf16.mxu0 0
        %908 = vmatpush1.bf16.xpose.msra.mxu0 0
        %909 = vmatprep.subr.bf16.mxu0 0
        %910 = vmatpush1.bf16.xpose.msra.mxu0 0
        %911 = vmatprep.subr.bf16.mxu0 0
        %912 = vmatpush1.bf16.xpose.msra.mxu0 0
        %913 = vmatprep.subr.bf16.mxu0 0
        %914 = vmatpush1.bf16.xpose.msra.mxu0 0
        %915 = vmatprep.subr.bf16.mxu0 0
        %916 = vmatpush1.bf16.xpose.msra.mxu0 0
        %917 = vmatprep.subr.bf16.mxu0 0
        %918 = vmatpush1.bf16.xpose.msra.mxu0 0
        %919 = vmatprep.subr.bf16.mxu0 0
        %920 = vmatpush1.bf16.xpose.msra.mxu0 0
        %921 = vmatprep.subr.bf16.mxu0 0
        %922 = vmatpush1.bf16.xpose.msra.mxu0 0
        %923 = vmatprep.subr.bf16.mxu0 0
        %924 = vmatpush1.bf16.xpose.msra.mxu0 0
        %925 = vmatprep.subr.bf16.mxu0 0
        %926 = vmatpush1.bf16.xpose.msra.mxu0 0
        %927 = vmatprep.subr.bf16.mxu0 0
        %928 = vmatpush1.bf16.xpose.msra.mxu0 0
        %929 = vmatprep.subr.bf16.mxu0 0
        %930 = vmatpush1.bf16.xpose.msra.mxu0 0
        %931 = vmatprep.mubr.bf16.mxu0 0
        %932 = vmatmul.mubr.bf16.gmra.mrb[0].mxu0 %v894
        %v933 = vpop.f32.mrb[0].mxu0
        %v934 = vadd.f32 0.0, %v933
        %v935 = vpop.f32.mrb[0].mxu0
        %v936 = vpop.f32.mrb[0].mxu0
        %v937 = vpop.f32.mrb[0].mxu0
        %938 = vdwg.mxu0
        %v939 = vsel %vm590, -1e+09, %v934
        %v940 = vsel %vm541, %v939, -inf
        %941 = vmax.xlane.f32.xlu0 %v940
        %v942 = vpop.xlane.xlu0 %941
        %v943 = vsub.f32 %v939, %v942
        %v944 = vmul.f32 %v943, 1.442695
        %v945 = vpow.pop %v944
        %v946 = vsel %vm541, %v945, 0.0
        %947 = vadd.xlane.f32.xlu0 %v946
        %v948 = vpop.xlane.xlu0 %947
        %v949 = vrcp.pop %v948
        %v950 = vmul.f32 %v945, %v949
        %v951 = vpack.c.bf16 %v950, %v950
        %952 = vrot.lane.b32.xlu0 %v535, 40
        %v953 = vpop.permute.xlu0 %952
        %v955 = vsel %vm541, %v951, 0
        %v958 = vsel %vm609, %v953, 0
        %960 = vmatprep.subr.bf16.mxu0 0
        %961 = vmatpush1.bf16.msra.mxu0 %v958
        %962 = vmatprep.subr.bf16.mxu0 0
        %963 = vmatpush1.bf16.msra.mxu0 0
        %964 = vmatprep.subr.bf16.mxu0 0
        %965 = vmatpush1.bf16.msra.mxu0 0
        %966 = vmatprep.subr.bf16.mxu0 0
        %967 = vmatpush1.bf16.msra.mxu0 0
        %968 = vmatprep.subr.bf16.mxu0 0
        %969 = vmatpush1.bf16.msra.mxu0 0
        %970 = vmatprep.subr.bf16.mxu0 0
        %971 = vmatpush1.bf16.msra.mxu0 0
        %972 = vmatprep.subr.bf16.mxu0 0
        %973 = vmatpush1.bf16.msra.mxu0 0
        %974 = vmatprep.subr.bf16.mxu0 0
        %975 = vmatpush1.bf16.msra.mxu0 0
        %976 = vmatprep.subr.bf16.mxu0 0
        %977 = vmatpush1.bf16.msra.mxu0 0
        %978 = vmatprep.subr.bf16.mxu0 0
        %979 = vmatpush1.bf16.msra.mxu0 0
        %980 = vmatprep.subr.bf16.mxu0 0
        %981 = vmatpush1.bf16.msra.mxu0 0
        %982 = vmatprep.subr.bf16.mxu0 0
        %983 = vmatpush1.bf16.msra.mxu0 0
        %984 = vmatprep.subr.bf16.mxu0 0
        %985 = vmatpush1.bf16.msra.mxu0 0
        %986 = vmatprep.subr.bf16.mxu0 0
        %987 = vmatpush1.bf16.msra.mxu0 0
        %988 = vmatprep.subr.bf16.mxu0 0
        %989 = vmatpush1.bf16.msra.mxu0 0
        %990 = vmatprep.subr.bf16.mxu0 0
        %991 = vmatpush1.bf16.msra.mxu0 0
        %992 = vmatprep.mubr.bf16.mxu0 0
        %993 = vmatmul.mubr.bf16.gmra.mrb[0].mxu0 %v955
        %v994 = vpop.f32.mrb[0].mxu0
        %v995 = vadd.f32 0.0, %v994
        %v996 = vpop.f32.mrb[0].mxu0
        %v997 = vpop.f32.mrb[0].mxu0
        %v998 = vpop.f32.mrb[0].mxu0
        %999 = vdwg.mxu0
        %1001 = vrot.lane.b32.xlu0 %v995, 24
        %v1002 = vpop.permute.xlu0 %1001
        %vm1004 = vcmask 261312
        %1005 = vst.msk [vmem:[#allocation2] sm:$0xff] %vm1004, %v1002
        %v1006 = vld [vmem:[#allocation2] sm:$0xff]
        %v1007 = vpack.c.bf16 %v1006, %v1006
        %v1008 = vld [vmem:[%s4] sm:$0xf]
        %v1009 = vld [vmem:[%s4 + $0x4] sm:$0xf]
        %v1010 = vld [vmem:[%s4 + $0x8] sm:$0xf]
        %v1011 = vld [vmem:[%s4 + $0xc] sm:$0xf]
        %v1012 = vld [vmem:[%s5] sm:$0x1]
        %v1014 = vlaneseq
        %v1015 = vshrl.u32 %v1014, 7
        %v1016 = vsub.s32 0, %v1015
        %v1017 = vrot.slane %v1012, %v1016
        %v1023 = vunpack.c.l.b16 %v1008
        %v1024 = vunpack.c.l.b16 %v1009
        %v1025 = vunpack.c.l.b16 %v1010
        %v1026 = vunpack.c.l.b16 %v1011
        %v1027 = vpack.c.b16 %v1024, %v1023
        %v1028 = vpack.c.b16 %v1026, %v1025
        %v1032 = vsel %vm489, %v1007, 0
        %1034 = vmatprep.subr.bf16.mxu0 0
        %1035 = vmatpush1.bf16.msra.mxu0 %v1027
        %1036 = vmatprep.subr.bf16.mxu0 0
        %1037 = vmatpush1.bf16.msra.mxu0 %v1028
        %1038 = vmatprep.subr.bf16.mxu0 0
        %1039 = vmatpush1.bf16.msra.mxu0 0
        %1040 = vmatprep.subr.bf16.mxu0 0
        %1041 = vmatpush1.bf16.msra.mxu0 0
        %1042 = vmatprep.subr.bf16.mxu0 0
        %1043 = vmatpush1.bf16.msra.mxu0 0
        %1044 = vmatprep.subr.bf16.mxu0 0
        %1045 = vmatpush1.bf16.msra.mxu0 0
        %1046 = vmatprep.subr.bf16.mxu0 0
        %1047 = vmatpush1.bf16.msra.mxu0 0
        %1048 = vmatprep.subr.bf16.mxu0 0
        %1049 = vmatpush1.bf16.msra.mxu0 0
        %1050 = vmatprep.subr.bf16.mxu0 0
        %1051 = vmatpush1.bf16.msra.mxu0 0
        %1052 = vmatprep.subr.bf16.mxu0 0
        %1053 = vmatpush1.bf16.msra.mxu0 0
        %1054 = vmatprep.subr.bf16.mxu0 0
        %1055 = vmatpush1.bf16.msra.mxu0 0
        %1056 = vmatprep.subr.bf16.mxu0 0
        %1057 = vmatpush1.bf16.msra.mxu0 0
        %1058 = vmatprep.subr.bf16.mxu0 0
        %1059 = vmatpush1.bf16.msra.mxu0 0
        %1060 = vmatprep.subr.bf16.mxu0 0
        %1061 = vmatpush1.bf16.msra.mxu0 0
        %1062 = vmatprep.subr.bf16.mxu0 0
        %1063 = vmatpush1.bf16.msra.mxu0 0
        %1064 = vmatprep.subr.bf16.mxu0 0
        %1065 = vmatpush1.bf16.msra.mxu0 0
        %1066 = vmatprep.mubr.bf16.mxu0 0
        %1067 = vmatmul.mubr.bf16.gmra.mrb[0].mxu0 %v1032
        %v1068 = vpop.f32.mrb[0].mxu0
        %v1069 = vadd.f32 %v1017, %v1068
        %v1070 = vpop.f32.mrb[0].mxu0
        %v1071 = vpop.f32.mrb[0].mxu0
        %v1072 = vpop.f32.mrb[0].mxu0
        %1073 = vdwg.mxu0
        %v1074 = vadd.f32 %v1069, %v464
        %v1075 = vsel %vm489, %v1074, 0.0
        %1076 = vadd.xlane.f32.xlu0 %v1075
        %v1077 = vpop.xlane.xlu0 %1076
        %v1078 = vrcp.pop 32.0
        %v1079 = vmul.f32 %v1077, %v1078
        %v1080 = vsub.f32 %v1074, %v1079
        %v1081 = vmul.f32 %v1080, %v1080
        %v1082 = vsel %vm489, %v1081, 0.0
        %1083 = vadd.xlane.f32.xlu0 %v1082
        %v1084 = vpop.xlane.xlu0 %1083
        %v1085 = vmul.f32 %v1084, %v1078
        %v1086 = vadd.f32 %v1085, 1e-05
        %v1087 = vrsqrt.pop %v1086
        %v1088 = vmul.f32 %v1080, %v1087
        %v1089 = vld [vmem:[%s6] sm:$0x1]
        %v1091 = vlaneseq
        %v1092 = vshrl.u32 %v1091, 7
        %v1093 = vsub.s32 0, %v1092
        %v1094 = vrot.slane %v1089, %v1093
        %v1096 = vmul.f32 %v1088, %v1094
        %v1097 = vld [vmem:[%s7] sm:$0x1]
        %v1099 = vlaneseq
        %v1100 = vshrl.u32 %v1099, 7
        %v1101 = vsub.s32 0, %v1100
        %v1102 = vrot.slane %v1097, %v1101
        %v1104 = vadd.f32 %v1096, %v1102
        %v1105 = vpack.c.bf16 %v1104, %v1104
        %v1106 = vld [vmem:[#allocation6] sm:$0xf]
        %v1107 = vld [vmem:[#allocation6 + $0x4] sm:$0xf]
        %v1108 = vld [vmem:[#allocation6 + $0x8] sm:$0xf]
        %v1109 = vld [vmem:[#allocation6 + $0xc] sm:$0xf]
        %v1110 = vld [vmem:[%s9] sm:$0x1]
        %v1112 = vlaneseq
        %v1113 = vshrl.u32 %v1112, 7
        %v1114 = vsub.s32 0, %v1113
        %v1115 = vrot.slane %v1110, %v1114
        %v1121 = vunpack.c.l.b16 %v1106
        %v1122 = vunpack.c.l.b16 %v1107
        %v1123 = vunpack.c.l.b16 %v1108
        %v1124 = vunpack.c.l.b16 %v1109
        %v1125 = vpack.c.b16 %v1122, %v1121
        %v1126 = vpack.c.b16 %v1124, %v1123
        %v1130 = vsel %vm489, %v1105, 0
        %1132 = vmatprep.subr.bf16.mxu0 0
        %1133 = vmatpush1.bf16.msra.mxu0 %v1125
        %1134 = vmatprep.subr.bf16.mxu0 0
        %1135 = vmatpush1.bf16.msra.mxu0 %v1126
        %1136 = vmatprep.subr.bf16.mxu0 0
        %1137 = vmatpush1.bf16.msra.mxu0 0
        %1138 = vmatprep.subr.bf16.mxu0 0
        %1139 = vmatpush1.bf16.msra.mxu0 0
        %1140 = vmatprep.subr.bf16.mxu0 0
        %1141 = vmatpush1.bf16.msra.mxu0 0
        %1142 = vmatprep.subr.bf16.mxu0 0
        %1143 = vmatpush1.bf16.msra.mxu0 0
        %1144 = vmatprep.subr.bf16.mxu0 0
        %1145 = vmatpush1.bf16.msra.mxu0 0
        %1146 = vmatprep.subr.bf16.mxu0 0
        %1147 = vmatpush1.bf16.msra.mxu0 0
        %1148 = vmatprep.subr.bf16.mxu0 0
        %1149 = vmatpush1.bf16.msra.mxu0 0
        %1150 = vmatprep.subr.bf16.mxu0 0
        %1151 = vmatpush1.bf16.msra.mxu0 0
        %1152 = vmatprep.subr.bf16.mxu0 0
        %1153 = vmatpush1.bf16.msra.mxu0 0
        %1154 = vmatprep.subr.bf16.mxu0 0
        %1155 = vmatpush1.bf16.msra.mxu0 0
        %1156 = vmatprep.subr.bf16.mxu0 0
        %1157 = vmatpush1.bf16.msra.mxu0 0
        %1158 = vmatprep.subr.bf16.mxu0 0
        %1159 = vmatpush1.bf16.msra.mxu0 0
        %1160 = vmatprep.subr.bf16.mxu0 0
        %1161 = vmatpush1.bf16.msra.mxu0 0
        %1162 = vmatprep.subr.bf16.mxu0 0
        %1163 = vmatpush1.bf16.msra.mxu0 0
        %1164 = vmatprep.mubr.bf16.mxu0 0
        %1165 = vmatmul.mubr.bf16.gmra.mrb[0].mxu0 %v1130
        %v1166 = vpop.f32.mrb[0].mxu0
        %v1167 = vadd.f32 %v1115, %v1166
        %v1168 = vpop.f32.mrb[0].mxu0
        %v1169 = vpop.f32.mrb[0].mxu0
        %v1170 = vpop.f32.mrb[0].mxu0
        %1171 = vdwg.mxu0
        %v1172 = vmul.f32 %v1167, 0.5
        %v1173 = vmul.f32 %v1167, 0.70710677
        %v1174 = verf.f32.pop %v1173
        %v1175 = vadd.f32 %v1174, 1.0
        %v1176 = vmul.f32 %v1172, %v1175
        %v1177 = vpack.c.bf16 %v1176, %v1176
        %v1178 = vld [vmem:[%s10] sm:$0xf]
        %v1179 = vld [vmem:[%s10 + $0x4] sm:$0xf]
        %v1180 = vld [vmem:[%s10 + $0x8] sm:$0xf]
        %v1181 = vld [vmem:[%s10 + $0xc] sm:$0xf]
        %v1182 = vld [vmem:[%s10 + $0x10] sm:$0xf]
        %v1183 = vld [vmem:[%s10 + $0x14] sm:$0xf]
        %v1184 = vld [vmem:[%s10 + $0x18] sm:$0xf]
        %v1185 = vld [vmem:[%s10 + $0x1c] sm:$0xf]
        %v1186 = vld [vmem:[%s11] sm:$0x1]
        %v1188 = vlaneseq
        %v1189 = vshrl.u32 %v1188, 7
        %v1190 = vsub.s32 0, %v1189
        %v1191 = vrot.slane %v1186, %v1190
        %v1201 = vunpack.c.l.b16 %v1178
        %v1202 = vunpack.c.l.b16 %v1179
        %v1203 = vunpack.c.l.b16 %v1180
        %v1204 = vunpack.c.l.b16 %v1181
        %v1205 = vunpack.c.l.b16 %v1182
        %v1206 = vunpack.c.l.b16 %v1183
        %v1207 = vunpack.c.l.b16 %v1184
        %v1208 = vunpack.c.l.b16 %v1185
        %v1209 = vpack.c.b16 %v1202, %v1201
        %v1210 = vpack.c.b16 %v1204, %v1203
        %v1211 = vpack.c.b16 %v1206, %v1205
        %v1212 = vpack.c.b16 %v1208, %v1207
        %vm1217 = vcmask 523264
        %v1219 = vsel %vm1217, %v1177, 0
        %1221 = vmatprep.subr.bf16.mxu0 0
        %1222 = vmatpush1.bf16.msra.mxu0 %v1209
        %1223 = vmatprep.subr.bf16.mxu0 0
        %1224 = vmatpush1.bf16.msra.mxu0 %v1210
        %1225 = vmatprep.subr.bf16.mxu0 0
        %1226 = vmatpush1.bf16.msra.mxu0 %v1211
        %1227 = vmatprep.subr.bf16.mxu0 0
        %1228 = vmatpush1.bf16.msra.mxu0 %v1212
        %1229 = vmatprep.subr.bf16.mxu0 0
        %1230 = vmatpush1.bf16.msra.mxu0 0
        %1231 = vmatprep.subr.bf16.mxu0 0
        %1232 = vmatpush1.bf16.msra.mxu0 0
        %1233 = vmatprep.subr.bf16.mxu0 0
        %1234 = vmatpush1.bf16.msra.mxu0 0
        %1235 = vmatprep.subr.bf16.mxu0 0
        %1236 = vmatpush1.bf16.msra.mxu0 0
        %1237 = vmatprep.subr.bf16.mxu0 0
        %1238 = vmatpush1.bf16.msra.mxu0 0
        %1239 = vmatprep.subr.bf16.mxu0 0
        %1240 = vmatpush1.bf16.msra.mxu0 0
        %1241 = vmatprep.subr.bf16.mxu0 0
        %1242 = vmatpush1.bf16.msra.mxu0 0
        %1243 = vmatprep.subr.bf16.mxu0 0
        %1244 = vmatpush1.bf16.msra.mxu0 0
        %1245 = vmatprep.subr.bf16.mxu0 0
        %1246 = vmatpush1.bf16.msra.mxu0 0
        %1247 = vmatprep.subr.bf16.mxu0 0
        %1248 = vmatpush1.bf16.msra.mxu0 0
        %1249 = vmatprep.subr.bf16.mxu0 0
        %1250 = vmatpush1.bf16.msra.mxu0 0
        %1251 = vmatprep.subr.bf16.mxu0 0
        %1252 = vmatpush1.bf16.msra.mxu0 0
        %1253 = vmatprep.mubr.bf16.mxu0 0
        %1254 = vmatmul.mubr.bf16.gmra.mrb[0].mxu0 %v1219
        %v1255 = vpop.f32.mrb[0].mxu0
        %v1256 = vadd.f32 %v1191, %v1255
        %v1257 = vpop.f32.mrb[0].mxu0
        %v1258 = vpop.f32.mrb[0].mxu0
        %v1259 = vpop.f32.mrb[0].mxu0
        %1260 = vdwg.mxu0
        %1261 = vst.msk [vmem:[%s456] sm:$0xff] %vm489, %v1256
        %s1262 = sand.u32 %s300, 1
        %s1263 = scalar_lea.sflag [#allocation5], %s1262
        %s1264 = sand.u32 %s300, 1
        %s1265 = smul.addr %s1264, 8
        %s1266 = scalar_lea.vmem [#allocation8], %s1265
        // Predicated region
        $region77: #{tpu_custom_call.1} parent=67 // pred_check
          %p1267 = pneg %p310
        $region78: #{tpu_custom_call.1} parent=67 // pred_check_branch
          %1269 = sbr.rel (%p1267) target = $region80
        $region79: #{tpu_custom_call.1} parent=67 // pred_region
          %s1271 = ssub.s32 128, 128
          %1272 = vsyncadd %s1263, %s1271
          %s1273 = smul.addr %s30, 128
          %s1274 = scalar_lea.hbm %s12, %s1273
          %s1276 = sshll.u32 %s1266, 4
          %s1277 = int_to_ptr.vmem [resolvable:$true] %s1276
          %1279 = dma.vmem_to_hbm [thread:$0]  %s1277, 128, %s1274, %s1263
        $region80: #{tpu_custom_call.1} parent=67 // pred_fallthru
          _
      $region68: #{tpu_custom_call.1} parent=5 // pred_fallthru
        _
      %p1280 = scmp.le.s32.totalorder 2, %s25
      // Predicated region
      $region81: #{tpu_custom_call.1} parent=5 // pred_check
        %p1281 = pneg %p1280
      $region82: #{tpu_custom_call.1} parent=5 // pred_check_branch
        %1283 = sbr.rel (%p1281) target = $region84
      $region83: #{tpu_custom_call.1} parent=5 // pred_region
        %s1284 = ssub.s32 %s25, 2
        // Predicated region
        $region85: #{tpu_custom_call.1} parent=83 // pred_check
          %p1285 = pneg %p316
        $region86: #{tpu_custom_call.1} parent=83 // pred_check_branch
          %1287 = sbr.rel (%p1285) target = $region88
        $region87: #{tpu_custom_call.1} parent=83 // pred_region
          %s1288 = sand.u32 %s301, 1
          %s1289 = scalar_lea.sflag [#allocation5], %s1288
          %s1290 = sand.u32 %s301, 1
          %s1291 = smul.addr %s1290, 8
          %s1292 = scalar_lea.vmem [#allocation8], %s1291
          %1293 = dma.done %s1289, 128
        $region88: #{tpu_custom_call.1} parent=83 // pred_fallthru
          _
      $region84: #{tpu_custom_call.1} parent=5 // pred_fallthru
        _
    $region6: #{tpu_custom_call.1} parent=1 // loop_footer
      %s29 = sadd.s32 1, %s25
    $region7: #{tpu_custom_call.1} parent=1 // loop_footer_branch
      %24 = sbr.rel target = $region3
    $region8: #{tpu_custom_call.1} parent=1 // loop_exit
      _
    %1294 = vsyncpa [#allocation4], 1
    %s1295 = scalar_lea.sflag [#allocation4], 1
    %1296 = vsyncpa %s1295, 1
    %1297 = vsyncpa [#allocation7], 1
    %1298 = vsyncpa [#allocation5], 1
    %s1299 = scalar_lea.sflag [#allocation5], 1
    %1300 = vsyncpa %s1299, 1

// kernel: tpu_custom_call.1
$region0: #{tpu_custom_call.1}
  #allocation0 [shape = 'u32[]', space=smem, size = 0x4, offset = 0x4, fixed_abs, tag = 'smem constant byte address 0x4 - core index']
  #allocation1 [shape = 'u32[144,128]{1,0:T(1,128)}', space=vmem, size = 0x12000, scoped, tag = 'internal scratch']
  #allocation2 [shape = 'f32[8,32]{1,0:T(8,128)}', space=vmem, size = 0x1000, scoped, tag = 'scratch operand']
  %s0 = inlined_call_operand.vmem [shape: f32[16,32], index: 0, kind: input, shape index: {}]
  %s1 = inlined_call_operand.hbm [shape: s8[2,8,8], index: 1, kind: input, shape index: {}]
  %s2 = inlined_call_operand.vmem [shape: bf16[32,96], index: 2, kind: input, shape index: {}]
  %s3 = inlined_call_operand.vmem [shape: f32[1,96], index: 3, kind: input, shape index: {}]
  %s4 = inlined_call_operand.vmem [shape: bf16[32,32], index: 4, kind: input, shape index: {}]
  %s5 = inlined_call_operand.vmem [shape: f32[1,32], index: 5, kind: input, shape index: {}]
  %s6 = inlined_call_operand.vmem [shape: f32[1,32], index: 6, kind: input, shape index: {}]
  %s7 = inlined_call_operand.vmem [shape: f32[1,32], index: 7, kind: input, shape index: {}]
  %s8 = inlined_call_operand.hbm [shape: bf16[32,64], index: 8, kind: input, shape index: {}]
  %s9 = inlined_call_operand.vmem [shape: f32[1,64], index: 9, kind: input, shape index: {}]
  %s10 = inlined_call_operand.vmem [shape: bf16[64,32], index: 10, kind: input, shape index: {}]
  %s11 = inlined_call_operand.vmem [shape: f32[1,32], index: 11, kind: input, shape index: {}]
  %s12 = inlined_call_operand.hbm [shape: f32[16,32], index: 12, kind: output, shape index: {}]
  %s13 = sld [smem:[#allocation0]]
  $region89: #{tpu_custom_call.1} parent=0
    _
  %s15 = ssub.s32 1, %s13
  %s16 = scalar_select 0, %s15, %s13
  $region1: #{tpu_custom_call.1} parent=0
    #allocation3 [shape = 'u8[2048]{0}', space=vmem, size = 0x800, scoped, tag = 'input window, operand 1']
    #allocation4 [shape = 's32[2]{0}', space=sflag, size = 0x8, scoped, tag = 'scoped memory for tpu_custom_call.1']
    #allocation5 [shape = 's32[2]{0}', space=sflag, size = 0x8, scoped, tag = 'scoped memory for tpu_custom_call.1']
    #allocation6 [shape = 'u8[8192]{0}', space=vmem, size = 0x2000, scoped, tag = 'input window, operand 8, single buffered']
    #allocation7 [shape = 's32[1]{0}', space=sflag, size = 0x4, scoped, tag = 'scoped memory for tpu_custom_call.1']
    #allocation8 [shape = 'u8[8192]{0}', space=vmem, size = 0x2000, scoped, tag = 'output window, operand 0']
    %17 = vsyncpa [#allocation4], 0
    %s18 = scalar_lea.sflag [#allocation4], 1
    %19 = vsyncpa %s18, 0
    %20 = vsyncpa [#allocation7], 0
    %21 = vsyncpa [#allocation5], 0
    %s22 = scalar_lea.sflag [#allocation5], 1
    %23 = vsyncpa %s22, 0
    loop: start=0, step=1, limit=4
    $region2: #{tpu_custom_call.1} parent=1 // loop_pre_header
      _
    $region3: #{tpu_custom_call.1} parent=1 // loop_header
      %s25 = sphi 0, %s29
      %p26 = scmp.ge.s32.totalorder %s25, 4
      %s35 = sphi 0, %s37
      %s38 = sphi 0, %s35
      %s39 = sphi 0, %s38
      %s55 = sphi 0, %s39
      %s61 = sphi 0, %s63
      %s64 = sphi 0, %s61
      %s65 = sphi 0, %s64
      %s81 = sphi 0, %s65
      %s85 = sphi 0, %s85
      %s87 = sphi 0, %s85
      %s88 = sphi 0, %s87
      %s102 = sphi 0, %s88
      %s106 = sphi 0, %s106
      %s108 = sphi 0, %s106
      %s109 = sphi 0, %s108
      %s123 = sphi 0, %s109
      %s127 = sphi 0, %s127
      %s129 = sphi 0, %s127
      %s130 = sphi 0, %s129
      %s144 = sphi 0, %s130
      %s148 = sphi 0, %s148
      %s150 = sphi 0, %s148
      %s151 = sphi 0, %s150
      %s165 = sphi 0, %s151
      %s169 = sphi 0, %s169
      %s171 = sphi 0, %s169
      %s172 = sphi 0, %s171
      %s186 = sphi 0, %s172
      %s190 = sphi 0, %s190
      %s192 = sphi 0, %s190
      %s193 = sphi 0, %s192
      %s207 = sphi 0, %s193
      %s211 = sphi 0, %s211
      %s213 = sphi 0, %s211
      %s214 = sphi 0, %s213
      %s228 = sphi 0, %s214
      %s232 = sphi 0, %s232
      %s234 = sphi 0, %s232
      %s235 = sphi 0, %s234
      %s249 = sphi 0, %s235
      %s253 = sphi 0, %s253
      %s255 = sphi 0, %s253
      %s256 = sphi 0, %s255
      %s270 = sphi 0, %s256
      %s274 = sphi 0, %s274
      %s276 = sphi 0, %s274
      %s277 = sphi 0, %s276
      %s291 = sphi 0, %s277
      %s297 = sphi 0, %s299
      %s300 = sphi 0, %s297
      %s301 = sphi 0, %s300
      %s317 = sphi 0, %s301
    $region4: #{tpu_custom_call.1} parent=1 // loop_header_branch
      %28 = sbr.rel (%p26) target = $region8
    $region5: #{tpu_custom_call.1} parent=1 // loop_body
      %s30 = ssub.s32 %s25, 1
      %s31 = ssub.s32 %s25, 2
      %s32 = sadd.s32 %s25, 1
      %s33 = ssub.s32 %s25, %s32
      %p34 = scmp.eq.s32.totalorder %s33, 0
      %s36 = sadd.s32 %s35, 1
      %s37 = scalar_select %p34, %s35, %s36
      %p40 = pneg %p34
      %p41 = scmp.eq.s32.totalorder %s25, 1
      %p42 = por %p40, %p41
      %p43 = scmp.ne.s32.totalorder %s35, %s38
      %p44 = scmp.eq.s32.totalorder %s25, 0
      %p45 = por %p43, %p44
      %p46 = scmp.ne.s32.totalorder %s35, %s38
      %p47 = scmp.eq.s32.totalorder %s30, 1
      %p48 = por %p46, %p47
      %p49 = scmp.ne.s32.totalorder %s38, %s39
      %p50 = scmp.eq.s32.totalorder %s30, 0
      %p51 = por %p49, %p50
      %p52 = scmp.ne.s32.totalorder %s38, %s39
      %p53 = scmp.eq.s32.totalorder %s31, 1
      %p54 = por %p52, %p53
      %p56 = scmp.ne.s32.totalorder %s39, %s55
      %p57 = scmp.eq.s32.totalorder %s31, 0
      %p58 = por %p56, %p57
      %s59 = ssub.s32 %s25, %s32
      %p60 = scmp.eq.s32.totalorder %s59, 0
      %s62 = sadd.s32 %s61, 1
      %s63 = scalar_select %p60, %s61, %s62
      %p66 = pneg %p60
      %p67 = scmp.eq.s32.totalorder %s25, 1
      %p68 = por %p66, %p67
      %p69 = scmp.ne.s32.totalorder %s61, %s64
      %p70 = scmp.eq.s32.totalorder %s25, 0
      %p71 = por %p69, %p70
      %p72 = scmp.ne.s32.totalorder %s61, %s64
      %p73 = scmp.eq.s32.totalorder %s30, 1
      %p74 = por %p72, %p73
      %p75 = scmp.ne.s32.totalorder %s64, %s65
      %p76 = scmp.eq.s32.totalorder %s30, 0
      %p77 = por %p75, %p76
      %p78 = scmp.ne.s32.totalorder %s64, %s65
      %p79 = scmp.eq.s32.totalorder %s31, 1
      %p80 = por %p78, %p79
      %p82 = scmp.ne.s32.totalorder %s65, %s81
      %p83 = scmp.eq.s32.totalorder %s31, 0
      %p84 = por %p82, %p83
      %s86 = sadd.s32 %s85, 1
      %p89 = scmp.eq.s32.totalorder %s25, 1
      %p90 = scmp.ne.s32.totalorder %s85, %s87
      %p91 = scmp.eq.s32.totalorder %s25, 0
      %p92 = por %p90, %p91
      %p93 = scmp.ne.s32.totalorder %s85, %s87
      %p94 = scmp.eq.s32.totalorder %s30, 1
      %p95 = por %p93, %p94
      %p96 = scmp.ne.s32.totalorder %s87, %s88
      %p97 = scmp.eq.s32.totalorder %s30, 0
      %p98 = por %p96, %p97
      %p99 = scmp.ne.s32.totalorder %s87, %s88
      %p100 = scmp.eq.s32.totalorder %s31, 1
      %p101 = por %p99, %p100
      %p103 = scmp.ne.s32.totalorder %s88, %s102
      %p104 = scmp.eq.s32.totalorder %s31, 0
      %p105 = por %p103, %p104
      %s107 = sadd.s32 %s106, 1
      %p110 = scmp.eq.s32.totalorder %s25, 1
      %p111 = scmp.ne.s32.totalorder %s106, %s108
      %p112 = scmp.eq.s32.totalorder %s25, 0
      %p113 = por %p111, %p112
      %p114 = scmp.ne.s32.totalorder %s106, %s108
      %p115 = scmp.eq.s32.totalorder %s30, 1
      %p116 = por %p114, %p115
      %p117 = scmp.ne.s32.totalorder %s108, %s109
      %p118 = scmp.eq.s32.totalorder %s30, 0
      %p119 = por %p117, %p118
      %p120 = scmp.ne.s32.totalorder %s108, %s109
      %p121 = scmp.eq.s32.totalorder %s31, 1
      %p122 = por %p120, %p121
      %p124 = scmp.ne.s32.totalorder %s109, %s123
      %p125 = scmp.eq.s32.totalorder %s31, 0
      %p126 = por %p124, %p125
      %s128 = sadd.s32 %s127, 1
      %p131 = scmp.eq.s32.totalorder %s25, 1
      %p132 = scmp.ne.s32.totalorder %s127, %s129
      %p133 = scmp.eq.s32.totalorder %s25, 0
      %p134 = por %p132, %p133
      %p135 = scmp.ne.s32.totalorder %s127, %s129
      %p136 = scmp.eq.s32.totalorder %s30, 1
      %p137 = por %p135, %p136
      %p138 = scmp.ne.s32.totalorder %s129, %s130
      %p139 = scmp.eq.s32.totalorder %s30, 0
      %p140 = por %p138, %p139
      %p141 = scmp.ne.s32.totalorder %s129, %s130
      %p142 = scmp.eq.s32.totalorder %s31, 1
      %p143 = por %p141, %p142
      %p145 = scmp.ne.s32.totalorder %s130, %s144
      %p146 = scmp.eq.s32.totalorder %s31, 0
      %p147 = por %p145, %p146
      %s149 = sadd.s32 %s148, 1
      %p152 = scmp.eq.s32.totalorder %s25, 1
      %p153 = scmp.ne.s32.totalorder %s148, %s150
      %p154 = scmp.eq.s32.totalorder %s25, 0
      %p155 = por %p153, %p154
      %p156 = scmp.ne.s32.totalorder %s148, %s150
      %p157 = scmp.eq.s32.totalorder %s30, 1
      %p158 = por %p156, %p157
      %p159 = scmp.ne.s32.totalorder %s150, %s151
      %p160 = scmp.eq.s32.totalorder %s30, 0
      %p161 = por %p159, %p160
      %p162 = scmp.ne.s32.totalorder %s150, %s151
      %p163 = scmp.eq.s32.totalorder %s31, 1
      %p164 = por %p162, %p163
      %p166 = scmp.ne.s32.totalorder %s151, %s165
      %p167 = scmp.eq.s32.totalorder %s31, 0
      %p168 = por %p166, %p167
      %s170 = sadd.s32 %s169, 1
      %p173 = scmp.eq.s32.totalorder %s25, 1
      %p174 = scmp.ne.s32.totalorder %s169, %s171
      %p175 = scmp.eq.s32.totalorder %s25, 0
      %p176 = por %p174, %p175
      %p177 = scmp.ne.s32.totalorder %s169, %s171
      %p178 = scmp.eq.s32.totalorder %s30, 1
      %p179 = por %p177, %p178
      %p180 = scmp.ne.s32.totalorder %s171, %s172
      %p181 = scmp.eq.s32.totalorder %s30, 0
      %p182 = por %p180, %p181
      %p183 = scmp.ne.s32.totalorder %s171, %s172
      %p184 = scmp.eq.s32.totalorder %s31, 1
      %p185 = por %p183, %p184
      %p187 = scmp.ne.s32.totalorder %s172, %s186
      %p188 = scmp.eq.s32.totalorder %s31, 0
      %p189 = por %p187, %p188
      %s191 = sadd.s32 %s190, 1
      %p194 = scmp.eq.s32.totalorder %s25, 1
      %p195 = scmp.ne.s32.totalorder %s190, %s192
      %p196 = scmp.eq.s32.totalorder %s25, 0
      %p197 = por %p195, %p196
      %p198 = scmp.ne.s32.totalorder %s190, %s192
      %p199 = scmp.eq.s32.totalorder %s30, 1
      %p200 = por %p198, %p199
      %p201 = scmp.ne.s32.totalorder %s192, %s193
      %p202 = scmp.eq.s32.totalorder %s30, 0
      %p203 = por %p201, %p202
      %p204 = scmp.ne.s32.totalorder %s192, %s193
      %p205 = scmp.eq.s32.totalorder %s31, 1
      %p206 = por %p204, %p205
      %p208 = scmp.ne.s32.totalorder %s193, %s207
      %p209 = scmp.eq.s32.totalorder %s31, 0
      %p210 = por %p208, %p209
      %s212 = sadd.s32 %s211, 1
      %p215 = scmp.eq.s32.totalorder %s25, 1
      %p216 = scmp.ne.s32.totalorder %s211, %s213
      %p217 = scmp.eq.s32.totalorder %s25, 0
      %p218 = por %p216, %p217
      %p219 = scmp.ne.s32.totalorder %s211, %s213
      %p220 = scmp.eq.s32.totalorder %s30, 1
      %p221 = por %p219, %p220
      %p222 = scmp.ne.s32.totalorder %s213, %s214
      %p223 = scmp.eq.s32.totalorder %s30, 0
      %p224 = por %p222, %p223
      %p225 = scmp.ne.s32.totalorder %s213, %s214
      %p226 = scmp.eq.s32.totalorder %s31, 1
      %p227 = por %p225, %p226
      %p229 = scmp.ne.s32.totalorder %s214, %s228
      %p230 = scmp.eq.s32.totalorder %s31, 0
      %p231 = por %p229, %p230
      %s233 = sadd.s32 %s232, 1
      %p236 = scmp.eq.s32.totalorder %s25, 1
      %p237 = scmp.ne.s32.totalorder %s232, %s234
      %p238 = scmp.eq.s32.totalorder %s25, 0
      %p239 = por %p237, %p238
      %p240 = scmp.ne.s32.totalorder %s232, %s234
      %p241 = scmp.eq.s32.totalorder %s30, 1
      %p242 = por %p240, %p241
      %p243 = scmp.ne.s32.totalorder %s234, %s235
      %p244 = scmp.eq.s32.totalorder %s30, 0
      %p245 = por %p243, %p244
      %p246 = scmp.ne.s32.totalorder %s234, %s235
      %p247 = scmp.eq.s32.totalorder %s31, 1
      %p248 = por %p246, %p247
      %p250 = scmp.ne.s32.totalorder %s235, %s249
      %p251 = scmp.eq.s32.totalorder %s31, 0
      %p252 = por %p250, %p251
      %s254 = sadd.s32 %s253, 1
      %p257 = scmp.eq.s32.totalorder %s25, 1
      %p258 = scmp.ne.s32.totalorder %s253, %s255
      %p259 = scmp.eq.s32.totalorder %s25, 0
      %p260 = por %p258, %p259
      %p261 = scmp.ne.s32.totalorder %s253, %s255
      %p262 = scmp.eq.s32.totalorder %s30, 1
      %p263 = por %p261, %p262
      %p264 = scmp.ne.s32.totalorder %s255, %s256
      %p265 = scmp.eq.s32.totalorder %s30, 0
      %p266 = por %p264, %p265
      %p267 = scmp.ne.s32.totalorder %s255, %s256
      %p268 = scmp.eq.s32.totalorder %s31, 1
      %p269 = por %p267, %p268
      %p271 = scmp.ne.s32.totalorder %s256, %s270
      %p272 = scmp.eq.s32.totalorder %s31, 0
      %p273 = por %p271, %p272
      %s275 = sadd.s32 %s274, 1
      %p278 = scmp.eq.s32.totalorder %s25, 1
      %p279 = scmp.ne.s32.totalorder %s274, %s276
      %p280 = scmp.eq.s32.totalorder %s25, 0
      %p281 = por %p279, %p280
      %p282 = scmp.ne.s32.totalorder %s274, %s276
      %p283 = scmp.eq.s32.totalorder %s30, 1
      %p284 = por %p282, %p283
      %p285 = scmp.ne.s32.totalorder %s276, %s277
      %p286 = scmp.eq.s32.totalorder %s30, 0
      %p287 = por %p285, %p286
      %p288 = scmp.ne.s32.totalorder %s276, %s277
      %p289 = scmp.eq.s32.totalorder %s31, 1
      %p290 = por %p288, %p289
      %p292 = scmp.ne.s32.totalorder %s277, %s291
      %p293 = scmp.eq.s32.totalorder %s31, 0
      %p294 = por %p292, %p293
      %s295 = ssub.s32 %s25, %s32
      %p296 = scmp.eq.s32.totalorder %s295, 0
      %s298 = sadd.s32 %s297, 1
      %s299 = scalar_select %p296, %s297, %s298
      %p302 = pneg %p296
      %p303 = scmp.eq.s32.totalorder %s25, 1
      %p304 = por %p302, %p303
      %p305 = scmp.ne.s32.totalorder %s297, %s300
      %p306 = scmp.eq.s32.totalorder %s25, 0
      %p307 = por %p305, %p306
      %p308 = scmp.ne.s32.totalorder %s297, %s300
      %p309 = scmp.eq.s32.totalorder %s30, 1
      %p310 = por %p308, %p309
      %p311 = scmp.ne.s32.totalorder %s300, %s301
      %p312 = scmp.eq.s32.totalorder %s30, 0
      %p313 = por %p311, %p312
      %p314 = scmp.ne.s32.totalorder %s300, %s301
      %p315 = scmp.eq.s32.totalorder %s31, 1
      %p316 = por %p314, %p315
      %p318 = scmp.ne.s32.totalorder %s301, %s317
      %p319 = scmp.eq.s32.totalorder %s31, 0
      %p320 = por %p318, %p319
      %p321 = scmp.le.s32.totalorder 1, %s25
      %p322 = scmp.lt.s32.totalorder %s25, 3
      %p323 = pnand %p321, %p322
      %p324 = pneg %p323
      // Predicated region
      $region9: #{tpu_custom_call.1} parent=5 // pred_check
        _
      $region10: #{tpu_custom_call.1} parent=5 // pred_check_branch
        %326 = sbr.rel (%p323) target = $region12
      $region11: #{tpu_custom_call.1} parent=5 // pred_region
        %s327 = ssub.s32 %s25, 1
        // Predicated region
        $region13: #{tpu_custom_call.1} parent=11 // pred_check
          %p328 = pneg %p98
        $region14: #{tpu_custom_call.1} parent=11 // pred_check_branch
          %330 = sbr.rel (%p328) target = $region16
        $region15: #{tpu_custom_call.1} parent=11 // pred_region
          _
        $region16: #{tpu_custom_call.1} parent=11 // pred_fallthru
          _
        // Predicated region
        $region17: #{tpu_custom_call.1} parent=11 // pred_check
          %p331 = pneg %p119
        $region18: #{tpu_custom_call.1} parent=11 // pred_check_branch
          %333 = sbr.rel (%p331) target = $region20
        $region19: #{tpu_custom_call.1} parent=11 // pred_region
          _
        $region20: #{tpu_custom_call.1} parent=11 // pred_fallthru
          _
        // Predicated region
        $region21: #{tpu_custom_call.1} parent=11 // pred_check
          %p334 = pneg %p140
        $region22: #{tpu_custom_call.1} parent=11 // pred_check_branch
          %336 = sbr.rel (%p334) target = $region24
        $region23: #{tpu_custom_call.1} parent=11 // pred_region
          _
        $region24: #{tpu_custom_call.1} parent=11 // pred_fallthru
          _
        // Predicated region
        $region25: #{tpu_custom_call.1} parent=11 // pred_check
          %p337 = pneg %p161
        $region26: #{tpu_custom_call.1} parent=11 // pred_check_branch
          %339 = sbr.rel (%p337) target = $region28
        $region27: #{tpu_custom_call.1} parent=11 // pred_region
          _
        $region28: #{tpu_custom_call.1} parent=11 // pred_fallthru
          _
        // Predicated region
        $region29: #{tpu_custom_call.1} parent=11 // pred_check
          %p340 = pneg %p182
        $region30: #{tpu_custom_call.1} parent=11 // pred_check_branch
          %342 = sbr.rel (%p340) target = $region32
        $region31: #{tpu_custom_call.1} parent=11 // pred_region
          _
        $region32: #{tpu_custom_call.1} parent=11 // pred_fallthru
          _
        // Predicated region
        $region33: #{tpu_custom_call.1} parent=11 // pred_check
          %p343 = pneg %p203
        $region34: #{tpu_custom_call.1} parent=11 // pred_check_branch
          %345 = sbr.rel (%p343) target = $region36
        $region35: #{tpu_custom_call.1} parent=11 // pred_region
          _
        $region36: #{tpu_custom_call.1} parent=11 // pred_fallthru
          _
        // Predicated region
        $region37: #{tpu_custom_call.1} parent=11 // pred_check
          %p346 = pneg %p224
        $region38: #{tpu_custom_call.1} parent=11 // pred_check_branch
          %348 = sbr.rel (%p346) target = $region40
        $region39: #{tpu_custom_call.1} parent=11 // pred_region
          %s350 = ssub.s32 256, 256
          %351 = vsyncadd [#allocation7], %s350
          %s352 = sshll.u32 [#allocation6], 4
          %s353 = int_to_ptr.vmem [resolvable:$true] %s352
          %358 = dma.hbm_to_vmem [thread:$0]  %s8, 256, %s353, [#allocation7], 64, 64, 4
        $region40: #{tpu_custom_call.1} parent=11 // pred_fallthru
          _
        // Predicated region
        $region41: #{tpu_custom_call.1} parent=11 // pred_check
          %p359 = pneg %p245
        $region42: #{tpu_custom_call.1} parent=11 // pred_check_branch
          %361 = sbr.rel (%p359) target = $region44
        $region43: #{tpu_custom_call.1} parent=11 // pred_region
          _
        $region44: #{tpu_custom_call.1} parent=11 // pred_fallthru
          _
        // Predicated region
        $region45: #{tpu_custom_call.1} parent=11 // pred_check
          %p362 = pneg %p266
        $region46: #{tpu_custom_call.1} parent=11 // pred_check_branch
          %364 = sbr.rel (%p362) target = $region48
        $region47: #{tpu_custom_call.1} parent=11 // pred_region
          _
        $region48: #{tpu_custom_call.1} parent=11 // pred_fallthru
          _
        // Predicated region
        $region49: #{tpu_custom_call.1} parent=11 // pred_check
          %p365 = pneg %p287
        $region50: #{tpu_custom_call.1} parent=11 // pred_check_branch
          %367 = sbr.rel (%p365) target = $region52
        $region51: #{tpu_custom_call.1} parent=11 // pred_region
          _
        $region52: #{tpu_custom_call.1} parent=11 // pred_fallthru
          _
      $region12: #{tpu_custom_call.1} parent=5 // pred_fallthru
        _
      %p368 = scmp.lt.s32.totalorder %s25, 2
      // Predicated region
      $region53: #{tpu_custom_call.1} parent=5 // pred_check
        %p369 = pneg %p368
      $region54: #{tpu_custom_call.1} parent=5 // pred_check_branch
        %371 = sbr.rel (%p369) target = $region56
      $region55: #{tpu_custom_call.1} parent=5 // pred_region
        // Predicated region
        $region57: #{tpu_custom_call.1} parent=55 // pred_check
          %p372 = pneg %p45
        $region58: #{tpu_custom_call.1} parent=55 // pred_check_branch
          %374 = sbr.rel (%p372) target = $region60
        $region59: #{tpu_custom_call.1} parent=55 // pred_region
          %p375 = scmp.lt.s32.totalorder %s25, 1
          %s376 = scalar_select %p375, %s25, 1
          %s377 = smul.addr %s376, 8
          %s378 = scalar_lea.vmem %s0, %s377
        $region60: #{tpu_custom_call.1} parent=55 // pred_fallthru
          _
        // Predicated region
        $region61: #{tpu_custom_call.1} parent=55 // pred_check
          %p379 = pneg %p71
        $region62: #{tpu_custom_call.1} parent=55 // pred_check_branch
          %381 = sbr.rel (%p379) target = $region64
        $region63: #{tpu_custom_call.1} parent=55 // pred_region
          %s382 = sand.u32 %s61, 1
          %s383 = scalar_lea.sflag [#allocation4], %s382
          %s384 = sand.u32 %s61, 1
          %s385 = smul.addr %s384, 2
          %s386 = scalar_lea.vmem [#allocation3], %s385
          %s388 = ssub.s32 32, 32
          %389 = vsyncadd %s383, %s388
          %s390 = smul.addr %s25, 32
          %s391 = scalar_lea.hbm %s1, %s390
          %s393 = sshll.u32 %s386, 4
          %s394 = int_to_ptr.vmem [resolvable:$true] %s393
          %396 = dma.hbm_to_vmem [thread:$0]  %s391, 32, %s394, %s383
        $region64: #{tpu_custom_call.1} parent=55 // pred_fallthru
          _
      $region56: #{tpu_custom_call.1} parent=5 // pred_fallthru
        _
      %p397 = scmp.le.s32.totalorder 1, %s25
      %p398 = scmp.lt.s32.totalorder %s25, 3
      %p399 = pnand %p397, %p398
      %p400 = pneg %p399
      // Predicated region
      $region65: #{tpu_custom_call.1} parent=5 // pred_check
        _
      $region66: #{tpu_custom_call.1} parent=5 // pred_check_branch
        %402 = sbr.rel (%p399) target = $region68
      $region67: #{tpu_custom_call.1} parent=5 // pred_region
        %s403 = ssub.s32 %s25, 1
        %s404 = sand.u32 %s64, 1
        %s405 = scalar_lea.sflag [#allocation4], %s404
        %s406 = sand.u32 %s64, 1
        %s407 = smul.addr %s406, 2
        %s408 = scalar_lea.vmem [#allocation3], %s407
        // Predicated region
        $region69: #{tpu_custom_call.1} parent=67 // pred_check
          %p409 = pneg %p77
        $region70: #{tpu_custom_call.1} parent=67 // pred_check_branch
          %411 = sbr.rel (%p409) target = $region72
        $region71: #{tpu_custom_call.1} parent=67 // pred_region
          %412 = dma.done %s405, 32
        $region72: #{tpu_custom_call.1} parent=67 // pred_fallthru
          _
        // Predicated region
        $region73: #{tpu_custom_call.1} parent=67 // pred_check
          %p413 = pneg %p224
        $region74: #{tpu_custom_call.1} parent=67 // pred_check_branch
          %415 = sbr.rel (%p413) target = $region76
        $region75: #{tpu_custom_call.1} parent=67 // pred_region
          %416 = dma.done [#allocation7], 256
        $region76: #{tpu_custom_call.1} parent=67 // pred_fallthru
          _
        %p417 = scmp.lt.s32.totalorder %s30, 1
        %s418 = scalar_select %p417, %s30, 1
        %s419 = smul.addr %s418, 8
        %s420 = scalar_lea.vmem %s0, %s419
        %p421 = pneg %p51
        %p422 = pneg %p48
        %s423 = sand.u32 %s64, 1
        %s424 = scalar_lea.sflag [#allocation4], %s423
        %s425 = sand.u32 %s64, 1
        %s426 = smul.addr %s425, 2
        %s427 = scalar_lea.vmem [#allocation3], %s426
        %p428 = pneg %p77
        %p429 = pneg %p74
        %p430 = pneg %p98
        %p431 = pneg %p95
        %p432 = pneg %p119
        %p433 = pneg %p116
        %p434 = pneg %p140
        %p435 = pneg %p137
        %p436 = pneg %p161
        %p437 = pneg %p158
        %p438 = pneg %p182
        %p439 = pneg %p179
        %p440 = pneg %p203
        %p441 = pneg %p200
        %p442 = pneg %p224
        %p443 = pneg %p221
        %p444 = pneg %p245
        %p445 = pneg %p242
        %p446 = pneg %p266
        %p447 = pneg %p263
        %p448 = pneg %p287
        %p449 = pneg %p284
        %p450 = pneg %p313
        %p451 = pneg %p310
        %s452 = sand.u32 %s300, 1
        %s453 = scalar_lea.sflag [#allocation5], %s452
        %s454 = sand.u32 %s300, 1
        %s455 = smul.addr %s454, 8
        %s456 = scalar_lea.vmem [#allocation8], %s455
        %p457 = scmp.lt.s32.totalorder %s30, 1
        %s458 = scalar_select %p457, %s30, 1
        %s459 = smul.addr %s458, 8
        %s460 = scalar_lea.vmem %s0, %s459
        %v464 = vld [vmem:[%s460] sm:$0xff]
        %v465 = vpack.c.bf16 %v464, %v464
        %v466 = vld [vmem:[%s2] sm:$0xf]
        %v467 = vld [vmem:[%s2 + $0x4] sm:$0xf]
        %v468 = vld [vmem:[%s2 + $0x8] sm:$0xf]
        %v469 = vld [vmem:[%s2 + $0xc] sm:$0xf]
        %v470 = vld [vmem:[%s3] sm:$0x1]
        %v472 = vlaneseq
        %v473 = vshrl.u32 %v472, 7
        %v474 = vsub.s32 0, %v473
        %v475 = vrot.slane %v470, %v474
        %v481 = vunpack.c.l.b16 %v466
        %v482 = vunpack.c.l.b16 %v467
        %v483 = vunpack.c.l.b16 %v468
        %v484 = vunpack.c.l.b16 %v469
        %v485 = vpack.c.b16 %v482, %v481
        %v486 = vpack.c.b16 %v484, %v483
        %vm489 = vcmask 261120
        %v491 = vsel %vm489, %v465, 0
        %493 = vmatprep.subr.bf16.mxu0 0
        %494 = vmatpush1.bf16.msra.mxu0 %v485
        %495 = vmatprep.subr.bf16.mxu0 0
        %496 = vmatpush1.bf16.msra.mxu0 %v486
        %497 = vmatprep.subr.bf16.mxu0 0
        %498 = vmatpush1.bf16.msra.mxu0 0
        %499 = vmatprep.subr.bf16.mxu0 0
        %500 = vmatpush1.bf16.msra.mxu0 0
        %501 = vmatprep.subr.bf16.mxu0 0
        %502 = vmatpush1.bf16.msra.mxu0 0
        %503 = vmatprep.subr.bf16.mxu0 0
        %504 = vmatpush1.bf16.msra.mxu0 0
        %505 = vmatprep.subr.bf16.mxu0 0
        %506 = vmatpush1.bf16.msra.mxu0 0
        %507 = vmatprep.subr.bf16.mxu0 0
        %508 = vmatpush1.bf16.msra.mxu0 0
        %509 = vmatprep.subr.bf16.mxu0 0
        %510 = vmatpush1.bf16.msra.mxu0 0
        %511 = vmatprep.subr.bf16.mxu0 0
        %512 = vmatpush1.bf16.msra.mxu0 0
        %513 = vmatprep.subr.bf16.mxu0 0
        %514 = vmatpush1.bf16.msra.mxu0 0
        %515 = vmatprep.subr.bf16.mxu0 0
        %516 = vmatpush1.bf16.msra.mxu0 0
        %517 = vmatprep.subr.bf16.mxu0 0
        %518 = vmatpush1.bf16.msra.mxu0 0
        %519 = vmatprep.subr.bf16.mxu0 0
        %520 = vmatpush1.bf16.msra.mxu0 0
        %521 = vmatprep.subr.bf16.mxu0 0
        %522 = vmatpush1.bf16.msra.mxu0 0
        %523 = vmatprep.subr.bf16.mxu0 0
        %524 = vmatpush1.bf16.msra.mxu0 0
        %525 = vmatprep.mubr.bf16.mxu0 0
        %526 = vmatmul.mubr.bf16.gmra.mrb[0].mxu0 %v491
        %v527 = vpop.f32.mrb[0].mxu0
        %v528 = vadd.f32 %v475, %v527
        %v529 = vpop.f32.mrb[0].mxu0
        %v530 = vpop.f32.mrb[0].mxu0
        %v531 = vpop.f32.mrb[0].mxu0
        %532 = vdwg.mxu0
        %v533 = vmul.f32 %v528, 0.35355338
        %v534 = vpack.c.bf16 %v533, %v533
        %v535 = vpack.c.bf16 %v528, %v528
        %v536 = vld [vmem:[%s408] sm:$0x3]
        %vm537 = vnez %v536
        %539 = vrot.lane.b32.xlu0 %v535, 96
        %v540 = vpop.permute.xlu0 %539
        %vm541 = vcmask 64512
        %v543 = vsel %vm541, %v534, 0
        %v546 = vsel %vm541, %v540, 0
        %548 = vmatprep.subr.bf16.mxu0 0
        %549 = vmatpush1.bf16.xpose.msra.mxu0 %v546
        %550 = vmatprep.subr.bf16.mxu0 0
        %551 = vmatpush1.bf16.xpose.msra.mxu0 0
        %552 = vmatprep.subr.bf16.mxu0 0
        %553 = vmatpush1.bf16.xpose.msra.mxu0 0
        %554 = vmatprep.subr.bf16.mxu0 0
        %555 = vmatpush1.bf16.xpose.msra.mxu0 0
        %556 = vmatprep.subr.bf16.mxu0 0
        %557 = vmatpush1.bf16.xpose.msra.mxu0 0
        %558 = vmatprep.subr.bf16.mxu0 0
        %559 = vmatpush1.bf16.xpose.msra.mxu0 0
        %560 = vmatprep.subr.bf16.mxu0 0
        %561 = vmatpush1.bf16.xpose.msra.mxu0 0
        %562 = vmatprep.subr.bf16.mxu0 0
        %563 = vmatpush1.bf16.xpose.msra.mxu0 0
        %564 = vmatprep.subr.bf16.mxu0 0
        %565 = vmatpush1.bf16.xpose.msra.mxu0 0
        %566 = vmatprep.subr.bf16.mxu0 0
        %567 = vmatpush1.bf16.xpose.msra.mxu0 0
        %568 = vmatprep.subr.bf16.mxu0 0
        %569 = vmatpush1.bf16.xpose.msra.mxu0 0
        %570 = vmatprep.subr.bf16.mxu0 0
        %571 = vmatpush1.bf16.xpose.msra.mxu0 0
        %572 = vmatprep.subr.bf16.mxu0 0
        %573 = vmatpush1.bf16.xpose.msra.mxu0 0
        %574 = vmatprep.subr.bf16.mxu0 0
        %575 = vmatpush1.bf16.xpose.msra.mxu0 0
        %576 = vmatprep.subr.bf16.mxu0 0
        %577 = vmatpush1.bf16.xpose.msra.mxu0 0
        %578 = vmatprep.subr.bf16.mxu0 0
        %579 = vmatpush1.bf16.xpose.msra.mxu0 0
        %580 = vmatprep.mubr.bf16.mxu0 0
        %581 = vmatmul.mubr.bf16.gmra.mrb[0].mxu0 %v543
        %v582 = vpop.f32.mrb[0].mxu0
        %v583 = vadd.f32 0.0, %v582
        %v584 = vpop.f32.mrb[0].mxu0
        %v585 = vpop.f32.mrb[0].mxu0
        %v586 = vpop.f32.mrb[0].mxu0
        %587 = vdwg.mxu0
        %v588 = vsel %vm537, 16843009, 0
        %v589 = vunpack.c.0.s8 %v588
        %vm590 = vcmp.ne.s32.totalorder %v589, 0
        %v591 = vsel %vm590, -1e+09, %v583
        %v592 = vsel %vm541, %v591, -inf
        %593 = vmax.xlane.f32.xlu0 %v592
        %v594 = vpop.xlane.xlu0 %593
        %v595 = vsub.f32 %v591, %v594
        %v596 = vmul.f32 %v595, 1.442695
        %v597 = vpow.pop %v596
        %v598 = vsel %vm541, %v597, 0.0
        %599 = vadd.xlane.f32.xlu0 %v598
        %v600 = vpop.xlane.xlu0 %599
        %v601 = vrcp.pop %v600
        %v602 = vmul.f32 %v597, %v601
        %v603 = vpack.c.bf16 %v602, %v602
        %604 = vrot.lane.b32.xlu0 %v535, 64
        %v605 = vpop.permute.xlu0 %604
        %v607 = vsel %vm541, %v603, 0
        %vm609 = vcmask 1043456
        %v611 = vsel %vm609, %v605, 0
        %613 = vmatprep.subr.bf16.mxu0 0
        %614 = vmatpush1.bf16.msra.mxu0 %v611
        %615 = vmatprep.subr.bf16.mxu0 0
        %616 = vmatpush1.bf16.msra.mxu0 0
        %617 = vmatprep.subr.bf16.mxu0 0
        %618 = vmatpush1.bf16.msra.mxu0 0
        %619 = vmatprep.subr.bf16.mxu0 0
        %620 = vmatpush1.bf16.msra.mxu0 0
        %621 = vmatprep.subr.bf16.mxu0 0
        %622 = vmatpush1.bf16.msra.mxu0 0
        %623 = vmatprep.subr.bf16.mxu0 0
        %624 = vmatpush1.bf16.msra.mxu0 0
        %625 = vmatprep.subr.bf16.mxu0 0
        %626 = vmatpush1.bf16.msra.mxu0 0
        %627 = vmatprep.subr.bf16.mxu0 0
        %628 = vmatpush1.bf16.msra.mxu0 0
        %629 = vmatprep.subr.bf16.mxu0 0
        %630 = vmatpush1.bf16.msra.mxu0 0
        %631 = vmatprep.subr.bf16.mxu0 0
        %632 = vmatpush1.bf16.msra.mxu0 0
        %633 = vmatprep.subr.bf16.mxu0 0
        %634 = vmatpush1.bf16.msra.mxu0 0
        %635 = vmatprep.subr.bf16.mxu0 0
        %636 = vmatpush1.bf16.msra.mxu0 0
        %637 = vmatprep.subr.bf16.mxu0 0
        %638 = vmatpush1.bf16.msra.mxu0 0
        %639 = vmatprep.subr.bf16.mxu0 0
        %640 = vmatpush1.bf16.msra.mxu0 0
        %641 = vmatprep.subr.bf16.mxu0 0
        %642 = vmatpush1.bf16.msra.mxu0 0
        %643 = vmatprep.subr.bf16.mxu0 0
        %644 = vmatpush1.bf16.msra.mxu0 0
        %645 = vmatprep.mubr.bf16.mxu0 0
        %646 = vmatmul.mubr.bf16.gmra.mrb[0].mxu0 %v607
        %v647 = vpop.f32.mrb[0].mxu0
        %v648 = vadd.f32 0.0, %v647
        %v649 = vpop.f32.mrb[0].mxu0
        %v650 = vpop.f32.mrb[0].mxu0
        %v651 = vpop.f32.mrb[0].mxu0
        %652 = vdwg.mxu0
        %653 = vst.msk [vmem:[#allocation2] sm:$0xff] %vm541, %v648
        %655 = vrot.lane.b32.xlu0 %v534, 120
        %v656 = vpop.permute.xlu0 %655
        %657 = vrot.lane.b32.xlu0 %v535, 88
        %v658 = vpop.permute.xlu0 %657
        %v660 = vsel %vm541, %v656, 0
        %v663 = vsel %vm541, %v658, 0
        %665 = vmatprep.subr.bf16.mxu0 0
        %666 = vmatpush1.bf16.xpose.msra.mxu0 %v663
        %667 = vmatprep.subr.bf16.mxu0 0
        %668 = vmatpush1.bf16.xpose.msra.mxu0 0
        %669 = vmatprep.subr.bf16.mxu0 0
        %670 = vmatpush1.bf16.xpose.msra.mxu0 0
        %671 = vmatprep.subr.bf16.mxu0 0
        %672 = vmatpush1.bf16.xpose.msra.mxu0 0
        %673 = vmatprep.subr.bf16.mxu0 0
        %674 = vmatpush1.bf16.xpose.msra.mxu0 0
        %675 = vmatprep.subr.bf16.mxu0 0
        %676 = vmatpush1.bf16.xpose.msra.mxu0 0
        %677 = vmatprep.subr.bf16.mxu0 0
        %678 = vmatpush1.bf16.xpose.msra.mxu0 0
        %679 = vmatprep.subr.bf16.mxu0 0
        %680 = vmatpush1.bf16.xpose.msra.mxu0 0
        %681 = vmatprep.subr.bf16.mxu0 0
        %682 = vmatpush1.bf16.xpose.msra.mxu0 0
        %683 = vmatprep.subr.bf16.mxu0 0
        %684 = vmatpush1.bf16.xpose.msra.mxu0 0
        %685 = vmatprep.subr.bf16.mxu0 0
        %686 = vmatpush1.bf16.xpose.msra.mxu0 0
        %687 = vmatprep.subr.bf16.mxu0 0
        %688 = vmatpush1.bf16.xpose.msra.mxu0 0
        %689 = vmatprep.subr.bf16.mxu0 0
        %690 = vmatpush1.bf16.xpose.msra.mxu0 0
        %691 = vmatprep.subr.bf16.mxu0 0
        %692 = vmatpush1.bf16.xpose.msra.mxu0 0
        %693 = vmatprep.subr.bf16.mxu0 0
        %694 = vmatpush1.bf16.xpose.msra.mxu0 0
        %695 = vmatprep.subr.bf16.mxu0 0
        %696 = vmatpush1.bf16.xpose.msra.mxu0 0
        %697 = vmatprep.mubr.bf16.mxu0 0
        %698 = vmatmul.mubr.bf16.gmra.mrb[0].mxu0 %v660
        %v699 = vpop.f32.mrb[0].mxu0
        %v700 = vadd.f32 0.0, %v699
        %v701 = vpop.f32.mrb[0].mxu0
        %v702 = vpop.f32.mrb[0].mxu0
        %v703 = vpop.f32.mrb[0].mxu0
        %704 = vdwg.mxu0
        %v705 = vsel %vm590, -1e+09, %v700
        %v706 = vsel %vm541, %v705, -inf
        %707 = vmax.xlane.f32.xlu0 %v706
        %v708 = vpop.xlane.xlu0 %707
        %v709 = vsub.f32 %v705, %v708
        %v710 = vmul.f32 %v709, 1.442695
        %v711 = vpow.pop %v710
        %v712 = vsel %vm541, %v711, 0.0
        %713 = vadd.xlane.f32.xlu0 %v712
        %v714 = vpop.xlane.xlu0 %713
        %v715 = vrcp.pop %v714
        %v716 = vmul.f32 %v711, %v715
        %v717 = vpack.c.bf16 %v716, %v716
        %718 = vrot.lane.b32.xlu0 %v535, 56
        %v719 = vpop.permute.xlu0 %718
        %v721 = vsel %vm541, %v717, 0
        %v724 = vsel %vm609, %v719, 0
        %726 = vmatprep.subr.bf16.mxu0 0
        %727 = vmatpush1.bf16.msra.mxu0 %v724
        %728 = vmatprep.subr.bf16.mxu0 0
        %729 = vmatpush1.bf16.msra.mxu0 0
        %730 = vmatprep.subr.bf16.mxu0 0
        %731 = vmatpush1.bf16.msra.mxu0 0
        %732 = vmatprep.subr.bf16.mxu0 0
        %733 = vmatpush1.bf16.msra.mxu0 0
        %734 = vmatprep.subr.bf16.mxu0 0
        %735 = vmatpush1.bf16.msra.mxu0 0
        %736 = vmatprep.subr.bf16.mxu0 0
        %737 = vmatpush1.bf16.msra.mxu0 0
        %738 = vmatprep.subr.bf16.mxu0 0
        %739 = vmatpush1.bf16.msra.mxu0 0
        %740 = vmatprep.subr.bf16.mxu0 0
        %741 = vmatpush1.bf16.msra.mxu0 0
        %742 = vmatprep.subr.bf16.mxu0 0
        %743 = vmatpush1.bf16.msra.mxu0 0
        %744 = vmatprep.subr.bf16.mxu0 0
        %745 = vmatpush1.bf16.msra.mxu0 0
        %746 = vmatprep.subr.bf16.mxu0 0
        %747 = vmatpush1.bf16.msra.mxu0 0
        %748 = vmatprep.subr.bf16.mxu0 0
        %749 = vmatpush1.bf16.msra.mxu0 0
        %750 = vmatprep.subr.bf16.mxu0 0
        %751 = vmatpush1.bf16.msra.mxu0 0
        %752 = vmatprep.subr.bf16.mxu0 0
        %753 = vmatpush1.bf16.msra.mxu0 0
        %754 = vmatprep.subr.bf16.mxu0 0
        %755 = vmatpush1.bf16.msra.mxu0 0
        %756 = vmatprep.subr.bf16.mxu0 0
        %757 = vmatpush1.bf16.msra.mxu0 0
        %758 = vmatprep.mubr.bf16.mxu0 0
        %759 = vmatmul.mubr.bf16.gmra.mrb[0].mxu0 %v721
        %v760 = vpop.f32.mrb[0].mxu0
        %v761 = vadd.f32 0.0, %v760
        %v762 = vpop.f32.mrb[0].mxu0
        %v763 = vpop.f32.mrb[0].mxu0
        %v764 = vpop.f32.mrb[0].mxu0
        %765 = vdwg.mxu0
        %767 = vrot.lane.b32.xlu0 %v761, 8
        %v768 = vpop.permute.xlu0 %767
        %vm770 = vcmask 130112
        %771 = vst.msk [vmem:[#allocation2] sm:$0xff] %vm770, %v768
        %772 = vrot.lane.b32.xlu0 %v534, 112
        %v773 = vpop.permute.xlu0 %772
        %774 = vrot.lane.b32.xlu0 %v535, 80
        %v775 = vpop.permute.xlu0 %774
        %v777 = vsel %vm541, %v773, 0
        %v780 = vsel %vm541, %v775, 0
        %782 = vmatprep.subr.bf16.mxu0 0
        %783 = vmatpush1.bf16.xpose.msra.mxu0 %v780
        %784 = vmatprep.subr.bf16.mxu0 0
        %785 = vmatpush1.bf16.xpose.msra.mxu0 0
        %786 = vmatprep.subr.bf16.mxu0 0
        %787 = vmatpush1.bf16.xpose.msra.mxu0 0
        %788 = vmatprep.subr.bf16.mxu0 0
        %789 = vmatpush1.bf16.xpose.msra.mxu0 0
        %790 = vmatprep.subr.bf16.mxu0 0
        %791 = vmatpush1.bf16.xpose.msra.mxu0 0
        %792 = vmatprep.subr.bf16.mxu0 0
        %793 = vmatpush1.bf16.xpose.msra.mxu0 0
        %794 = vmatprep.subr.bf16.mxu0 0
        %795 = vmatpush1.bf16.xpose.msra.mxu0 0
        %796 = vmatprep.subr.bf16.mxu0 0
        %797 = vmatpush1.bf16.xpose.msra.mxu0 0
        %798 = vmatprep.subr.bf16.mxu0 0
        %799 = vmatpush1.bf16.xpose.msra.mxu0 0
        %800 = vmatprep.subr.bf16.mxu0 0
        %801 = vmatpush1.bf16.xpose.msra.mxu0 0
        %802 = vmatprep.subr.bf16.mxu0 0
        %803 = vmatpush1.bf16.xpose.msra.mxu0 0
        %804 = vmatprep.subr.bf16.mxu0 0
        %805 = vmatpush1.bf16.xpose.msra.mxu0 0
        %806 = vmatprep.subr.bf16.mxu0 0
        %807 = vmatpush1.bf16.xpose.msra.mxu0 0
        %808 = vmatprep.subr.bf16.mxu0 0
        %809 = vmatpush1.bf16.xpose.msra.mxu0 0
        %810 = vmatprep.subr.bf16.mxu0 0
        %811 = vmatpush1.bf16.xpose.msra.mxu0 0
        %812 = vmatprep.subr.bf16.mxu0 0
        %813 = vmatpush1.bf16.xpose.msra.mxu0 0
        %814 = vmatprep.mubr.bf16.mxu0 0
        %815 = vmatmul.mubr.bf16.gmra.mrb[0].mxu0 %v777
        %v816 = vpop.f32.mrb[0].mxu0
        %v817 = vadd.f32 0.0, %v816
        %v818 = vpop.f32.mrb[0].mxu0
        %v819 = vpop.f32.mrb[0].mxu0
        %v820 = vpop.f32.mrb[0].mxu0
        %821 = vdwg.mxu0
        %v822 = vsel %vm590, -1e+09, %v817
        %v823 = vsel %vm541, %v822, -inf
        %824 = vmax.xlane.f32.xlu0 %v823
        %v825 = vpop.xlane.xlu0 %824
        %v826 = vsub.f32 %v822, %v825
        %v827 = vmul.f32 %v826, 1.442695
        %v828 = vpow.pop %v827
        %v829 = vsel %vm541, %v828, 0.0
        %830 = vadd.xlane.f32.xlu0 %v829
        %v831 = vpop.xlane.xlu0 %830
        %v832 = vrcp.pop %v831
        %v833 = vmul.f32 %v828, %v832
        %v834 = vpack.c.bf16 %v833, %v833
        %835 = vrot.lane.b32.xlu0 %v535, 48
        %v836 = vpop.permute.xlu0 %835
        %v838 = vsel %vm541, %v834, 0
        %v841 = vsel %vm609, %v836, 0
        %843 = vmatprep.subr.bf16.mxu0 0
        %844 = vmatpush1.bf16.msra.mxu0 %v841
        %845 = vmatprep.subr.bf16.mxu0 0
        %846 = vmatpush1.bf16.msra.mxu0 0
        %847 = vmatprep.subr.bf16.mxu0 0
        %848 = vmatpush1.bf16.msra.mxu0 0
        %849 = vmatprep.subr.bf16.mxu0 0
        %850 = vmatpush1.bf16.msra.mxu0 0
        %851 = vmatprep.subr.bf16.mxu0 0
        %852 = vmatpush1.bf16.msra.mxu0 0
        %853 = vmatprep.subr.bf16.mxu0 0
        %854 = vmatpush1.bf16.msra.mxu0 0
        %855 = vmatprep.subr.bf16.mxu0 0
        %856 = vmatpush1.bf16.msra.mxu0 0
        %857 = vmatprep.subr.bf16.mxu0 0
        %858 = vmatpush1.bf16.msra.mxu0 0
        %859 = vmatprep.subr.bf16.mxu0 0
        %860 = vmatpush1.bf16.msra.mxu0 0
        %861 = vmatprep.subr.bf16.mxu0 0
        %862 = vmatpush1.bf16.msra.mxu0 0
        %863 = vmatprep.subr.bf16.mxu0 0
        %864 = vmatpush1.bf16.msra.mxu0 0
        %865 = vmatprep.subr.bf16.mxu0 0
        %866 = vmatpush1.bf16.msra.mxu0 0
        %867 = vmatprep.subr.bf16.mxu0 0
        %868 = vmatpush1.bf16.msra.mxu0 0
        %869 = vmatprep.subr.bf16.mxu0 0
        %870 = vmatpush1.bf16.msra.mxu0 0
        %871 = vmatprep.subr.bf16.mxu0 0
        %872 = vmatpush1.bf16.msra.mxu0 0
        %873 = vmatprep.subr.bf16.mxu0 0
        %874 = vmatpush1.bf16.msra.mxu0 0
        %875 = vmatprep.mubr.bf16.mxu0 0
        %876 = vmatmul.mubr.bf16.gmra.mrb[0].mxu0 %v838
        %v877 = vpop.f32.mrb[0].mxu0
        %v878 = vadd.f32 0.0, %v877
        %v879 = vpop.f32.mrb[0].mxu0
        %v880 = vpop.f32.mrb[0].mxu0
        %v881 = vpop.f32.mrb[0].mxu0
        %882 = vdwg.mxu0
        %884 = vrot.lane.b32.xlu0 %v878, 16
        %v885 = vpop.permute.xlu0 %884
        %vm887 = vcmask 195712
        %888 = vst.msk [vmem:[#allocation2] sm:$0xff] %vm887, %v885
        %889 = vrot.lane.b32.xlu0 %v534, 104
        %v890 = vpop.permute.xlu0 %889
        %891 = vrot.lane.b32.xlu0 %v535, 72
        %v892 = vpop.permute.xlu0 %891
        %v894 = vsel %vm541, %v890, 0
        %v897 = vsel %vm541, %v892, 0
        %899 = vmatprep.subr.bf16.mxu0 0
        %900 = vmatpush1.bf16.xpose.msra.mxu0 %v897
        %901 = vmatprep.subr.bf16.mxu0 0
        %902 = vmatpush1.bf16.xpose.msra.mxu0 0
        %903 = vmatprep.subr.bf16.mxu0 0
        %904 = vmatpush1.bf16.xpose.msra.mxu0 0
        %905 = vmatprep.subr.bf16.mxu0 0
        %906 = vmatpush1.bf16.xpose.msra.mxu0 0
        %907 = vmatprep.subr.bf16.mxu0 0
        %908 = vmatpush1.bf16.xpose.msra.mxu0 0
        %909 = vmatprep.subr.bf16.mxu0 0
        %910 = vmatpush1.bf16.xpose.msra.mxu0 0
        %911 = vmatprep.subr.bf16.mxu0 0
        %912 = vmatpush1.bf16.xpose.msra.mxu0 0
        %913 = vmatprep.subr.bf16.mxu0 0
        %914 = vmatpush1.bf16.xpose.msra.mxu0 0
        %915 = vmatprep.subr.bf16.mxu0 0
        %916 = vmatpush1.bf16.xpose.msra.mxu0 0
        %917 = vmatprep.subr.bf16.mxu0 0
        %918 = vmatpush1.bf16.xpose.msra.mxu0 0
        %919 = vmatprep.subr.bf16.mxu0 0
        %920 = vmatpush1.bf16.xpose.msra.mxu0 0
        %921 = vmatprep.subr.bf16.mxu0 0
        %922 = vmatpush1.bf16.xpose.msra.mxu0 0
        %923 = vmatprep.subr.bf16.mxu0 0
        %924 = vmatpush1.bf16.xpose.msra.mxu0 0
        %925 = vmatprep.subr.bf16.mxu0 0
        %926 = vmatpush1.bf16.xpose.msra.mxu0 0
        %927 = vmatprep.subr.bf16.mxu0 0
        %928 = vmatpush1.bf16.xpose.msra.mxu0 0
        %929 = vmatprep.subr.bf16.mxu0 0
        %930 = vmatpush1.bf16.xpose.msra.mxu0 0
        %931 = vmatprep.mubr.bf16.mxu0 0
        %932 = vmatmul.mubr.bf16.gmra.mrb[0].mxu0 %v894
        %v933 = vpop.f32.mrb[0].mxu0
        %v934 = vadd.f32 0.0, %v933
        %v935 = vpop.f32.mrb[0].mxu0
        %v936 = vpop.f32.mrb[0].mxu0
        %v937 = vpop.f32.mrb[0].mxu0
        %938 = vdwg.mxu0
        %v939 = vsel %vm590, -1e+09, %v934
        %v940 = vsel %vm541, %v939, -inf
        %941 = vmax.xlane.f32.xlu0 %v940
        %v942 = vpop.xlane.xlu0 %941
        %v943 = vsub.f32 %v939, %v942
        %v944 = vmul.f32 %v943, 1.442695
        %v945 = vpow.pop %v944
        %v946 = vsel %vm541, %v945, 0.0
        %947 = vadd.xlane.f32.xlu0 %v946
        %v948 = vpop.xlane.xlu0 %947
        %v949 = vrcp.pop %v948
        %v950 = vmul.f32 %v945, %v949
        %v951 = vpack.c.bf16 %v950, %v950
        %952 = vrot.lane.b32.xlu0 %v535, 40
        %v953 = vpop.permute.xlu0 %952
        %v955 = vsel %vm541, %v951, 0
        %v958 = vsel %vm609, %v953, 0
        %960 = vmatprep.subr.bf16.mxu0 0
        %961 = vmatpush1.bf16.msra.mxu0 %v958
        %962 = vmatprep.subr.bf16.mxu0 0
        %963 = vmatpush1.bf16.msra.mxu0 0
        %964 = vmatprep.subr.bf16.mxu0 0
        %965 = vmatpush1.bf16.msra.mxu0 0
        %966 = vmatprep.subr.bf16.mxu0 0
        %967 = vmatpush1.bf16.msra.mxu0 0
        %968 = vmatprep.subr.bf16.mxu0 0
        %969 = vmatpush1.bf16.msra.mxu0 0
        %970 = vmatprep.subr.bf16.mxu0 0
        %971 = vmatpush1.bf16.msra.mxu0 0
        %972 = vmatprep.subr.bf16.mxu0 0
        %973 = vmatpush1.bf16.msra.mxu0 0
        %974 = vmatprep.subr.bf16.mxu0 0
        %975 = vmatpush1.bf16.msra.mxu0 0
        %976 = vmatprep.subr.bf16.mxu0 0
        %977 = vmatpush1.bf16.msra.mxu0 0
        %978 = vmatprep.subr.bf16.mxu0 0
        %979 = vmatpush1.bf16.msra.mxu0 0
        %980 = vmatprep.subr.bf16.mxu0 0
        %981 = vmatpush1.bf16.msra.mxu0 0
        %982 = vmatprep.subr.bf16.mxu0 0
        %983 = vmatpush1.bf16.msra.mxu0 0
        %984 = vmatprep.subr.bf16.mxu0 0
        %985 = vmatpush1.bf16.msra.mxu0 0
        %986 = vmatprep.subr.bf16.mxu0 0
        %987 = vmatpush1.bf16.msra.mxu0 0
        %988 = vmatprep.subr.bf16.mxu0 0
        %989 = vmatpush1.bf16.msra.mxu0 0
        %990 = vmatprep.subr.bf16.mxu0 0
        %991 = vmatpush1.bf16.msra.mxu0 0
        %992 = vmatprep.mubr.bf16.mxu0 0
        %993 = vmatmul.mubr.bf16.gmra.mrb[0].mxu0 %v955
        %v994 = vpop.f32.mrb[0].mxu0
        %v995 = vadd.f32 0.0, %v994
        %v996 = vpop.f32.mrb[0].mxu0
        %v997 = vpop.f32.mrb[0].mxu0
        %v998 = vpop.f32.mrb[0].mxu0
        %999 = vdwg.mxu0
        %1001 = vrot.lane.b32.xlu0 %v995, 24
        %v1002 = vpop.permute.xlu0 %1001
        %vm1004 = vcmask 261312
        %1005 = vst.msk [vmem:[#allocation2] sm:$0xff] %vm1004, %v1002
        %v1006 = vld [vmem:[#allocation2] sm:$0xff]
        %v1007 = vpack.c.bf16 %v1006, %v1006
        %v1008 = vld [vmem:[%s4] sm:$0xf]
        %v1009 = vld [vmem:[%s4 + $0x4] sm:$0xf]
        %v1010 = vld [vmem:[%s4 + $0x8] sm:$0xf]
        %v1011 = vld [vmem:[%s4 + $0xc] sm:$0xf]
        %v1012 = vld [vmem:[%s5] sm:$0x1]
        %v1014 = vlaneseq
        %v1015 = vshrl.u32 %v1014, 7
        %v1016 = vsub.s32 0, %v1015
        %v1017 = vrot.slane %v1012, %v1016
        %v1023 = vunpack.c.l.b16 %v1008
        %v1024 = vunpack.c.l.b16 %v1009
        %v1025 = vunpack.c.l.b16 %v1010
        %v1026 = vunpack.c.l.b16 %v1011
        %v1027 = vpack.c.b16 %v1024, %v1023
        %v1028 = vpack.c.b16 %v1026, %v1025
        %v1032 = vsel %vm489, %v1007, 0
        %1034 = vmatprep.subr.bf16.mxu0 0
        %1035 = vmatpush1.bf16.msra.mxu0 %v1027
        %1036 = vmatprep.subr.bf16.mxu0 0
        %1037 = vmatpush1.bf16.msra.mxu0 %v1028
        %1038 = vmatprep.subr.bf16.mxu0 0
        %1039 = vmatpush1.bf16.msra.mxu0 0
        %1040 = vmatprep.subr.bf16.mxu0 0
        %1041 = vmatpush1.bf16.msra.mxu0 0
        %1042 = vmatprep.subr.bf16.mxu0 0
        %1043 = vmatpush1.bf16.msra.mxu0 0
        %1044 = vmatprep.subr.bf16.mxu0 0
        %1045 = vmatpush1.bf16.msra.mxu0 0
        %1046 = vmatprep.subr.bf16.mxu0 0
        %1047 = vmatpush1.bf16.msra.mxu0 0
        %1048 = vmatprep.subr.bf16.mxu0 0
        %1049 = vmatpush1.bf16.msra.mxu0 0
        %1050 = vmatprep.subr.bf16.mxu0 0
        %1051 = vmatpush1.bf16.msra.mxu0 0
        %1052 = vmatprep.subr.bf16.mxu0 0
        %1053 = vmatpush1.bf16.msra.mxu0 0
        %1054 = vmatprep.subr.bf16.mxu0 0
        %1055 = vmatpush1.bf16.msra.mxu0 0
        %1056 = vmatprep.subr.bf16.mxu0 0
        %1057 = vmatpush1.bf16.msra.mxu0 0
        %1058 = vmatprep.subr.bf16.mxu0 0
        %1059 = vmatpush1.bf16.msra.mxu0 0
        %1060 = vmatprep.subr.bf16.mxu0 0
        %1061 = vmatpush1.bf16.msra.mxu0 0
        %1062 = vmatprep.subr.bf16.mxu0 0
        %1063 = vmatpush1.bf16.msra.mxu0 0
        %1064 = vmatprep.subr.bf16.mxu0 0
        %1065 = vmatpush1.bf16.msra.mxu0 0
        %1066 = vmatprep.mubr.bf16.mxu0 0
        %1067 = vmatmul.mubr.bf16.gmra.mrb[0].mxu0 %v1032
        %v1068 = vpop.f32.mrb[0].mxu0
        %v1069 = vadd.f32 %v1017, %v1068
        %v1070 = vpop.f32.mrb[0].mxu0
        %v1071 = vpop.f32.mrb[0].mxu0
        %v1072 = vpop.f32.mrb[0].mxu0
        %1073 = vdwg.mxu0
        %v1074 = vadd.f32 %v1069, %v464
        %v1075 = vsel %vm489, %v1074, 0.0
        %1076 = vadd.xlane.f32.xlu0 %v1075
        %v1077 = vpop.xlane.xlu0 %1076
        %v1078 = vrcp.pop 32.0
        %v1079 = vmul.f32 %v1077, %v1078
        %v1080 = vsub.f32 %v1074, %v1079
        %v1081 = vmul.f32 %v1080, %v1080
        %v1082 = vsel %vm489, %v1081, 0.0
        %1083 = vadd.xlane.f32.xlu0 %v1082
        %v1084 = vpop.xlane.xlu0 %1083
        %v1085 = vmul.f32 %v1084, %v1078
        %v1086 = vadd.f32 %v1085, 1e-05
        %v1087 = vrsqrt.pop %v1086
        %v1088 = vmul.f32 %v1080, %v1087
        %v1089 = vld [vmem:[%s6] sm:$0x1]
        %v1091 = vlaneseq
        %v1092 = vshrl.u32 %v1091, 7
        %v1093 = vsub.s32 0, %v1092
        %v1094 = vrot.slane %v1089, %v1093
        %v1096 = vmul.f32 %v1088, %v1094
        %v1097 = vld [vmem:[%s7] sm:$0x1]
        %v1099 = vlaneseq
        %v1100 = vshrl.u32 %v1099, 7
        %v1101 = vsub.s32 0, %v1100
        %v1102 = vrot.slane %v1097, %v1101
        %v1104 = vadd.f32 %v1096, %v1102
        %v1105 = vpack.c.bf16 %v1104, %v1104
        %v1106 = vld [vmem:[#allocation6] sm:$0xf]
        %v1107 = vld [vmem:[#allocation6 + $0x4] sm:$0xf]
        %v1108 = vld [vmem:[#allocation6 + $0x8] sm:$0xf]
        %v1109 = vld [vmem:[#allocation6 + $0xc] sm:$0xf]
        %v1110 = vld [vmem:[%s9] sm:$0x1]
        %v1112 = vlaneseq
        %v1113 = vshrl.u32 %v1112, 7
        %v1114 = vsub.s32 0, %v1113
        %v1115 = vrot.slane %v1110, %v1114
        %v1121 = vunpack.c.l.b16 %v1106
        %v1122 = vunpack.c.l.b16 %v1107
        %v1123 = vunpack.c.l.b16 %v1108
        %v1124 = vunpack.c.l.b16 %v1109
        %v1125 = vpack.c.b16 %v1122, %v1121
        %v1126 = vpack.c.b16 %v1124, %v1123
        %v1130 = vsel %vm489, %v1105, 0
        %1132 = vmatprep.subr.bf16.mxu0 0
        %1133 = vmatpush1.bf16.msra.mxu0 %v1125
        %1134 = vmatprep.subr.bf16.mxu0 0
        %1135 = vmatpush1.bf16.msra.mxu0 %v1126
        %1136 = vmatprep.subr.bf16.mxu0 0
        %1137 = vmatpush1.bf16.msra.mxu0 0
        %1138 = vmatprep.subr.bf16.mxu0 0
        %1139 = vmatpush1.bf16.msra.mxu0 0
        %1140 = vmatprep.subr.bf16.mxu0 0
        %1141 = vmatpush1.bf16.msra.mxu0 0
        %1142 = vmatprep.subr.bf16.mxu0 0
        %1143 = vmatpush1.bf16.msra.mxu0 0
        %1144 = vmatprep.subr.bf16.mxu0 0
        %1145 = vmatpush1.bf16.msra.mxu0 0
        %1146 = vmatprep.subr.bf16.mxu0 0
        %1147 = vmatpush1.bf16.msra.mxu0 0
        %1148 = vmatprep.subr.bf16.mxu0 0
        %1149 = vmatpush1.bf16.msra.mxu0 0
        %1150 = vmatprep.subr.bf16.mxu0 0
        %1151 = vmatpush1.bf16.msra.mxu0 0
        %1152 = vmatprep.subr.bf16.mxu0 0
        %1153 = vmatpush1.bf16.msra.mxu0 0
        %1154 = vmatprep.subr.bf16.mxu0 0
        %1155 = vmatpush1.bf16.msra.mxu0 0
        %1156 = vmatprep.subr.bf16.mxu0 0
        %1157 = vmatpush1.bf16.msra.mxu0 0
        %1158 = vmatprep.subr.bf16.mxu0 0
        %1159 = vmatpush1.bf16.msra.mxu0 0
        %1160 = vmatprep.subr.bf16.mxu0 0
        %1161 = vmatpush1.bf16.msra.mxu0 0
        %1162 = vmatprep.subr.bf16.mxu0 0
        %1163 = vmatpush1.bf16.msra.mxu0 0
        %1164 = vmatprep.mubr.bf16.mxu0 0
        %1165 = vmatmul.mubr.bf16.gmra.mrb[0].mxu0 %v1130
        %v1166 = vpop.f32.mrb[0].mxu0
        %v1167 = vadd.f32 %v1115, %v1166
        %v1168 = vpop.f32.mrb[0].mxu0
        %v1169 = vpop.f32.mrb[0].mxu0
        %v1170 = vpop.f32.mrb[0].mxu0
        %1171 = vdwg.mxu0
        %v1172 = vmul.f32 %v1167, 0.5
        %v1173 = vmul.f32 %v1167, 0.70710677
        %v1174 = verf.f32.pop %v1173
        %v1175 = vadd.f32 %v1174, 1.0
        %v1176 = vmul.f32 %v1172, %v1175
        %v1177 = vpack.c.bf16 %v1176, %v1176
        %v1178 = vld [vmem:[%s10] sm:$0xf]
        %v1179 = vld [vmem:[%s10 + $0x4] sm:$0xf]
        %v1180 = vld [vmem:[%s10 + $0x8] sm:$0xf]
        %v1181 = vld [vmem:[%s10 + $0xc] sm:$0xf]
        %v1182 = vld [vmem:[%s10 + $0x10] sm:$0xf]
        %v1183 = vld [vmem:[%s10 + $0x14] sm:$0xf]
        %v1184 = vld [vmem:[%s10 + $0x18] sm:$0xf]
        %v1185 = vld [vmem:[%s10 + $0x1c] sm:$0xf]
        %v1186 = vld [vmem:[%s11] sm:$0x1]
        %v1188 = vlaneseq
        %v1189 = vshrl.u32 %v1188, 7
        %v1190 = vsub.s32 0, %v1189
        %v1191 = vrot.slane %v1186, %v1190
        %v1201 = vunpack.c.l.b16 %v1178
        %v1202 = vunpack.c.l.b16 %v1179
        %v1203 = vunpack.c.l.b16 %v1180
        %v1204 = vunpack.c.l.b16 %v1181
        %v1205 = vunpack.c.l.b16 %v1182
        %v1206 = vunpack.c.l.b16 %v1183
        %v1207 = vunpack.c.l.b16 %v1184
        %v1208 = vunpack.c.l.b16 %v1185
        %v1209 = vpack.c.b16 %v1202, %v1201
        %v1210 = vpack.c.b16 %v1204, %v1203
        %v1211 = vpack.c.b16 %v1206, %v1205
        %v1212 = vpack.c.b16 %v1208, %v1207
        %vm1217 = vcmask 523264
        %v1219 = vsel %vm1217, %v1177, 0
        %1221 = vmatprep.subr.bf16.mxu0 0
        %1222 = vmatpush1.bf16.msra.mxu0 %v1209
        %1223 = vmatprep.subr.bf16.mxu0 0
        %1224 = vmatpush1.bf16.msra.mxu0 %v1210
        %1225 = vmatprep.subr.bf16.mxu0 0
        %1226 = vmatpush1.bf16.msra.mxu0 %v1211
        %1227 = vmatprep.subr.bf16.mxu0 0
        %1228 = vmatpush1.bf16.msra.mxu0 %v1212
        %1229 = vmatprep.subr.bf16.mxu0 0
        %1230 = vmatpush1.bf16.msra.mxu0 0
        %1231 = vmatprep.subr.bf16.mxu0 0
        %1232 = vmatpush1.bf16.msra.mxu0 0
        %1233 = vmatprep.subr.bf16.mxu0 0
        %1234 = vmatpush1.bf16.msra.mxu0 0
        %1235 = vmatprep.subr.bf16.mxu0 0
        %1236 = vmatpush1.bf16.msra.mxu0 0
        %1237 = vmatprep.subr.bf16.mxu0 0
        %1238 = vmatpush1.bf16.msra.mxu0 0
        %1239 = vmatprep.subr.bf16.mxu0 0
        %1240 = vmatpush1.bf16.msra.mxu0 0
        %1241 = vmatprep.subr.bf16.mxu0 0
        %1242 = vmatpush1.bf16.msra.mxu0 0
        %1243 = vmatprep.subr.bf16.mxu0 0
        %1244 = vmatpush1.bf16.msra.mxu0 0
        %1245 = vmatprep.subr.bf16.mxu0 0
        %1246 = vmatpush1.bf16.msra.mxu0 0
        %1247 = vmatprep.subr.bf16.mxu0 0
        %1248 = vmatpush1.bf16.msra.mxu0 0
        %1249 = vmatprep.subr.bf16.mxu0 0
        %1250 = vmatpush1.bf16.msra.mxu0 0
        %1251 = vmatprep.subr.bf16.mxu0 0
        %1252 = vmatpush1.bf16.msra.mxu0 0
        %1253 = vmatprep.mubr.bf16.mxu0 0
        %1254 = vmatmul.mubr.bf16.gmra.mrb[0].mxu0 %v1219
        %v1255 = vpop.f32.mrb[0].mxu0
        %v1256 = vadd.f32 %v1191, %v1255
        %v1257 = vpop.f32.mrb[0].mxu0
        %v1258 = vpop.f32.mrb[0].mxu0
        %v1259 = vpop.f32.mrb[0].mxu0
        %1260 = vdwg.mxu0
        %1261 = vst.msk [vmem:[%s456] sm:$0xff] %vm489, %v1256
        %s1262 = sand.u32 %s300, 1
        %s1263 = scalar_lea.sflag [#allocation5], %s1262
        %s1264 = sand.u32 %s300, 1
        %s1265 = smul.addr %s1264, 8
        %s1266 = scalar_lea.vmem [#allocation8], %s1265
        // Predicated region
        $region77: #{tpu_custom_call.1} parent=67 // pred_check
          %p1267 = pneg %p310
        $region78: #{tpu_custom_call.1} parent=67 // pred_check_branch
          %1269 = sbr.rel (%p1267) target = $region80
        $region79: #{tpu_custom_call.1} parent=67 // pred_region
          %s1271 = ssub.s32 128, 128
          %1272 = vsyncadd %s1263, %s1271
          %s1273 = smul.addr %s30, 128
          %s1274 = scalar_lea.hbm %s12, %s1273
          %s1276 = sshll.u32 %s1266, 4
          %s1277 = int_to_ptr.vmem [resolvable:$true] %s1276
          %1279 = dma.vmem_to_hbm [thread:$0]  %s1277, 128, %s1274, %s1263
        $region80: #{tpu_custom_call.1} parent=67 // pred_fallthru
          _
      $region68: #{tpu_custom_call.1} parent=5 // pred_fallthru
        _
      %p1280 = scmp.le.s32.totalorder 2, %s25
      // Predicated region
      $region81: #{tpu_custom_call.1} parent=5 // pred_check
        %p1281 = pneg %p1280
      $region82: #{tpu_custom_call.1} parent=5 // pred_check_branch
        %1283 = sbr.rel (%p1281) target = $region84
      $region83: #{tpu_custom_call.1} parent=5 // pred_region
        %s1284 = ssub.s32 %s25, 2
        // Predicated region
        $region85: #{tpu_custom_call.1} parent=83 // pred_check
          %p1285 = pneg %p316
        $region86: #{tpu_custom_call.1} parent=83 // pred_check_branch
          %1287 = sbr.rel (%p1285) target = $region88
        $region87: #{tpu_custom_call.1} parent=83 // pred_region
          %s1288 = sand.u32 %s301, 1
          %s1289 = scalar_lea.sflag [#allocation5], %s1288
          %s1290 = sand.u32 %s301, 1
          %s1291 = smul.addr %s1290, 8
          %s1292 = scalar_lea.vmem [#allocation8], %s1291
          %1293 = dma.done %s1289, 128
        $region88: #{tpu_custom_call.1} parent=83 // pred_fallthru
          _
      $region84: #{tpu_custom_call.1} parent=5 // pred_fallthru
        _
    $region6: #{tpu_custom_call.1} parent=1 // loop_footer
      %s29 = sadd.s32 1, %s25
    $region7: #{tpu_custom_call.1} parent=1 // loop_footer_branch
      %24 = sbr.rel target = $region3
    $region8: #{tpu_custom_call.1} parent=1 // loop_exit
      _
    %1294 = vsyncpa [#allocation4], 1
    %s1295 = scalar_lea.sflag [#allocation4], 1
    %1296 = vsyncpa %s1295, 1
    %1297 = vsyncpa [#allocation7], 1
    %1298 = vsyncpa [#allocation5], 1
    %s1299 = scalar_lea.sflag [#allocation5], 1
    %1300 = vsyncpa %s1299, 1

</llo_original>
